<compile_context>
chip_gen: v6e
topology: v6e:2x2x1
jax: 0.10.0
libtpu: 0.0.40
codegen_flags: <defaults>
</compile_context>

<pallas_src>
import jax
import jax.numpy as jnp
from jax.experimental import pallas as pl
from jax.experimental.pallas import tpu as pltpu


def _round_up(x, m):
    return (x + m - 1) // m * m


def _plan_tiles(n_points, batch, cap=1024):
    """Pick a point-tile size (multiple of 128) and the padded point count.

    Prefers the largest tile <= cap (amortises the ~0.35us per-grid-step
    overhead, fits comfortably under the 32 MiB VMEM limit), but drops to a
    smaller tile when needed so batch * n_tiles >= 2 and both v7x TensorCores
    get work even at batch=1.
    """
    tile = min(cap, _round_up(n_points, 128))
    n_tiles = -(-n_points // tile)
    if batch * n_tiles < 2 and n_points > 128:
        tile = _round_up(-(-n_points // 2), 128)
    n_pad = _round_up(n_points, tile)
    return tile, n_pad


# ----------------------------------------------------------------------------
# Kernel 1: fused per-point MLP (5x [1x1 conv + BN + ReLU]) + per-tile max
# ----------------------------------------------------------------------------
def pointwise_mlp_kernel(x_ref,
                         w1_ref, b1_ref, w2_ref, b2_ref, w3_ref, b3_ref,
                         w4_ref, b4_ref, w5_ref, b5_ref,
                         out5_ref, pmax_ref):
    x = x_ref[0]          # (3, TN) f32, channels-first, points lane-dense
    w1 = w1_ref[...]      # (64, 3) f32

    # Layer 1 (K=3): VPU broadcast FMAs -- avoids an MXU push with a size-3
    # contraction and keeps the chain channels-first from the start.
    h = jnp.maximum(
        w1[:, 0:1] * x[0:1, :]
        + w1[:, 1:2] * x[1:2, :]
        + w1[:, 2:3] * x[2:3, :]
        + b1_ref[...], 0.0)                                   # (64, TN) f32

    # Layers 2..5: channels-first MXU matmuls (C_out, C_in) @ (C_in, TN) with
    # bf16 operands, f32 accumulation / bias / ReLU. TN (>=128) sits on the
    # lane axis, keeping vregs and the MXU N-dimension full.
    def cbr(w_ref, b_ref, a):
        y = jnp.dot(w_ref[...], a.astype(jnp.bfloat16),
                    preferred_element_type=jnp.float32)
        return jnp.maximum(y + b_ref[...], 0.0)

    h = cbr(w2_ref, b2_ref, h)            # (64, TN)
    h = cbr(w3_ref, b3_ref, h)            # (64, TN)
    h = cbr(w4_ref, b4_ref, h)            # (128, TN)
    out5 = cbr(w5_ref, b5_ref, h)         # (1024, TN) f32

    # Channels-first (NCHW-compatible) writeback straight from the matmul
    # layout -- no transpose -- and in bf16 (halves the HBM-bound traffic).
    out5_ref[0] = out5.astype(out5_ref.dtype)                 # (1024, TN)

    # Per-tile partial max over the point (lane) axis; reduced in the FC head.
    pmax_ref[0] = jnp.max(out5, axis=1, keepdims=True)        # (1024, 1) f32


def pointwise_mlp(x_cn, conv_params, tile_n):
    """x_cn: (B, 3, N_pad) -> (out5 (B, 1024, N_pad) bf16,
                               partial max (B, 1024, n_tiles) f32)."""
    B, c_in, n_pad = x_cn.shape
    c_last = conv_params[-1][0].shape[0]
    n_tiles = n_pad // tile_n

    flat_params = [a for wb in conv_params for a in wb]
    param_specs = [pl.BlockSpec(p.shape, lambda i, j: (0, 0)) for p in flat_params]

    return pl.pallas_call(
        pointwise_mlp_kernel,
        grid=(B, n_tiles),
        in_specs=[pl.BlockSpec((1, c_in, tile_n), lambda i, j: (i, 0, j))]
                 + param_specs,
        out_specs=[
            pl.BlockSpec((1, c_last, tile_n), lambda i, j: (i, 0, j)),
            pl.BlockSpec((1, c_last, 1), lambda i, j: (i, 0, j)),
        ],
        out_shape=[
            jax.ShapeDtypeStruct((B, c_last, n_pad), jnp.bfloat16),
            jax.ShapeDtypeStruct((B, c_last, n_tiles), jnp.float32),
        ],
        compiler_params=pltpu.CompilerParams(
            dimension_semantics=("parallel", "parallel"),
            vmem_limit_bytes=32 * 1024 * 1024),
    )(x_cn, *flat_params)


# ----------------------------------------------------------------------------
# Kernel 2: global-max reduction + FC head (Linear+BN+ReLU x2, Linear)
# ----------------------------------------------------------------------------
def fc_head_kernel(pmax_ref, w1_ref, b1_ref, w2_ref, b2_ref, w3_ref, b3_ref,
                   out_ref):
    feat = jnp.max(pmax_ref[...], axis=2)                     # (B, 1024) f32
    h = jnp.maximum(
        jnp.dot(feat.astype(jnp.bfloat16), w1_ref[...],
                preferred_element_type=jnp.float32) + b1_ref[...], 0.0)
    h = jnp.maximum(
        jnp.dot(h.astype(jnp.bfloat16), w2_ref[...],
                preferred_element_type=jnp.float32) + b2_ref[...], 0.0)
    out_ref[...] = (
        jnp.dot(h, w3_ref[...], preferred_element_type=jnp.float32)
        + b3_ref[...]).astype(out_ref.dtype)


def fc_head(pmax, fc_params):
    """pmax: (B, 1024, n_tiles) -> logits (B, n_class). Single VMEM block.
    TODO(synk): for very large B, grid over the batch instead of one block."""
    flat = [a for wb in fc_params for a in wb]
    B = pmax.shape[0]
    n_class = fc_params[-1][0].shape[1]
    vmem = pl.BlockSpec(memory_space=pltpu.MemorySpace.VMEM)
    return pl.pallas_call(
        fc_head_kernel,
        in_specs=[vmem] * (1 + len(flat)),
        out_specs=vmem,
        out_shape=jax.ShapeDtypeStruct((B, n_class), jnp.float32),
    )(pmax, *flat)


# ----------------------------------------------------------------------------
# Parameter construction (deterministic, synthetic, BN folded)
# ----------------------------------------------------------------------------
def init_bn(key, c):
    k1, k2, k3, k4 = jax.random.split(key, 4)
    gamma = jax.random.uniform(k1, (c,), jnp.float32, 0.5, 1.5)
    beta = jax.random.normal(k2, (c,), jnp.float32) * 0.1
    mean = jax.random.normal(k3, (c,), jnp.float32) * 0.1
    var = jax.random.uniform(k4, (c,), jnp.float32, 0.5, 1.5)
    return gamma, beta, mean, var


def make_params(key, n_class=7):
    # 1x1 convs: channels-first weights (C_out, C_in) == PyTorch conv weight
    # with the trailing 1x1 spatial dims squeezed. Inference BN folded in.
    conv_dims = [(3, 64), (64, 64), (64, 64), (64, 128), (128, 1024)]
    conv_params = []
    for idx, (ci, co) in enumerate(conv_dims):
        key, kw, kb, kbn = jax.random.split(key, 4)
        w = jax.random.normal(kw, (co, ci), jnp.float32) / jnp.sqrt(float(ci))
        b = jax.random.normal(kb, (co,), jnp.float32) * 0.05
        gamma, beta, mean, var = init_bn(kbn, co)
        scale = gamma / jnp.sqrt(var + 1e-5)
        w = w * scale[:, None]
        b = (b - mean) * scale + beta
        # Layers 2..5 feed bf16 MXU operands; layer 1 (K=3, VPU path) stays f32.
        if idx > 0:
            w = w.astype(jnp.bfloat16)
        conv_params.append((w, b.reshape(co, 1).astype(jnp.float32)))

    # FC head: row-major weights (C_in, C_out) == PyTorch Linear weight^T.
    fc_dims = [(1024, 512), (512, 256), (256, n_class)]
    fc_params = []
    for idx, (ci, co) in enumerate(fc_dims):
        key, kw, kb, kbn = jax.random.split(key, 4)
        w = jax.random.normal(kw, (ci, co), jnp.float32) / jnp.sqrt(float(ci))
        b = jax.random.normal(kb, (co,), jnp.float32) * 0.05
        if idx < 2:  # fc_1, fc_2 have BatchNorm1d; fc_3 does not
            gamma, beta, mean, var = init_bn(kbn, co)
            scale = gamma / jnp.sqrt(var + 1e-5)
            w = (w * scale[None, :]).astype(jnp.bfloat16)  # head is DMA-bound
            b = (b - mean) * scale + beta
        fc_params.append((w, b.reshape(1, co).astype(jnp.float32)))
    return conv_params, fc_params


# ----------------------------------------------------------------------------
# Full forward (mirrors pointnet.forward)
# ----------------------------------------------------------------------------
def pointnet_forward(x_nchw, conv_params, fc_params, tile_n_cap=1024):
    B, C, H, W = x_nchw.shape
    N = H * W
    # Lane-dense channels-first points: pure reshape, no transpose.
    x_cn = x_nchw.reshape(B, C, N)

    tile_n, n_pad = _plan_tiles(N, B, tile_n_cap)
    if n_pad != N:
        # Edge-replicated points never change the global max; the padded
        # region of out_5 is sliced off below.
        x_cn = jnp.pad(x_cn, ((0, 0), (0, 0), (0, n_pad - N)), mode="edge")

    out5_cn, pmax = pointwise_mlp(x_cn, conv_params, tile_n)

    if n_pad != N:
        out5_cn = out5_cn[:, :, :N]
    out5_nchw = out5_cn.reshape(B, -1, H, W)   # already NCHW order: pure reshape

    # global_maxpool + squeeze + fc_1/fc_2/fc_3, fused with the tile-max reduce.
    logits = fc_head(pmax, fc_params)
    return logits, out5_nchw


def pointnet_reference(x_nchw, conv_params, fc_params):
    """Pure-JAX f32 reference (same folded weights) for a sanity check."""
    B, C, H, W = x_nchw.shape
    h = x_nchw.reshape(B, C, -1).astype(jnp.float32)
    for w, b in conv_params:
        h = jnp.maximum(
            jnp.einsum("oc,bcn->bon", w.astype(jnp.float32), h) + b[None], 0.0)
    out5 = h
    g = out5.max(axis=-1)
    for idx, (w, b) in enumerate(fc_params):
        g = jnp.dot(g, w.astype(jnp.float32)) + b
        if idx < 2:
            g = jnp.maximum(g, 0.0)
    return g, out5.reshape(B, -1, H, W)


if __name__ == "__main__":
    key = jax.random.PRNGKey(0)
    key_x, key_p = jax.random.split(key)

    B, C_in, H, W = 2, 3, 16, 16
    n_class = 7

    x = jax.random.normal(key_x, (B, C_in, H, W), jnp.float32)
    conv_params, fc_params = make_params(key_p, n_class=n_class)

    logits, out5 = pointnet_forward(x, conv_params, fc_params)
    jax.block_until_ready((logits, out5))

    assert logits.shape == (B, n_class)
    assert out5.shape == (B, 1024, H, W)

    # Loose-tolerance sanity check against a pure-JAX f32 reference
    # (kernel uses bf16 MXU operands and a bf16 out_5 writeback).
    logits_want, out5_want = pointnet_reference(x, conv_params, fc_params)
    assert jnp.allclose(logits, logits_want, rtol=0.1, atol=0.5), (
        float(jnp.max(jnp.abs(logits - logits_want))))
    assert jnp.allclose(out5.astype(jnp.float32), out5_want,
                        rtol=0.1, atol=0.25), (
        float(jnp.max(jnp.abs(out5.astype(jnp.float32) - out5_want))))

    print("KERNEL_OK")
</pallas_src>

<mosaic_0001>
module attributes {stable_mosaic.version = 11 : i64} {
  func.func @pointwise_mlp_kernel(%arg0: i32, %arg1: i32, %arg2: memref<1x3x256xf32, #tpu.memory_space<vmem>>, %arg3: memref<64x3xf32, #tpu.memory_space<vmem>>, %arg4: memref<64x1xf32, #tpu.memory_space<vmem>>, %arg5: memref<64x64xbf16, #tpu.memory_space<vmem>>, %arg6: memref<64x1xf32, #tpu.memory_space<vmem>>, %arg7: memref<64x64xbf16, #tpu.memory_space<vmem>>, %arg8: memref<64x1xf32, #tpu.memory_space<vmem>>, %arg9: memref<128x64xbf16, #tpu.memory_space<vmem>>, %arg10: memref<128x1xf32, #tpu.memory_space<vmem>>, %arg11: memref<1024x128xbf16, #tpu.memory_space<vmem>>, %arg12: memref<1024x1xf32, #tpu.memory_space<vmem>>, %arg13: memref<1x1024x256xbf16, #tpu.memory_space<vmem>>, %arg14: memref<1x1024x1xf32, #tpu.memory_space<vmem>>) attributes {dimension_semantics = [#tpu.dimension_semantics<parallel>, #tpu.dimension_semantics<parallel>], iteration_bounds = array<i64: 2, 1>, scalar_prefetch = 0 : i64, scratch_operands = 0 : i64, tpu.core_type = #tpu.core_type<tc>, window_params = [{transform_indices = @transform_0, window_bounds = array<i64: 1, 3, 256>}, {pipeline_mode = #tpu.pipeline_mode<synchronous>, transform_indices = @transform_1, window_bounds = array<i64: 64, 3>}, {pipeline_mode = #tpu.pipeline_mode<synchronous>, transform_indices = @transform_2, window_bounds = array<i64: 64, 1>}, {pipeline_mode = #tpu.pipeline_mode<synchronous>, transform_indices = @transform_3, window_bounds = array<i64: 64, 64>}, {pipeline_mode = #tpu.pipeline_mode<synchronous>, transform_indices = @transform_4, window_bounds = array<i64: 64, 1>}, {pipeline_mode = #tpu.pipeline_mode<synchronous>, transform_indices = @transform_5, window_bounds = array<i64: 64, 64>}, {pipeline_mode = #tpu.pipeline_mode<synchronous>, transform_indices = @transform_6, window_bounds = array<i64: 64, 1>}, {pipeline_mode = #tpu.pipeline_mode<synchronous>, transform_indices = @transform_7, window_bounds = array<i64: 128, 64>}, {pipeline_mode = #tpu.pipeline_mode<synchronous>, transform_indices = @transform_8, window_bounds = array<i64: 128, 1>}, {pipeline_mode = #tpu.pipeline_mode<synchronous>, transform_indices = @transform_9, window_bounds = array<i64: 1024, 128>}, {pipeline_mode = #tpu.pipeline_mode<synchronous>, transform_indices = @transform_10, window_bounds = array<i64: 1024, 1>}, {transform_indices = @transform_11, window_bounds = array<i64: 1, 1024, 256>}, {transform_indices = @transform_12, window_bounds = array<i64: 1, 1024, 1>}]} {
    %c0 = arith.constant 0 : index
    %c0_0 = arith.constant 0 : index
    %c0_1 = arith.constant 0 : index
    %0 = vector.load %arg2[%c0, %c0_0, %c0_1] : memref<1x3x256xf32, #tpu.memory_space<vmem>>, vector<1x3x256xf32>
    %1 = vector.shape_cast %0 : vector<1x3x256xf32> to vector<3x256xf32>
    %c0_2 = arith.constant 0 : index
    %c0_3 = arith.constant 0 : index
    %2 = vector.load %arg3[%c0_2, %c0_3] : memref<64x3xf32, #tpu.memory_space<vmem>>, vector<64x3xf32>
    %3 = vector.extract_strided_slice %2 {offsets = [0, 0], sizes = [64, 1], strides = [1, 1]} : vector<64x3xf32> to vector<64x1xf32>
    %4 = vector.extract_strided_slice %1 {offsets = [0, 0], sizes = [1, 256], strides = [1, 1]} : vector<3x256xf32> to vector<1x256xf32>
    %5 = vector.broadcast %3 : vector<64x1xf32> to vector<64x256xf32>
    %6 = vector.broadcast %4 : vector<1x256xf32> to vector<64x256xf32>
    %7 = arith.mulf %5, %6 : vector<64x256xf32>
    %8 = vector.extract_strided_slice %2 {offsets = [0, 1], sizes = [64, 1], strides = [1, 1]} : vector<64x3xf32> to vector<64x1xf32>
    %9 = vector.extract_strided_slice %1 {offsets = [1, 0], sizes = [1, 256], strides = [1, 1]} : vector<3x256xf32> to vector<1x256xf32>
    %10 = vector.broadcast %8 : vector<64x1xf32> to vector<64x256xf32>
    %11 = vector.broadcast %9 : vector<1x256xf32> to vector<64x256xf32>
    %12 = arith.mulf %10, %11 : vector<64x256xf32>
    %13 = arith.addf %7, %12 : vector<64x256xf32>
    %14 = vector.extract_strided_slice %2 {offsets = [0, 2], sizes = [64, 1], strides = [1, 1]} : vector<64x3xf32> to vector<64x1xf32>
    %15 = vector.extract_strided_slice %1 {offsets = [2, 0], sizes = [1, 256], strides = [1, 1]} : vector<3x256xf32> to vector<1x256xf32>
    %16 = vector.broadcast %14 : vector<64x1xf32> to vector<64x256xf32>
    %17 = vector.broadcast %15 : vector<1x256xf32> to vector<64x256xf32>
    %18 = arith.mulf %16, %17 : vector<64x256xf32>
    %19 = arith.addf %13, %18 : vector<64x256xf32>
    %c0_4 = arith.constant 0 : index
    %c0_5 = arith.constant 0 : index
    %20 = vector.load %arg4[%c0_4, %c0_5] : memref<64x1xf32, #tpu.memory_space<vmem>>, vector<64x1xf32>
    %21 = vector.broadcast %20 : vector<64x1xf32> to vector<64x256xf32>
    %22 = arith.addf %19, %21 : vector<64x256xf32>
    %cst = arith.constant 0.000000e+00 : f32
    %23 = vector.broadcast %cst : f32 to vector<64x256xf32>
    %24 = arith.maximumf %22, %23 : vector<64x256xf32>
    %c0_6 = arith.constant 0 : index
    %c0_7 = arith.constant 0 : index
    %25 = vector.load %arg5[%c0_6, %c0_7] : memref<64x64xbf16, #tpu.memory_space<vmem>>, vector<64x64xbf16>
    %26 = arith.truncf %24 : vector<64x256xf32> to vector<64x256xbf16>
    %cst_8 = arith.constant dense<0.000000e+00> : vector<64x256xf32>
    %27 = tpu.matmul %25, %26, %cst_8 {dimension_numbers = #tpu.dot_dimension_numbers<[1], [0], [0], [1], [0, 0, 1, 1], [], []>} : vector<64x64xbf16>, vector<64x256xbf16>, vector<64x256xf32> -> vector<64x256xf32>
    %c0_9 = arith.constant 0 : index
    %c0_10 = arith.constant 0 : index
    %28 = vector.load %arg6[%c0_9, %c0_10] : memref<64x1xf32, #tpu.memory_space<vmem>>, vector<64x1xf32>
    %29 = vector.broadcast %28 : vector<64x1xf32> to vector<64x256xf32>
    %30 = arith.addf %27, %29 : vector<64x256xf32>
    %cst_11 = arith.constant 0.000000e+00 : f32
    %31 = vector.broadcast %cst_11 : f32 to vector<64x256xf32>
    %32 = arith.maximumf %30, %31 : vector<64x256xf32>
    %c0_12 = arith.constant 0 : index
    %c0_13 = arith.constant 0 : index
    %33 = vector.load %arg7[%c0_12, %c0_13] : memref<64x64xbf16, #tpu.memory_space<vmem>>, vector<64x64xbf16>
    %34 = arith.truncf %32 : vector<64x256xf32> to vector<64x256xbf16>
    %cst_14 = arith.constant dense<0.000000e+00> : vector<64x256xf32>
    %35 = tpu.matmul %33, %34, %cst_14 {dimension_numbers = #tpu.dot_dimension_numbers<[1], [0], [0], [1], [0, 0, 1, 1], [], []>} : vector<64x64xbf16>, vector<64x256xbf16>, vector<64x256xf32> -> vector<64x256xf32>
    %c0_15 = arith.constant 0 : index
    %c0_16 = arith.constant 0 : index
    %36 = vector.load %arg8[%c0_15, %c0_16] : memref<64x1xf32, #tpu.memory_space<vmem>>, vector<64x1xf32>
    %37 = vector.broadcast %36 : vector<64x1xf32> to vector<64x256xf32>
    %38 = arith.addf %35, %37 : vector<64x256xf32>
    %cst_17 = arith.constant 0.000000e+00 : f32
    %39 = vector.broadcast %cst_17 : f32 to vector<64x256xf32>
    %40 = arith.maximumf %38, %39 : vector<64x256xf32>
    %c0_18 = arith.constant 0 : index
    %c0_19 = arith.constant 0 : index
    %41 = vector.load %arg9[%c0_18, %c0_19] : memref<128x64xbf16, #tpu.memory_space<vmem>>, vector<128x64xbf16>
    %42 = arith.truncf %40 : vector<64x256xf32> to vector<64x256xbf16>
    %cst_20 = arith.constant dense<0.000000e+00> : vector<128x256xf32>
    %43 = tpu.matmul %41, %42, %cst_20 {dimension_numbers = #tpu.dot_dimension_numbers<[1], [0], [0], [1], [0, 0, 1, 1], [], []>} : vector<128x64xbf16>, vector<64x256xbf16>, vector<128x256xf32> -> vector<128x256xf32>
    %c0_21 = arith.constant 0 : index
    %c0_22 = arith.constant 0 : index
    %44 = vector.load %arg10[%c0_21, %c0_22] : memref<128x1xf32, #tpu.memory_space<vmem>>, vector<128x1xf32>
    %45 = vector.broadcast %44 : vector<128x1xf32> to vector<128x256xf32>
    %46 = arith.addf %43, %45 : vector<128x256xf32>
    %cst_23 = arith.constant 0.000000e+00 : f32
    %47 = vector.broadcast %cst_23 : f32 to vector<128x256xf32>
    %48 = arith.maximumf %46, %47 : vector<128x256xf32>
    %c0_24 = arith.constant 0 : index
    %c0_25 = arith.constant 0 : index
    %49 = vector.load %arg11[%c0_24, %c0_25] : memref<1024x128xbf16, #tpu.memory_space<vmem>>, vector<1024x128xbf16>
    %50 = arith.truncf %48 : vector<128x256xf32> to vector<128x256xbf16>
    %cst_26 = arith.constant dense<0.000000e+00> : vector<1024x256xf32>
    %51 = tpu.matmul %49, %50, %cst_26 {dimension_numbers = #tpu.dot_dimension_numbers<[1], [0], [0], [1], [0, 0, 1, 1], [], []>} : vector<1024x128xbf16>, vector<128x256xbf16>, vector<1024x256xf32> -> vector<1024x256xf32>
    %c0_27 = arith.constant 0 : index
    %c0_28 = arith.constant 0 : index
    %52 = vector.load %arg12[%c0_27, %c0_28] : memref<1024x1xf32, #tpu.memory_space<vmem>>, vector<1024x1xf32>
    %53 = vector.broadcast %52 : vector<1024x1xf32> to vector<1024x256xf32>
    %54 = arith.addf %51, %53 : vector<1024x256xf32>
    %cst_29 = arith.constant 0.000000e+00 : f32
    %55 = vector.broadcast %cst_29 : f32 to vector<1024x256xf32>
    %56 = arith.maximumf %54, %55 : vector<1024x256xf32>
    %57 = arith.truncf %56 : vector<1024x256xf32> to vector<1024x256xbf16>
    %c0_30 = arith.constant 0 : index
    %c0_31 = arith.constant 0 : index
    %c0_32 = arith.constant 0 : index
    %58 = vector.load %arg13[%c0_30, %c0_31, %c0_32] : memref<1x1024x256xbf16, #tpu.memory_space<vmem>>, vector<1x1024x256xbf16>
    %59 = vector.shape_cast %58 : vector<1x1024x256xbf16> to vector<1024x256xbf16>
    %60 = vector.shape_cast %57 : vector<1024x256xbf16> to vector<1x1024x256xbf16>
    tpu.vector_store %arg13[%c0_30, %c0_31, %c0_32], %60 {strides = array<i32>} : memref<1x1024x256xbf16, #tpu.memory_space<vmem>>, vector<1x1024x256xbf16>,
    %cst_33 = arith.constant dense<0xFF800000> : vector<1024xf32>
    %61 = vector.multi_reduction <maximumf>, %56, %cst_33 [1] : vector<1024x256xf32> to vector<1024xf32>
    %62 = vector.shape_cast %61 : vector<1024xf32> to vector<1024x1xf32>
    %c0_34 = arith.constant 0 : index
    %c0_35 = arith.constant 0 : index
    %c0_36 = arith.constant 0 : index
    %63 = vector.load %arg14[%c0_34, %c0_35, %c0_36] : memref<1x1024x1xf32, #tpu.memory_space<vmem>>, vector<1x1024x1xf32>
    %64 = vector.shape_cast %63 : vector<1x1024x1xf32> to vector<1024x1xf32>
    %65 = vector.shape_cast %62 : vector<1024x1xf32> to vector<1x1024x1xf32>
    tpu.vector_store %arg14[%c0_34, %c0_35, %c0_36], %65 {strides = array<i32>} : memref<1x1024x1xf32, #tpu.memory_space<vmem>>, vector<1x1024x1xf32>,
    return
  }
  func.func @transform_0(%arg0: i32, %arg1: i32) -> (i32, i32, i32) {
    %c0_i32 = arith.constant 0 : i32
    %c0_i32_0 = arith.constant 0 : i32
    return %arg0, %c0_i32, %arg1 : i32, i32, i32
  }
  func.func @transform_1(%arg0: i32, %arg1: i32) -> (i32, i32) {
    %c0_i32 = arith.constant 0 : i32
    %c0_i32_0 = arith.constant 0 : i32
    %c0_i32_1 = arith.constant 0 : i32
    return %c0_i32, %c0_i32_0 : i32, i32
  }
  func.func @transform_2(%arg0: i32, %arg1: i32) -> (i32, i32) {
    %c0_i32 = arith.constant 0 : i32
    %c0_i32_0 = arith.constant 0 : i32
    %c0_i32_1 = arith.constant 0 : i32
    return %c0_i32, %c0_i32_0 : i32, i32
  }
  func.func @transform_3(%arg0: i32, %arg1: i32) -> (i32, i32) {
    %c0_i32 = arith.constant 0 : i32
    %c0_i32_0 = arith.constant 0 : i32
    %c0_i32_1 = arith.constant 0 : i32
    return %c0_i32, %c0_i32_0 : i32, i32
  }
  func.func @transform_4(%arg0: i32, %arg1: i32) -> (i32, i32) {
    %c0_i32 = arith.constant 0 : i32
    %c0_i32_0 = arith.constant 0 : i32
    %c0_i32_1 = arith.constant 0 : i32
    return %c0_i32, %c0_i32_0 : i32, i32
  }
  func.func @transform_5(%arg0: i32, %arg1: i32) -> (i32, i32) {
    %c0_i32 = arith.constant 0 : i32
    %c0_i32_0 = arith.constant 0 : i32
    %c0_i32_1 = arith.constant 0 : i32
    return %c0_i32, %c0_i32_0 : i32, i32
  }
  func.func @transform_6(%arg0: i32, %arg1: i32) -> (i32, i32) {
    %c0_i32 = arith.constant 0 : i32
    %c0_i32_0 = arith.constant 0 : i32
    %c0_i32_1 = arith.constant 0 : i32
    return %c0_i32, %c0_i32_0 : i32, i32
  }
  func.func @transform_7(%arg0: i32, %arg1: i32) -> (i32, i32) {
    %c0_i32 = arith.constant 0 : i32
    %c0_i32_0 = arith.constant 0 : i32
    %c0_i32_1 = arith.constant 0 : i32
    return %c0_i32, %c0_i32_0 : i32, i32
  }
  func.func @transform_8(%arg0: i32, %arg1: i32) -> (i32, i32) {
    %c0_i32 = arith.constant 0 : i32
    %c0_i32_0 = arith.constant 0 : i32
    %c0_i32_1 = arith.constant 0 : i32
    return %c0_i32, %c0_i32_0 : i32, i32
  }
  func.func @transform_9(%arg0: i32, %arg1: i32) -> (i32, i32) {
    %c0_i32 = arith.constant 0 : i32
    %c0_i32_0 = arith.constant 0 : i32
    %c0_i32_1 = arith.constant 0 : i32
    return %c0_i32, %c0_i32_0 : i32, i32
  }
  func.func @transform_10(%arg0: i32, %arg1: i32) -> (i32, i32) {
    %c0_i32 = arith.constant 0 : i32
    %c0_i32_0 = arith.constant 0 : i32
    %c0_i32_1 = arith.constant 0 : i32
    return %c0_i32, %c0_i32_0 : i32, i32
  }
  func.func @transform_11(%arg0: i32, %arg1: i32) -> (i32, i32, i32) {
    %c0_i32 = arith.constant 0 : i32
    %c0_i32_0 = arith.constant 0 : i32
    return %arg0, %c0_i32, %arg1 : i32, i32, i32
  }
  func.func @transform_12(%arg0: i32, %arg1: i32) -> (i32, i32, i32) {
    %c0_i32 = arith.constant 0 : i32
    %c0_i32_0 = arith.constant 0 : i32
    return %arg0, %c0_i32, %arg1 : i32, i32, i32
  }
}

</mosaic_0001>

<llo_original>
// kernel: tpu_custom_call.1
$region0: #{tpu_custom_call.1}
  #allocation0 [shape = 'u32[]', space=smem, size = 0x4, offset = 0x4, fixed_abs, tag = 'smem constant byte address 0x4 - core index']
  #allocation1 [shape = 'u32[144,128]{1,0:T(1,128)}', space=vmem, size = 0x12000, scoped, tag = 'internal scratch']
  %s0 = inlined_call_operand.vmem [shape: f32[2,3,256], index: 0, kind: input, shape index: {}]
  %s1 = inlined_call_operand.vmem [shape: f32[64,3], index: 1, kind: input, shape index: {}]
  %s2 = inlined_call_operand.vmem [shape: f32[64,1], index: 2, kind: input, shape index: {}]
  %s3 = inlined_call_operand.vmem [shape: bf16[64,64], index: 3, kind: input, shape index: {}]
  %s4 = inlined_call_operand.vmem [shape: f32[64,1], index: 4, kind: input, shape index: {}]
  %s5 = inlined_call_operand.vmem [shape: bf16[64,64], index: 5, kind: input, shape index: {}]
  %s6 = inlined_call_operand.vmem [shape: f32[64,1], index: 6, kind: input, shape index: {}]
  %s7 = inlined_call_operand.vmem [shape: bf16[128,64], index: 7, kind: input, shape index: {}]
  %s8 = inlined_call_operand.vmem [shape: f32[128,1], index: 8, kind: input, shape index: {}]
  %s9 = inlined_call_operand.vmem [shape: bf16[1024,128], index: 9, kind: input, shape index: {}]
  %s10 = inlined_call_operand.vmem [shape: f32[1024,1], index: 10, kind: input, shape index: {}]
  %s11 = inlined_call_operand.hbm [shape: bf16[2,1024,256], index: 11, kind: output, shape index: {0}]
  %s12 = inlined_call_operand.vmem [shape: f32[2,1024,1], index: 12, kind: output, shape index: {1}]
  %13 = xla_tuple %s11, %s12
  %s14 = sld [smem:[#allocation0]]
  $region85: #{tpu_custom_call.1} parent=0
    _
  %s16 = ssub.s32 1, %s14
  %s17 = scalar_select 0, %s16, %s14
  $region1: #{tpu_custom_call.1} parent=0
    #allocation2 [shape = 'u8[1048576]{0}', space=vmem, size = 0x100000, scoped, tag = 'output window, operand 0']
    #allocation3 [shape = 's32[2]{0}', space=sflag, size = 0x8, scoped, tag = 'scoped memory for tpu_custom_call.1']
    %18 = vsyncpa [#allocation3], 0
    %s19 = scalar_lea.sflag [#allocation3], 1
    %20 = vsyncpa %s19, 0
    loop: start=0, step=1, limit=4
    $region2: #{tpu_custom_call.1} parent=1 // loop_pre_header
      _
    $region3: #{tpu_custom_call.1} parent=1 // loop_header
      %s22 = sphi 0, %s26
      %p23 = scmp.ge.s32.totalorder %s22, 4
      %s29 = sphi 0, %s41
      %s30 = sphi 0, %s37
      %s31 = sphi 0, %s29
      %s32 = sphi 0, %s30
      %s33 = sphi 0, %s31
      %s34 = sphi 0, %s32
      %s46 = sphi 0, %s48
      %s49 = sphi 0, %s46
      %s50 = sphi 0, %s49
      %s66 = sphi 0, %s50
      %s70 = sphi 0, %s70
      %s72 = sphi 0, %s70
      %s73 = sphi 0, %s72
      %s87 = sphi 0, %s73
      %s91 = sphi 0, %s91
      %s93 = sphi 0, %s91
      %s94 = sphi 0, %s93
      %s108 = sphi 0, %s94
      %s112 = sphi 0, %s112
      %s114 = sphi 0, %s112
      %s115 = sphi 0, %s114
      %s129 = sphi 0, %s115
      %s133 = sphi 0, %s133
      %s135 = sphi 0, %s133
      %s136 = sphi 0, %s135
      %s150 = sphi 0, %s136
      %s154 = sphi 0, %s154
      %s156 = sphi 0, %s154
      %s157 = sphi 0, %s156
      %s171 = sphi 0, %s157
      %s175 = sphi 0, %s175
      %s177 = sphi 0, %s175
      %s178 = sphi 0, %s177
      %s192 = sphi 0, %s178
      %s196 = sphi 0, %s196
      %s198 = sphi 0, %s196
      %s199 = sphi 0, %s198
      %s213 = sphi 0, %s199
      %s217 = sphi 0, %s217
      %s219 = sphi 0, %s217
      %s220 = sphi 0, %s219
      %s234 = sphi 0, %s220
      %s238 = sphi 0, %s238
      %s240 = sphi 0, %s238
      %s241 = sphi 0, %s240
      %s255 = sphi 0, %s241
      %s259 = sphi 0, %s259
      %s261 = sphi 0, %s259
      %s262 = sphi 0, %s261
      %s276 = sphi 0, %s262
      %s284 = sphi 0, %s286
      %s287 = sphi 0, %s284
      %s288 = sphi 0, %s287
      %s304 = sphi 0, %s288
      %s312 = sphi 0, %s314
      %s315 = sphi 0, %s312
      %s316 = sphi 0, %s315
      %s332 = sphi 0, %s316
    $region4: #{tpu_custom_call.1} parent=1 // loop_header_branch
      %25 = sbr.rel (%p23) target = $region8
    $region5: #{tpu_custom_call.1} parent=1 // loop_body
      %s27 = ssub.s32 %s22, 1
      %s28 = ssub.s32 %s22, 2
      %s35 = sadd.s32 1, %s30
      %p36 = scmp.ge.s32.totalorder %s35, 1
      %s37 = scalar_select %p36, 0, %s35
      %s38 = sadd.s32 1, %s29
      %s39 = scalar_select %p36, %s38, %s29
      %p40 = scmp.ge.s32.totalorder %s39, 2
      %s41 = scalar_select %p40, 0, %s39
      %s42 = ssub.s32 %s29, %s41
      %s43 = ssub.s32 %s30, %s37
      %s44 = sor.u32 %s42, %s43
      %p45 = scmp.eq.s32.totalorder %s44, 0
      %s47 = sadd.s32 %s46, 1
      %s48 = scalar_select %p45, %s46, %s47
      %p51 = pneg %p45
      %p52 = scmp.eq.s32.totalorder %s22, 1
      %p53 = por %p51, %p52
      %p54 = scmp.ne.s32.totalorder %s46, %s49
      %p55 = scmp.eq.s32.totalorder %s22, 0
      %p56 = por %p54, %p55
      %p57 = scmp.ne.s32.totalorder %s46, %s49
      %p58 = scmp.eq.s32.totalorder %s27, 1
      %p59 = por %p57, %p58
      %p60 = scmp.ne.s32.totalorder %s49, %s50
      %p61 = scmp.eq.s32.totalorder %s27, 0
      %p62 = por %p60, %p61
      %p63 = scmp.ne.s32.totalorder %s49, %s50
      %p64 = scmp.eq.s32.totalorder %s28, 1
      %p65 = por %p63, %p64
      %p67 = scmp.ne.s32.totalorder %s50, %s66
      %p68 = scmp.eq.s32.totalorder %s28, 0
      %p69 = por %p67, %p68
      %s71 = sadd.s32 %s70, 1
      %p74 = scmp.eq.s32.totalorder %s22, 1
      %p75 = scmp.ne.s32.totalorder %s70, %s72
      %p76 = scmp.eq.s32.totalorder %s22, 0
      %p77 = por %p75, %p76
      %p78 = scmp.ne.s32.totalorder %s70, %s72
      %p79 = scmp.eq.s32.totalorder %s27, 1
      %p80 = por %p78, %p79
      %p81 = scmp.ne.s32.totalorder %s72, %s73
      %p82 = scmp.eq.s32.totalorder %s27, 0
      %p83 = por %p81, %p82
      %p84 = scmp.ne.s32.totalorder %s72, %s73
      %p85 = scmp.eq.s32.totalorder %s28, 1
      %p86 = por %p84, %p85
      %p88 = scmp.ne.s32.totalorder %s73, %s87
      %p89 = scmp.eq.s32.totalorder %s28, 0
      %p90 = por %p88, %p89
      %s92 = sadd.s32 %s91, 1
      %p95 = scmp.eq.s32.totalorder %s22, 1
      %p96 = scmp.ne.s32.totalorder %s91, %s93
      %p97 = scmp.eq.s32.totalorder %s22, 0
      %p98 = por %p96, %p97
      %p99 = scmp.ne.s32.totalorder %s91, %s93
      %p100 = scmp.eq.s32.totalorder %s27, 1
      %p101 = por %p99, %p100
      %p102 = scmp.ne.s32.totalorder %s93, %s94
      %p103 = scmp.eq.s32.totalorder %s27, 0
      %p104 = por %p102, %p103
      %p105 = scmp.ne.s32.totalorder %s93, %s94
      %p106 = scmp.eq.s32.totalorder %s28, 1
      %p107 = por %p105, %p106
      %p109 = scmp.ne.s32.totalorder %s94, %s108
      %p110 = scmp.eq.s32.totalorder %s28, 0
      %p111 = por %p109, %p110
      %s113 = sadd.s32 %s112, 1
      %p116 = scmp.eq.s32.totalorder %s22, 1
      %p117 = scmp.ne.s32.totalorder %s112, %s114
      %p118 = scmp.eq.s32.totalorder %s22, 0
      %p119 = por %p117, %p118
      %p120 = scmp.ne.s32.totalorder %s112, %s114
      %p121 = scmp.eq.s32.totalorder %s27, 1
      %p122 = por %p120, %p121
      %p123 = scmp.ne.s32.totalorder %s114, %s115
      %p124 = scmp.eq.s32.totalorder %s27, 0
      %p125 = por %p123, %p124
      %p126 = scmp.ne.s32.totalorder %s114, %s115
      %p127 = scmp.eq.s32.totalorder %s28, 1
      %p128 = por %p126, %p127
      %p130 = scmp.ne.s32.totalorder %s115, %s129
      %p131 = scmp.eq.s32.totalorder %s28, 0
      %p132 = por %p130, %p131
      %s134 = sadd.s32 %s133, 1
      %p137 = scmp.eq.s32.totalorder %s22, 1
      %p138 = scmp.ne.s32.totalorder %s133, %s135
      %p139 = scmp.eq.s32.totalorder %s22, 0
      %p140 = por %p138, %p139
      %p141 = scmp.ne.s32.totalorder %s133, %s135
      %p142 = scmp.eq.s32.totalorder %s27, 1
      %p143 = por %p141, %p142
      %p144 = scmp.ne.s32.totalorder %s135, %s136
      %p145 = scmp.eq.s32.totalorder %s27, 0
      %p146 = por %p144, %p145
      %p147 = scmp.ne.s32.totalorder %s135, %s136
      %p148 = scmp.eq.s32.totalorder %s28, 1
      %p149 = por %p147, %p148
      %p151 = scmp.ne.s32.totalorder %s136, %s150
      %p152 = scmp.eq.s32.totalorder %s28, 0
      %p153 = por %p151, %p152
      %s155 = sadd.s32 %s154, 1
      %p158 = scmp.eq.s32.totalorder %s22, 1
      %p159 = scmp.ne.s32.totalorder %s154, %s156
      %p160 = scmp.eq.s32.totalorder %s22, 0
      %p161 = por %p159, %p160
      %p162 = scmp.ne.s32.totalorder %s154, %s156
      %p163 = scmp.eq.s32.totalorder %s27, 1
      %p164 = por %p162, %p163
      %p165 = scmp.ne.s32.totalorder %s156, %s157
      %p166 = scmp.eq.s32.totalorder %s27, 0
      %p167 = por %p165, %p166
      %p168 = scmp.ne.s32.totalorder %s156, %s157
      %p169 = scmp.eq.s32.totalorder %s28, 1
      %p170 = por %p168, %p169
      %p172 = scmp.ne.s32.totalorder %s157, %s171
      %p173 = scmp.eq.s32.totalorder %s28, 0
      %p174 = por %p172, %p173
      %s176 = sadd.s32 %s175, 1
      %p179 = scmp.eq.s32.totalorder %s22, 1
      %p180 = scmp.ne.s32.totalorder %s175, %s177
      %p181 = scmp.eq.s32.totalorder %s22, 0
      %p182 = por %p180, %p181
      %p183 = scmp.ne.s32.totalorder %s175, %s177
      %p184 = scmp.eq.s32.totalorder %s27, 1
      %p185 = por %p183, %p184
      %p186 = scmp.ne.s32.totalorder %s177, %s178
      %p187 = scmp.eq.s32.totalorder %s27, 0
      %p188 = por %p186, %p187
      %p189 = scmp.ne.s32.totalorder %s177, %s178
      %p190 = scmp.eq.s32.totalorder %s28, 1
      %p191 = por %p189, %p190
      %p193 = scmp.ne.s32.totalorder %s178, %s192
      %p194 = scmp.eq.s32.totalorder %s28, 0
      %p195 = por %p193, %p194
      %s197 = sadd.s32 %s196, 1
      %p200 = scmp.eq.s32.totalorder %s22, 1
      %p201 = scmp.ne.s32.totalorder %s196, %s198
      %p202 = scmp.eq.s32.totalorder %s22, 0
      %p203 = por %p201, %p202
      %p204 = scmp.ne.s32.totalorder %s196, %s198
      %p205 = scmp.eq.s32.totalorder %s27, 1
      %p206 = por %p204, %p205
      %p207 = scmp.ne.s32.totalorder %s198, %s199
      %p208 = scmp.eq.s32.totalorder %s27, 0
      %p209 = por %p207, %p208
      %p210 = scmp.ne.s32.totalorder %s198, %s199
      %p211 = scmp.eq.s32.totalorder %s28, 1
      %p212 = por %p210, %p211
      %p214 = scmp.ne.s32.totalorder %s199, %s213
      %p215 = scmp.eq.s32.totalorder %s28, 0
      %p216 = por %p214, %p215
      %s218 = sadd.s32 %s217, 1
      %p221 = scmp.eq.s32.totalorder %s22, 1
      %p222 = scmp.ne.s32.totalorder %s217, %s219
      %p223 = scmp.eq.s32.totalorder %s22, 0
      %p224 = por %p222, %p223
      %p225 = scmp.ne.s32.totalorder %s217, %s219
      %p226 = scmp.eq.s32.totalorder %s27, 1
      %p227 = por %p225, %p226
      %p228 = scmp.ne.s32.totalorder %s219, %s220
      %p229 = scmp.eq.s32.totalorder %s27, 0
      %p230 = por %p228, %p229
      %p231 = scmp.ne.s32.totalorder %s219, %s220
      %p232 = scmp.eq.s32.totalorder %s28, 1
      %p233 = por %p231, %p232
      %p235 = scmp.ne.s32.totalorder %s220, %s234
      %p236 = scmp.eq.s32.totalorder %s28, 0
      %p237 = por %p235, %p236
      %s239 = sadd.s32 %s238, 1
      %p242 = scmp.eq.s32.totalorder %s22, 1
      %p243 = scmp.ne.s32.totalorder %s238, %s240
      %p244 = scmp.eq.s32.totalorder %s22, 0
      %p245 = por %p243, %p244
      %p246 = scmp.ne.s32.totalorder %s238, %s240
      %p247 = scmp.eq.s32.totalorder %s27, 1
      %p248 = por %p246, %p247
      %p249 = scmp.ne.s32.totalorder %s240, %s241
      %p250 = scmp.eq.s32.totalorder %s27, 0
      %p251 = por %p249, %p250
      %p252 = scmp.ne.s32.totalorder %s240, %s241
      %p253 = scmp.eq.s32.totalorder %s28, 1
      %p254 = por %p252, %p253
      %p256 = scmp.ne.s32.totalorder %s241, %s255
      %p257 = scmp.eq.s32.totalorder %s28, 0
      %p258 = por %p256, %p257
      %s260 = sadd.s32 %s259, 1
      %p263 = scmp.eq.s32.totalorder %s22, 1
      %p264 = scmp.ne.s32.totalorder %s259, %s261
      %p265 = scmp.eq.s32.totalorder %s22, 0
      %p266 = por %p264, %p265
      %p267 = scmp.ne.s32.totalorder %s259, %s261
      %p268 = scmp.eq.s32.totalorder %s27, 1
      %p269 = por %p267, %p268
      %p270 = scmp.ne.s32.totalorder %s261, %s262
      %p271 = scmp.eq.s32.totalorder %s27, 0
      %p272 = por %p270, %p271
      %p273 = scmp.ne.s32.totalorder %s261, %s262
      %p274 = scmp.eq.s32.totalorder %s28, 1
      %p275 = por %p273, %p274
      %p277 = scmp.ne.s32.totalorder %s262, %s276
      %p278 = scmp.eq.s32.totalorder %s28, 0
      %p279 = por %p277, %p278
      %s280 = ssub.s32 %s29, %s41
      %s281 = ssub.s32 %s30, %s37
      %s282 = sor.u32 %s280, %s281
      %p283 = scmp.eq.s32.totalorder %s282, 0
      %s285 = sadd.s32 %s284, 1
      %s286 = scalar_select %p283, %s284, %s285
      %p289 = pneg %p283
      %p290 = scmp.eq.s32.totalorder %s22, 1
      %p291 = por %p289, %p290
      %p292 = scmp.ne.s32.totalorder %s284, %s287
      %p293 = scmp.eq.s32.totalorder %s22, 0
      %p294 = por %p292, %p293
      %p295 = scmp.ne.s32.totalorder %s284, %s287
      %p296 = scmp.eq.s32.totalorder %s27, 1
      %p297 = por %p295, %p296
      %p298 = scmp.ne.s32.totalorder %s287, %s288
      %p299 = scmp.eq.s32.totalorder %s27, 0
      %p300 = por %p298, %p299
      %p301 = scmp.ne.s32.totalorder %s287, %s288
      %p302 = scmp.eq.s32.totalorder %s28, 1
      %p303 = por %p301, %p302
      %p305 = scmp.ne.s32.totalorder %s288, %s304
      %p306 = scmp.eq.s32.totalorder %s28, 0
      %p307 = por %p305, %p306
      %s308 = ssub.s32 %s29, %s41
      %s309 = ssub.s32 %s30, %s37
      %s310 = sor.u32 %s308, %s309
      %p311 = scmp.eq.s32.totalorder %s310, 0
      %s313 = sadd.s32 %s312, 1
      %s314 = scalar_select %p311, %s312, %s313
      %p317 = pneg %p311
      %p318 = scmp.eq.s32.totalorder %s22, 1
      %p319 = por %p317, %p318
      %p320 = scmp.ne.s32.totalorder %s312, %s315
      %p321 = scmp.eq.s32.totalorder %s22, 0
      %p322 = por %p320, %p321
      %p323 = scmp.ne.s32.totalorder %s312, %s315
      %p324 = scmp.eq.s32.totalorder %s27, 1
      %p325 = por %p323, %p324
      %p326 = scmp.ne.s32.totalorder %s315, %s316
      %p327 = scmp.eq.s32.totalorder %s27, 0
      %p328 = por %p326, %p327
      %p329 = scmp.ne.s32.totalorder %s315, %s316
      %p330 = scmp.eq.s32.totalorder %s28, 1
      %p331 = por %p329, %p330
      %p333 = scmp.ne.s32.totalorder %s316, %s332
      %p334 = scmp.eq.s32.totalorder %s28, 0
      %p335 = por %p333, %p334
      %p336 = scmp.le.s32.totalorder 1, %s22
      %p337 = scmp.lt.s32.totalorder %s22, 3
      %p338 = pnand %p336, %p337
      %p339 = pneg %p338
      // Predicated region
      $region9: #{tpu_custom_call.1} parent=5 // pred_check
        _
      $region10: #{tpu_custom_call.1} parent=5 // pred_check_branch
        %341 = sbr.rel (%p338) target = $region12
      $region11: #{tpu_custom_call.1} parent=5 // pred_region
        %s342 = ssub.s32 %s22, 1
        // Predicated region
        $region13: #{tpu_custom_call.1} parent=11 // pred_check
          %p343 = pneg %p83
        $region14: #{tpu_custom_call.1} parent=11 // pred_check_branch
          %345 = sbr.rel (%p343) target = $region16
        $region15: #{tpu_custom_call.1} parent=11 // pred_region
          _
        $region16: #{tpu_custom_call.1} parent=11 // pred_fallthru
          _
        // Predicated region
        $region17: #{tpu_custom_call.1} parent=11 // pred_check
          %p346 = pneg %p104
        $region18: #{tpu_custom_call.1} parent=11 // pred_check_branch
          %348 = sbr.rel (%p346) target = $region20
        $region19: #{tpu_custom_call.1} parent=11 // pred_region
          _
        $region20: #{tpu_custom_call.1} parent=11 // pred_fallthru
          _
        // Predicated region
        $region21: #{tpu_custom_call.1} parent=11 // pred_check
          %p349 = pneg %p125
        $region22: #{tpu_custom_call.1} parent=11 // pred_check_branch
          %351 = sbr.rel (%p349) target = $region24
        $region23: #{tpu_custom_call.1} parent=11 // pred_region
          _
        $region24: #{tpu_custom_call.1} parent=11 // pred_fallthru
          _
        // Predicated region
        $region25: #{tpu_custom_call.1} parent=11 // pred_check
          %p352 = pneg %p146
        $region26: #{tpu_custom_call.1} parent=11 // pred_check_branch
          %354 = sbr.rel (%p352) target = $region28
        $region27: #{tpu_custom_call.1} parent=11 // pred_region
          _
        $region28: #{tpu_custom_call.1} parent=11 // pred_fallthru
          _
        // Predicated region
        $region29: #{tpu_custom_call.1} parent=11 // pred_check
          %p355 = pneg %p167
        $region30: #{tpu_custom_call.1} parent=11 // pred_check_branch
          %357 = sbr.rel (%p355) target = $region32
        $region31: #{tpu_custom_call.1} parent=11 // pred_region
          _
        $region32: #{tpu_custom_call.1} parent=11 // pred_fallthru
          _
        // Predicated region
        $region33: #{tpu_custom_call.1} parent=11 // pred_check
          %p358 = pneg %p188
        $region34: #{tpu_custom_call.1} parent=11 // pred_check_branch
          %360 = sbr.rel (%p358) target = $region36
        $region35: #{tpu_custom_call.1} parent=11 // pred_region
          _
        $region36: #{tpu_custom_call.1} parent=11 // pred_fallthru
          _
        // Predicated region
        $region37: #{tpu_custom_call.1} parent=11 // pred_check
          %p361 = pneg %p209
        $region38: #{tpu_custom_call.1} parent=11 // pred_check_branch
          %363 = sbr.rel (%p361) target = $region40
        $region39: #{tpu_custom_call.1} parent=11 // pred_region
          _
        $region40: #{tpu_custom_call.1} parent=11 // pred_fallthru
          _
        // Predicated region
        $region41: #{tpu_custom_call.1} parent=11 // pred_check
          %p364 = pneg %p230
        $region42: #{tpu_custom_call.1} parent=11 // pred_check_branch
          %366 = sbr.rel (%p364) target = $region44
        $region43: #{tpu_custom_call.1} parent=11 // pred_region
          _
        $region44: #{tpu_custom_call.1} parent=11 // pred_fallthru
          _
        // Predicated region
        $region45: #{tpu_custom_call.1} parent=11 // pred_check
          %p367 = pneg %p251
        $region46: #{tpu_custom_call.1} parent=11 // pred_check_branch
          %369 = sbr.rel (%p367) target = $region48
        $region47: #{tpu_custom_call.1} parent=11 // pred_region
          _
        $region48: #{tpu_custom_call.1} parent=11 // pred_fallthru
          _
        // Predicated region
        $region49: #{tpu_custom_call.1} parent=11 // pred_check
          %p370 = pneg %p272
        $region50: #{tpu_custom_call.1} parent=11 // pred_check_branch
          %372 = sbr.rel (%p370) target = $region52
        $region51: #{tpu_custom_call.1} parent=11 // pred_region
          _
        $region52: #{tpu_custom_call.1} parent=11 // pred_fallthru
          _
      $region12: #{tpu_custom_call.1} parent=5 // pred_fallthru
        _
      %p373 = scmp.lt.s32.totalorder %s22, 2
      // Predicated region
      $region53: #{tpu_custom_call.1} parent=5 // pred_check
        %p374 = pneg %p373
      $region54: #{tpu_custom_call.1} parent=5 // pred_check_branch
        %376 = sbr.rel (%p374) target = $region56
      $region55: #{tpu_custom_call.1} parent=5 // pred_region
        // Predicated region
        $region57: #{tpu_custom_call.1} parent=55 // pred_check
          %p377 = pneg %p56
        $region58: #{tpu_custom_call.1} parent=55 // pred_check_branch
          %379 = sbr.rel (%p377) target = $region60
        $region59: #{tpu_custom_call.1} parent=55 // pred_region
          %s380 = smul.u32 2, %s30
          %p381 = scmp.lt.s32.totalorder %s29, 1
          %s382 = scalar_select %p381, %s29, 1
          %p383 = scmp.lt.s32.totalorder %s380, 1
          %s384 = scalar_select %p383, %s380, 1
          %s385 = smul.addr %s382, 2
          %s386 = sadd.s32 %s384, %s385
          %s387 = smul.addr %s386, 4
          %s388 = scalar_lea.vmem %s0, %s387
          %s389 = smul.u32 2, %s30
        $region60: #{tpu_custom_call.1} parent=55 // pred_fallthru
          _
      $region56: #{tpu_custom_call.1} parent=5 // pred_fallthru
        _
      %p390 = scmp.le.s32.totalorder 1, %s22
      %p391 = scmp.lt.s32.totalorder %s22, 3
      %p392 = pnand %p390, %p391
      %p393 = pneg %p392
      // Predicated region
      $region61: #{tpu_custom_call.1} parent=5 // pred_check
        _
      $region62: #{tpu_custom_call.1} parent=5 // pred_check_branch
        %395 = sbr.rel (%p392) target = $region64
      $region63: #{tpu_custom_call.1} parent=5 // pred_region
        %s396 = ssub.s32 %s22, 1
        %s397 = smul.u32 2, %s32
        %p398 = scmp.lt.s32.totalorder %s31, 1
        %s399 = scalar_select %p398, %s31, 1
        %p400 = scmp.lt.s32.totalorder %s397, 1
        %s401 = scalar_select %p400, %s397, 1
        %s402 = smul.addr %s399, 2
        %s403 = sadd.s32 %s401, %s402
        %s404 = smul.addr %s403, 4
        %s405 = scalar_lea.vmem %s0, %s404
        %p406 = pneg %p62
        %p407 = pneg %p59
        %p408 = pneg %p83
        %p409 = pneg %p80
        %p410 = pneg %p104
        %p411 = pneg %p101
        %p412 = pneg %p125
        %p413 = pneg %p122
        %p414 = pneg %p146
        %p415 = pneg %p143
        %p416 = pneg %p167
        %p417 = pneg %p164
        %p418 = pneg %p188
        %p419 = pneg %p185
        %p420 = pneg %p209
        %p421 = pneg %p206
        %p422 = pneg %p230
        %p423 = pneg %p227
        %p424 = pneg %p251
        %p425 = pneg %p248
        %p426 = pneg %p272
        %p427 = pneg %p269
        %p428 = pneg %p300
        %p429 = pneg %p297
        %s430 = sand.u32 %s287, 1
        %s431 = scalar_lea.sflag [#allocation3], %s430
        %s432 = sand.u32 %s287, 1
        %s433 = smul.addr %s432, 1024
        %s434 = scalar_lea.vmem [#allocation2], %s433
        %p435 = pneg %p328
        %p436 = pneg %p325
        %p437 = scmp.lt.s32.totalorder %s31, 1
        %s438 = scalar_select %p437, %s31, 1
        %p439 = scmp.lt.s32.totalorder %s32, 0
        %s440 = scalar_select %p439, %s32, 0
        %s441 = smul.addr %s438, 128
        %s442 = sadd.s32 %s440, %s441
        %s443 = smul.addr %s442, 8
        %s444 = scalar_lea.vmem %s12, %s443
        %s445 = smul.u32 2, %s32
        %p446 = scmp.lt.s32.totalorder %s31, 1
        %s447 = scalar_select %p446, %s31, 1
        %p448 = scmp.lt.s32.totalorder %s445, 1
        %s449 = scalar_select %p448, %s445, 1
        %s450 = smul.addr %s447, 2
        %s451 = sadd.s32 %s449, %s450
        %s452 = smul.addr %s451, 4
        %s453 = scalar_lea.vmem %s0, %s452
        %s454 = smul.u32 2, %s32
        %s455 = smul.u32 2, %s32
        %p456 = scmp.lt.s32.totalorder %s31, 1
        %s457 = scalar_select %p456, %s31, 1
        %p458 = scmp.lt.s32.totalorder %s32, 0
        %s459 = scalar_select %p458, %s32, 0
        %s460 = smul.addr %s457, 128
        %s461 = sadd.s32 %s459, %s460
        %s462 = smul.addr %s461, 8
        %s463 = scalar_lea.vmem %s12, %s462
        %v465 = vld [vmem:[%s453] sm:$0x77]
        %v466 = vld [vmem:[%s1] sm:$0xff]
        %v467 = vld [vmem:[%s1 + $0x8] sm:$0xff]
        %v468 = vld [vmem:[%s1 + $0x10] sm:$0xff]
        %v469 = vld [vmem:[%s1 + $0x18] sm:$0xff]
        %v470 = vld [vmem:[%s1 + $0x20] sm:$0xff]
        %v471 = vld [vmem:[%s1 + $0x28] sm:$0xff]
        %v472 = vld [vmem:[%s1 + $0x30] sm:$0xff]
        %v473 = vld [vmem:[%s1 + $0x38] sm:$0xff]
        %475 = vset.pattern.permute.xlu0 0
        %476 = vperm.xlu0 %475, %v466
        %v477 = vpop.permute.xlu0 %476
        %480 = vset.pattern.permute.xlu0 0
        %481 = vperm.xlu0 %480, %v467
        %v482 = vpop.permute.xlu0 %481
        %485 = vset.pattern.permute.xlu0 0
        %486 = vperm.xlu0 %485, %v468
        %v487 = vpop.permute.xlu0 %486
        %490 = vset.pattern.permute.xlu0 0
        %491 = vperm.xlu0 %490, %v469
        %v492 = vpop.permute.xlu0 %491
        %495 = vset.pattern.permute.xlu0 0
        %496 = vperm.xlu0 %495, %v470
        %v497 = vpop.permute.xlu0 %496
        %500 = vset.pattern.permute.xlu0 0
        %501 = vperm.xlu0 %500, %v471
        %v502 = vpop.permute.xlu0 %501
        %505 = vset.pattern.permute.xlu0 0
        %506 = vperm.xlu0 %505, %v472
        %v507 = vpop.permute.xlu0 %506
        %510 = vset.pattern.permute.xlu0 0
        %511 = vperm.xlu0 %510, %v473
        %v512 = vpop.permute.xlu0 %511
        %v515 = vlaneseq
        %v516 = vshrl.u32 %v515, 7
        %v517 = vsub.s32 0, %v516
        %v518 = vrot.slane %v465, %v517
        %v519 = vlaneseq
        %v520 = vshrl.u32 %v519, 7
        %v521 = vsub.s32 4, %v520
        %v522 = vrot.slane %v465, %v521
        %v525 = vlaneseq
        %v526 = vshrl.u32 %v525, 7
        %v527 = vsub.s32 0, %v526
        %v528 = vrot.slane %v518, %v527
        %v529 = vlaneseq
        %v530 = vshrl.u32 %v529, 7
        %v531 = vsub.s32 0, %v530
        %v532 = vrot.slane %v522, %v531
        %v533 = vmul.f32 %v477, %v528
        %v534 = vmul.f32 %v477, %v532
        %v535 = vmul.f32 %v482, %v528
        %v536 = vmul.f32 %v482, %v532
        %v537 = vmul.f32 %v487, %v528
        %v538 = vmul.f32 %v487, %v532
        %v539 = vmul.f32 %v492, %v528
        %v540 = vmul.f32 %v492, %v532
        %v541 = vmul.f32 %v497, %v528
        %v542 = vmul.f32 %v497, %v532
        %v543 = vmul.f32 %v502, %v528
        %v544 = vmul.f32 %v502, %v532
        %v545 = vmul.f32 %v507, %v528
        %v546 = vmul.f32 %v507, %v532
        %v547 = vmul.f32 %v512, %v528
        %v548 = vmul.f32 %v512, %v532
        %549 = vset.pattern.permute.xlu0 1
        %550 = vperm.xlu0 %549, %v466
        %v551 = vpop.permute.xlu0 %550
        %553 = vset.pattern.permute.xlu0 1
        %554 = vperm.xlu0 %553, %v467
        %v555 = vpop.permute.xlu0 %554
        %557 = vset.pattern.permute.xlu0 1
        %558 = vperm.xlu0 %557, %v468
        %v559 = vpop.permute.xlu0 %558
        %561 = vset.pattern.permute.xlu0 1
        %562 = vperm.xlu0 %561, %v469
        %v563 = vpop.permute.xlu0 %562
        %565 = vset.pattern.permute.xlu0 1
        %566 = vperm.xlu0 %565, %v470
        %v567 = vpop.permute.xlu0 %566
        %569 = vset.pattern.permute.xlu0 1
        %570 = vperm.xlu0 %569, %v471
        %v571 = vpop.permute.xlu0 %570
        %573 = vset.pattern.permute.xlu0 1
        %574 = vperm.xlu0 %573, %v472
        %v575 = vpop.permute.xlu0 %574
        %577 = vset.pattern.permute.xlu0 1
        %578 = vperm.xlu0 %577, %v473
        %v579 = vpop.permute.xlu0 %578
        %v581 = vlaneseq
        %v582 = vshrl.u32 %v581, 7
        %v583 = vsub.s32 1, %v582
        %v584 = vrot.slane %v465, %v583
        %v585 = vlaneseq
        %v586 = vshrl.u32 %v585, 7
        %v587 = vsub.s32 5, %v586
        %v588 = vrot.slane %v465, %v587
        %v591 = vlaneseq
        %v592 = vshrl.u32 %v591, 7
        %v593 = vsub.s32 1, %v592
        %v594 = vrot.slane %v584, %v593
        %v595 = vlaneseq
        %v596 = vshrl.u32 %v595, 7
        %v597 = vsub.s32 1, %v596
        %v598 = vrot.slane %v588, %v597
        %v599 = vmul.f32 %v551, %v594
        %v600 = vmul.f32 %v551, %v598
        %v601 = vmul.f32 %v555, %v594
        %v602 = vmul.f32 %v555, %v598
        %v603 = vmul.f32 %v559, %v594
        %v604 = vmul.f32 %v559, %v598
        %v605 = vmul.f32 %v563, %v594
        %v606 = vmul.f32 %v563, %v598
        %v607 = vmul.f32 %v567, %v594
        %v608 = vmul.f32 %v567, %v598
        %v609 = vmul.f32 %v571, %v594
        %v610 = vmul.f32 %v571, %v598
        %v611 = vmul.f32 %v575, %v594
        %v612 = vmul.f32 %v575, %v598
        %v613 = vmul.f32 %v579, %v594
        %v614 = vmul.f32 %v579, %v598
        %v615 = vadd.f32 %v533, %v599
        %v616 = vadd.f32 %v534, %v600
        %v617 = vadd.f32 %v535, %v601
        %v618 = vadd.f32 %v536, %v602
        %v619 = vadd.f32 %v537, %v603
        %v620 = vadd.f32 %v538, %v604
        %v621 = vadd.f32 %v539, %v605
        %v622 = vadd.f32 %v540, %v606
        %v623 = vadd.f32 %v541, %v607
        %v624 = vadd.f32 %v542, %v608
        %v625 = vadd.f32 %v543, %v609
        %v626 = vadd.f32 %v544, %v610
        %v627 = vadd.f32 %v545, %v611
        %v628 = vadd.f32 %v546, %v612
        %v629 = vadd.f32 %v547, %v613
        %v630 = vadd.f32 %v548, %v614
        %631 = vset.pattern.permute.xlu0 2
        %632 = vperm.xlu0 %631, %v466
        %v633 = vpop.permute.xlu0 %632
        %635 = vset.pattern.permute.xlu0 2
        %636 = vperm.xlu0 %635, %v467
        %v637 = vpop.permute.xlu0 %636
        %639 = vset.pattern.permute.xlu0 2
        %640 = vperm.xlu0 %639, %v468
        %v641 = vpop.permute.xlu0 %640
        %643 = vset.pattern.permute.xlu0 2
        %644 = vperm.xlu0 %643, %v469
        %v645 = vpop.permute.xlu0 %644
        %647 = vset.pattern.permute.xlu0 2
        %648 = vperm.xlu0 %647, %v470
        %v649 = vpop.permute.xlu0 %648
        %651 = vset.pattern.permute.xlu0 2
        %652 = vperm.xlu0 %651, %v471
        %v653 = vpop.permute.xlu0 %652
        %655 = vset.pattern.permute.xlu0 2
        %656 = vperm.xlu0 %655, %v472
        %v657 = vpop.permute.xlu0 %656
        %659 = vset.pattern.permute.xlu0 2
        %660 = vperm.xlu0 %659, %v473
        %v661 = vpop.permute.xlu0 %660
        %v663 = vlaneseq
        %v664 = vshrl.u32 %v663, 7
        %v665 = vsub.s32 2, %v664
        %v666 = vrot.slane %v465, %v665
        %v667 = vlaneseq
        %v668 = vshrl.u32 %v667, 7
        %v669 = vsub.s32 6, %v668
        %v670 = vrot.slane %v465, %v669
        %v673 = vlaneseq
        %v674 = vshrl.u32 %v673, 7
        %v675 = vsub.s32 2, %v674
        %v676 = vrot.slane %v666, %v675
        %v677 = vlaneseq
        %v678 = vshrl.u32 %v677, 7
        %v679 = vsub.s32 2, %v678
        %v680 = vrot.slane %v670, %v679
        %v681 = vmul.f32 %v633, %v676
        %v682 = vmul.f32 %v633, %v680
        %v683 = vmul.f32 %v637, %v676
        %v684 = vmul.f32 %v637, %v680
        %v685 = vmul.f32 %v641, %v676
        %v686 = vmul.f32 %v641, %v680
        %v687 = vmul.f32 %v645, %v676
        %v688 = vmul.f32 %v645, %v680
        %v689 = vmul.f32 %v649, %v676
        %v690 = vmul.f32 %v649, %v680
        %v691 = vmul.f32 %v653, %v676
        %v692 = vmul.f32 %v653, %v680
        %v693 = vmul.f32 %v657, %v676
        %v694 = vmul.f32 %v657, %v680
        %v695 = vmul.f32 %v661, %v676
        %v696 = vmul.f32 %v661, %v680
        %v697 = vadd.f32 %v615, %v681
        %v698 = vadd.f32 %v616, %v682
        %v699 = vadd.f32 %v617, %v683
        %v700 = vadd.f32 %v618, %v684
        %v701 = vadd.f32 %v619, %v685
        %v702 = vadd.f32 %v620, %v686
        %v703 = vadd.f32 %v621, %v687
        %v704 = vadd.f32 %v622, %v688
        %v705 = vadd.f32 %v623, %v689
        %v706 = vadd.f32 %v624, %v690
        %v707 = vadd.f32 %v625, %v691
        %v708 = vadd.f32 %v626, %v692
        %v709 = vadd.f32 %v627, %v693
        %v710 = vadd.f32 %v628, %v694
        %v711 = vadd.f32 %v629, %v695
        %v712 = vadd.f32 %v630, %v696
        %v713 = vld [vmem:[%s2] sm:$0xff]
        %v714 = vld [vmem:[%s2 + $0x8] sm:$0xff]
        %v715 = vld [vmem:[%s2 + $0x10] sm:$0xff]
        %v716 = vld [vmem:[%s2 + $0x18] sm:$0xff]
        %v717 = vld [vmem:[%s2 + $0x20] sm:$0xff]
        %v718 = vld [vmem:[%s2 + $0x28] sm:$0xff]
        %v719 = vld [vmem:[%s2 + $0x30] sm:$0xff]
        %v720 = vld [vmem:[%s2 + $0x38] sm:$0xff]
        %722 = vset.pattern.permute.xlu0 0
        %723 = vperm.xlu0 %722, %v713
        %v724 = vpop.permute.xlu0 %723
        %727 = vset.pattern.permute.xlu0 0
        %728 = vperm.xlu0 %727, %v714
        %v729 = vpop.permute.xlu0 %728
        %732 = vset.pattern.permute.xlu0 0
        %733 = vperm.xlu0 %732, %v715
        %v734 = vpop.permute.xlu0 %733
        %737 = vset.pattern.permute.xlu0 0
        %738 = vperm.xlu0 %737, %v716
        %v739 = vpop.permute.xlu0 %738
        %742 = vset.pattern.permute.xlu0 0
        %743 = vperm.xlu0 %742, %v717
        %v744 = vpop.permute.xlu0 %743
        %747 = vset.pattern.permute.xlu0 0
        %748 = vperm.xlu0 %747, %v718
        %v749 = vpop.permute.xlu0 %748
        %752 = vset.pattern.permute.xlu0 0
        %753 = vperm.xlu0 %752, %v719
        %v754 = vpop.permute.xlu0 %753
        %757 = vset.pattern.permute.xlu0 0
        %758 = vperm.xlu0 %757, %v720
        %v759 = vpop.permute.xlu0 %758
        %v761 = vadd.f32 %v697, %v724
        %v762 = vadd.f32 %v698, %v724
        %v763 = vadd.f32 %v699, %v729
        %v764 = vadd.f32 %v700, %v729
        %v765 = vadd.f32 %v701, %v734
        %v766 = vadd.f32 %v702, %v734
        %v767 = vadd.f32 %v703, %v739
        %v768 = vadd.f32 %v704, %v739
        %v769 = vadd.f32 %v705, %v744
        %v770 = vadd.f32 %v706, %v744
        %v771 = vadd.f32 %v707, %v749
        %v772 = vadd.f32 %v708, %v749
        %v773 = vadd.f32 %v709, %v754
        %v774 = vadd.f32 %v710, %v754
        %v775 = vadd.f32 %v711, %v759
        %v776 = vadd.f32 %v712, %v759
        %v777 = vmax.f32 %v761, 0.0
        %v778 = vmax.f32 %v762, 0.0
        %v779 = vmax.f32 %v763, 0.0
        %v780 = vmax.f32 %v764, 0.0
        %v781 = vmax.f32 %v765, 0.0
        %v782 = vmax.f32 %v766, 0.0
        %v783 = vmax.f32 %v767, 0.0
        %v784 = vmax.f32 %v768, 0.0
        %v785 = vmax.f32 %v769, 0.0
        %v786 = vmax.f32 %v770, 0.0
        %v787 = vmax.f32 %v771, 0.0
        %v788 = vmax.f32 %v772, 0.0
        %v789 = vmax.f32 %v773, 0.0
        %v790 = vmax.f32 %v774, 0.0
        %v791 = vmax.f32 %v775, 0.0
        %v792 = vmax.f32 %v776, 0.0
        %v793 = vld [vmem:[%s3] sm:$0xf]
        %v794 = vld [vmem:[%s3 + $0x4] sm:$0xf]
        %v795 = vld [vmem:[%s3 + $0x8] sm:$0xf]
        %v796 = vld [vmem:[%s3 + $0xc] sm:$0xf]
        %v797 = vld [vmem:[%s3 + $0x10] sm:$0xf]
        %v798 = vld [vmem:[%s3 + $0x14] sm:$0xf]
        %v799 = vld [vmem:[%s3 + $0x18] sm:$0xf]
        %v800 = vld [vmem:[%s3 + $0x1c] sm:$0xf]
        %v801 = vpack.c.bf16 %v779, %v777
        %v802 = vpack.c.bf16 %v780, %v778
        %v803 = vpack.c.bf16 %v783, %v781
        %v804 = vpack.c.bf16 %v784, %v782
        %v805 = vpack.c.bf16 %v787, %v785
        %v806 = vpack.c.bf16 %v788, %v786
        %v807 = vpack.c.bf16 %v791, %v789
        %v808 = vpack.c.bf16 %v792, %v790
        %v809 = vld [vmem:[%s4] sm:$0xff]
        %v810 = vld [vmem:[%s4 + $0x8] sm:$0xff]
        %v811 = vld [vmem:[%s4 + $0x10] sm:$0xff]
        %v812 = vld [vmem:[%s4 + $0x18] sm:$0xff]
        %v813 = vld [vmem:[%s4 + $0x20] sm:$0xff]
        %v814 = vld [vmem:[%s4 + $0x28] sm:$0xff]
        %v815 = vld [vmem:[%s4 + $0x30] sm:$0xff]
        %v816 = vld [vmem:[%s4 + $0x38] sm:$0xff]
        %818 = vset.pattern.permute.xlu0 0
        %819 = vperm.xlu0 %818, %v809
        %v820 = vpop.permute.xlu0 %819
        %823 = vset.pattern.permute.xlu0 0
        %824 = vperm.xlu0 %823, %v810
        %v825 = vpop.permute.xlu0 %824
        %828 = vset.pattern.permute.xlu0 0
        %829 = vperm.xlu0 %828, %v811
        %v830 = vpop.permute.xlu0 %829
        %833 = vset.pattern.permute.xlu0 0
        %834 = vperm.xlu0 %833, %v812
        %v835 = vpop.permute.xlu0 %834
        %838 = vset.pattern.permute.xlu0 0
        %839 = vperm.xlu0 %838, %v813
        %v840 = vpop.permute.xlu0 %839
        %843 = vset.pattern.permute.xlu0 0
        %844 = vperm.xlu0 %843, %v814
        %v845 = vpop.permute.xlu0 %844
        %848 = vset.pattern.permute.xlu0 0
        %849 = vperm.xlu0 %848, %v815
        %v850 = vpop.permute.xlu0 %849
        %853 = vset.pattern.permute.xlu0 0
        %854 = vperm.xlu0 %853, %v816
        %v855 = vpop.permute.xlu0 %854
        %v865 = vunpack.c.l.b16 %v793
        %v866 = vunpack.c.l.b16 %v794
        %v867 = vunpack.c.l.b16 %v795
        %v868 = vunpack.c.l.b16 %v796
        %v869 = vunpack.c.l.b16 %v797
        %v870 = vunpack.c.l.b16 %v798
        %v871 = vunpack.c.l.b16 %v799
        %v872 = vunpack.c.l.b16 %v800
        %v873 = vpack.c.b16 %v866, %v865
        %v874 = vpack.c.b16 %v868, %v867
        %v875 = vpack.c.b16 %v870, %v869
        %v876 = vpack.c.b16 %v872, %v871
        %vm877 = vcmask 523264
        %v879 = vsel %vm877, %v873, 0
        %v882 = vsel %vm877, %v874, 0
        %v885 = vsel %vm877, %v875, 0
        %v888 = vsel %vm877, %v876, 0
        %890 = vmatprep.subr.bf16.mxu0 0
        %891 = vmatpush1.bf16.msra.mxu0 0
        %892 = vmatprep.subr.bf16.mxu0 0
        %893 = vmatpush1.bf16.msra.mxu0 0
        %894 = vmatprep.subr.bf16.mxu0 0
        %895 = vmatpush1.bf16.msra.mxu0 0
        %896 = vmatprep.subr.bf16.mxu0 0
        %897 = vmatpush1.bf16.msra.mxu0 0
        %898 = vmatprep.subr.bf16.mxu0 %v808
        %899 = vmatpush1.bf16.msra.mxu0 %v807
        %900 = vmatprep.subr.bf16.mxu0 %v806
        %901 = vmatpush1.bf16.msra.mxu0 %v805
        %902 = vmatprep.subr.bf16.mxu0 %v804
        %903 = vmatpush1.bf16.msra.mxu0 %v803
        %904 = vmatprep.subr.bf16.mxu0 %v802
        %905 = vmatpush1.bf16.msra.mxu0 %v801
        %906 = vmatprep.subr.bf16.mxu0 0
        %907 = vmatpush2.bf16.msra.mxu0 0
        %908 = vmatprep.subr.bf16.mxu0 0
        %909 = vmatpush2.bf16.msra.mxu0 0
        %910 = vmatprep.subr.bf16.mxu0 0
        %911 = vmatpush2.bf16.msra.mxu0 0
        %912 = vmatprep.subr.bf16.mxu0 0
        %913 = vmatpush2.bf16.msra.mxu0 0
        %914 = vmatprep.subr.bf16.mxu0 0
        %915 = vmatpush2.bf16.msra.mxu0 0
        %916 = vmatprep.subr.bf16.mxu0 0
        %917 = vmatpush2.bf16.msra.mxu0 0
        %918 = vmatprep.subr.bf16.mxu0 0
        %919 = vmatpush2.bf16.msra.mxu0 0
        %920 = vmatprep.subr.bf16.mxu0 0
        %921 = vmatpush2.bf16.msra.mxu0 0
        %922 = vmatprep.mubr.bf16.mxu0 0
        %923 = vmatmul.mubr.bf16.gmra.mxu0 %v879
        %v924 = vpop.f32.mrf.mxu0
        %v925 = vadd.f32 %v820, %v924
        %v926 = vpop.f32.mrf.mxu0
        %v927 = vadd.f32 %v820, %v926
        %v928 = vpop.f32.mrf.mxu0
        %v929 = vadd.f32 %v825, %v928
        %v930 = vpop.f32.mrf.mxu0
        %v931 = vadd.f32 %v825, %v930
        %932 = vmatprep.mubr.bf16.mxu0 0
        %933 = vmatmul.mubr.bf16.gmra.mxu0 %v882
        %v934 = vpop.f32.mrf.mxu0
        %v935 = vadd.f32 %v830, %v934
        %v936 = vpop.f32.mrf.mxu0
        %v937 = vadd.f32 %v830, %v936
        %v938 = vpop.f32.mrf.mxu0
        %v939 = vadd.f32 %v835, %v938
        %v940 = vpop.f32.mrf.mxu0
        %v941 = vadd.f32 %v835, %v940
        %942 = vmatprep.mubr.bf16.mxu0 0
        %943 = vmatmul.mubr.bf16.gmra.mxu0 %v885
        %v944 = vpop.f32.mrf.mxu0
        %v945 = vadd.f32 %v840, %v944
        %v946 = vpop.f32.mrf.mxu0
        %v947 = vadd.f32 %v840, %v946
        %v948 = vpop.f32.mrf.mxu0
        %v949 = vadd.f32 %v845, %v948
        %v950 = vpop.f32.mrf.mxu0
        %v951 = vadd.f32 %v845, %v950
        %952 = vmatprep.mubr.bf16.mxu0 0
        %953 = vmatmul.mubr.bf16.gmra.mxu0 %v888
        %v954 = vpop.f32.mrf.mxu0
        %v955 = vadd.f32 %v850, %v954
        %v956 = vpop.f32.mrf.mxu0
        %v957 = vadd.f32 %v850, %v956
        %v958 = vpop.f32.mrf.mxu0
        %v959 = vadd.f32 %v855, %v958
        %v960 = vpop.f32.mrf.mxu0
        %v961 = vadd.f32 %v855, %v960
        %962 = vdwg.mxu0
        %v963 = vmax.f32 %v925, 0.0
        %v964 = vmax.f32 %v927, 0.0
        %v965 = vmax.f32 %v929, 0.0
        %v966 = vmax.f32 %v931, 0.0
        %v967 = vmax.f32 %v935, 0.0
        %v968 = vmax.f32 %v937, 0.0
        %v969 = vmax.f32 %v939, 0.0
        %v970 = vmax.f32 %v941, 0.0
        %v971 = vmax.f32 %v945, 0.0
        %v972 = vmax.f32 %v947, 0.0
        %v973 = vmax.f32 %v949, 0.0
        %v974 = vmax.f32 %v951, 0.0
        %v975 = vmax.f32 %v955, 0.0
        %v976 = vmax.f32 %v957, 0.0
        %v977 = vmax.f32 %v959, 0.0
        %v978 = vmax.f32 %v961, 0.0
        %v979 = vld [vmem:[%s5] sm:$0xf]
        %v980 = vld [vmem:[%s5 + $0x4] sm:$0xf]
        %v981 = vld [vmem:[%s5 + $0x8] sm:$0xf]
        %v982 = vld [vmem:[%s5 + $0xc] sm:$0xf]
        %v983 = vld [vmem:[%s5 + $0x10] sm:$0xf]
        %v984 = vld [vmem:[%s5 + $0x14] sm:$0xf]
        %v985 = vld [vmem:[%s5 + $0x18] sm:$0xf]
        %v986 = vld [vmem:[%s5 + $0x1c] sm:$0xf]
        %v987 = vpack.c.bf16 %v965, %v963
        %v988 = vpack.c.bf16 %v966, %v964
        %v989 = vpack.c.bf16 %v969, %v967
        %v990 = vpack.c.bf16 %v970, %v968
        %v991 = vpack.c.bf16 %v973, %v971
        %v992 = vpack.c.bf16 %v974, %v972
        %v993 = vpack.c.bf16 %v977, %v975
        %v994 = vpack.c.bf16 %v978, %v976
        %v995 = vld [vmem:[%s6] sm:$0xff]
        %v996 = vld [vmem:[%s6 + $0x8] sm:$0xff]
        %v997 = vld [vmem:[%s6 + $0x10] sm:$0xff]
        %v998 = vld [vmem:[%s6 + $0x18] sm:$0xff]
        %v999 = vld [vmem:[%s6 + $0x20] sm:$0xff]
        %v1000 = vld [vmem:[%s6 + $0x28] sm:$0xff]
        %v1001 = vld [vmem:[%s6 + $0x30] sm:$0xff]
        %v1002 = vld [vmem:[%s6 + $0x38] sm:$0xff]
        %1004 = vset.pattern.permute.xlu0 0
        %1005 = vperm.xlu0 %1004, %v995
        %v1006 = vpop.permute.xlu0 %1005
        %1009 = vset.pattern.permute.xlu0 0
        %1010 = vperm.xlu0 %1009, %v996
        %v1011 = vpop.permute.xlu0 %1010
        %1014 = vset.pattern.permute.xlu0 0
        %1015 = vperm.xlu0 %1014, %v997
        %v1016 = vpop.permute.xlu0 %1015
        %1019 = vset.pattern.permute.xlu0 0
        %1020 = vperm.xlu0 %1019, %v998
        %v1021 = vpop.permute.xlu0 %1020
        %1024 = vset.pattern.permute.xlu0 0
        %1025 = vperm.xlu0 %1024, %v999
        %v1026 = vpop.permute.xlu0 %1025
        %1029 = vset.pattern.permute.xlu0 0
        %1030 = vperm.xlu0 %1029, %v1000
        %v1031 = vpop.permute.xlu0 %1030
        %1034 = vset.pattern.permute.xlu0 0
        %1035 = vperm.xlu0 %1034, %v1001
        %v1036 = vpop.permute.xlu0 %1035
        %1039 = vset.pattern.permute.xlu0 0
        %1040 = vperm.xlu0 %1039, %v1002
        %v1041 = vpop.permute.xlu0 %1040
        %v1051 = vunpack.c.l.b16 %v979
        %v1052 = vunpack.c.l.b16 %v980
        %v1053 = vunpack.c.l.b16 %v981
        %v1054 = vunpack.c.l.b16 %v982
        %v1055 = vunpack.c.l.b16 %v983
        %v1056 = vunpack.c.l.b16 %v984
        %v1057 = vunpack.c.l.b16 %v985
        %v1058 = vunpack.c.l.b16 %v986
        %v1059 = vpack.c.b16 %v1052, %v1051
        %v1060 = vpack.c.b16 %v1054, %v1053
        %v1061 = vpack.c.b16 %v1056, %v1055
        %v1062 = vpack.c.b16 %v1058, %v1057
        %v1064 = vsel %vm877, %v1059, 0
        %v1067 = vsel %vm877, %v1060, 0
        %v1070 = vsel %vm877, %v1061, 0
        %v1073 = vsel %vm877, %v1062, 0
        %1075 = vmatprep.subr.bf16.mxu0 0
        %1076 = vmatpush1.bf16.msra.mxu0 0
        %1077 = vmatprep.subr.bf16.mxu0 0
        %1078 = vmatpush1.bf16.msra.mxu0 0
        %1079 = vmatprep.subr.bf16.mxu0 0
        %1080 = vmatpush1.bf16.msra.mxu0 0
        %1081 = vmatprep.subr.bf16.mxu0 0
        %1082 = vmatpush1.bf16.msra.mxu0 0
        %1083 = vmatprep.subr.bf16.mxu0 %v994
        %1084 = vmatpush1.bf16.msra.mxu0 %v993
        %1085 = vmatprep.subr.bf16.mxu0 %v992
        %1086 = vmatpush1.bf16.msra.mxu0 %v991
        %1087 = vmatprep.subr.bf16.mxu0 %v990
        %1088 = vmatpush1.bf16.msra.mxu0 %v989
        %1089 = vmatprep.subr.bf16.mxu0 %v988
        %1090 = vmatpush1.bf16.msra.mxu0 %v987
        %1091 = vmatprep.subr.bf16.mxu0 0
        %1092 = vmatpush2.bf16.msra.mxu0 0
        %1093 = vmatprep.subr.bf16.mxu0 0
        %1094 = vmatpush2.bf16.msra.mxu0 0
        %1095 = vmatprep.subr.bf16.mxu0 0
        %1096 = vmatpush2.bf16.msra.mxu0 0
        %1097 = vmatprep.subr.bf16.mxu0 0
        %1098 = vmatpush2.bf16.msra.mxu0 0
        %1099 = vmatprep.subr.bf16.mxu0 0
        %1100 = vmatpush2.bf16.msra.mxu0 0
        %1101 = vmatprep.subr.bf16.mxu0 0
        %1102 = vmatpush2.bf16.msra.mxu0 0
        %1103 = vmatprep.subr.bf16.mxu0 0
        %1104 = vmatpush2.bf16.msra.mxu0 0
        %1105 = vmatprep.subr.bf16.mxu0 0
        %1106 = vmatpush2.bf16.msra.mxu0 0
        %1107 = vmatprep.mubr.bf16.mxu0 0
        %1108 = vmatmul.mubr.bf16.gmra.mxu0 %v1064
        %v1109 = vpop.f32.mrf.mxu0
        %v1110 = vadd.f32 %v1006, %v1109
        %v1111 = vpop.f32.mrf.mxu0
        %v1112 = vadd.f32 %v1006, %v1111
        %v1113 = vpop.f32.mrf.mxu0
        %v1114 = vadd.f32 %v1011, %v1113
        %v1115 = vpop.f32.mrf.mxu0
        %v1116 = vadd.f32 %v1011, %v1115
        %1117 = vmatprep.mubr.bf16.mxu0 0
        %1118 = vmatmul.mubr.bf16.gmra.mxu0 %v1067
        %v1119 = vpop.f32.mrf.mxu0
        %v1120 = vadd.f32 %v1016, %v1119
        %v1121 = vpop.f32.mrf.mxu0
        %v1122 = vadd.f32 %v1016, %v1121
        %v1123 = vpop.f32.mrf.mxu0
        %v1124 = vadd.f32 %v1021, %v1123
        %v1125 = vpop.f32.mrf.mxu0
        %v1126 = vadd.f32 %v1021, %v1125
        %1127 = vmatprep.mubr.bf16.mxu0 0
        %1128 = vmatmul.mubr.bf16.gmra.mxu0 %v1070
        %v1129 = vpop.f32.mrf.mxu0
        %v1130 = vadd.f32 %v1026, %v1129
        %v1131 = vpop.f32.mrf.mxu0
        %v1132 = vadd.f32 %v1026, %v1131
        %v1133 = vpop.f32.mrf.mxu0
        %v1134 = vadd.f32 %v1031, %v1133
        %v1135 = vpop.f32.mrf.mxu0
        %v1136 = vadd.f32 %v1031, %v1135
        %1137 = vmatprep.mubr.bf16.mxu0 0
        %1138 = vmatmul.mubr.bf16.gmra.mxu0 %v1073
        %v1139 = vpop.f32.mrf.mxu0
        %v1140 = vadd.f32 %v1036, %v1139
        %v1141 = vpop.f32.mrf.mxu0
        %v1142 = vadd.f32 %v1036, %v1141
        %v1143 = vpop.f32.mrf.mxu0
        %v1144 = vadd.f32 %v1041, %v1143
        %v1145 = vpop.f32.mrf.mxu0
        %v1146 = vadd.f32 %v1041, %v1145
        %1147 = vdwg.mxu0
        %v1148 = vmax.f32 %v1110, 0.0
        %v1149 = vmax.f32 %v1112, 0.0
        %v1150 = vmax.f32 %v1114, 0.0
        %v1151 = vmax.f32 %v1116, 0.0
        %v1152 = vmax.f32 %v1120, 0.0
        %v1153 = vmax.f32 %v1122, 0.0
        %v1154 = vmax.f32 %v1124, 0.0
        %v1155 = vmax.f32 %v1126, 0.0
        %v1156 = vmax.f32 %v1130, 0.0
        %v1157 = vmax.f32 %v1132, 0.0
        %v1158 = vmax.f32 %v1134, 0.0
        %v1159 = vmax.f32 %v1136, 0.0
        %v1160 = vmax.f32 %v1140, 0.0
        %v1161 = vmax.f32 %v1142, 0.0
        %v1162 = vmax.f32 %v1144, 0.0
        %v1163 = vmax.f32 %v1146, 0.0
        %v1164 = vld [vmem:[%s7] sm:$0xf]
        %v1165 = vld [vmem:[%s7 + $0x4] sm:$0xf]
        %v1166 = vld [vmem:[%s7 + $0x8] sm:$0xf]
        %v1167 = vld [vmem:[%s7 + $0xc] sm:$0xf]
        %v1168 = vld [vmem:[%s7 + $0x10] sm:$0xf]
        %v1169 = vld [vmem:[%s7 + $0x14] sm:$0xf]
        %v1170 = vld [vmem:[%s7 + $0x18] sm:$0xf]
        %v1171 = vld [vmem:[%s7 + $0x1c] sm:$0xf]
        %v1172 = vld [vmem:[%s7 + $0x20] sm:$0xf]
        %v1173 = vld [vmem:[%s7 + $0x24] sm:$0xf]
        %v1174 = vld [vmem:[%s7 + $0x28] sm:$0xf]
        %v1175 = vld [vmem:[%s7 + $0x2c] sm:$0xf]
        %v1176 = vld [vmem:[%s7 + $0x30] sm:$0xf]
        %v1177 = vld [vmem:[%s7 + $0x34] sm:$0xf]
        %v1178 = vld [vmem:[%s7 + $0x38] sm:$0xf]
        %v1179 = vld [vmem:[%s7 + $0x3c] sm:$0xf]
        %v1180 = vpack.c.bf16 %v1150, %v1148
        %v1181 = vpack.c.bf16 %v1151, %v1149
        %v1182 = vpack.c.bf16 %v1154, %v1152
        %v1183 = vpack.c.bf16 %v1155, %v1153
        %v1184 = vpack.c.bf16 %v1158, %v1156
        %v1185 = vpack.c.bf16 %v1159, %v1157
        %v1186 = vpack.c.bf16 %v1162, %v1160
        %v1187 = vpack.c.bf16 %v1163, %v1161
        %v1188 = vld [vmem:[%s8] sm:$0xff]
        %v1189 = vld [vmem:[%s8 + $0x8] sm:$0xff]
        %v1190 = vld [vmem:[%s8 + $0x10] sm:$0xff]
        %v1191 = vld [vmem:[%s8 + $0x18] sm:$0xff]
        %v1192 = vld [vmem:[%s8 + $0x20] sm:$0xff]
        %v1193 = vld [vmem:[%s8 + $0x28] sm:$0xff]
        %v1194 = vld [vmem:[%s8 + $0x30] sm:$0xff]
        %v1195 = vld [vmem:[%s8 + $0x38] sm:$0xff]
        %v1196 = vld [vmem:[%s8 + $0x40] sm:$0xff]
        %v1197 = vld [vmem:[%s8 + $0x48] sm:$0xff]
        %v1198 = vld [vmem:[%s8 + $0x50] sm:$0xff]
        %v1199 = vld [vmem:[%s8 + $0x58] sm:$0xff]
        %v1200 = vld [vmem:[%s8 + $0x60] sm:$0xff]
        %v1201 = vld [vmem:[%s8 + $0x68] sm:$0xff]
        %v1202 = vld [vmem:[%s8 + $0x70] sm:$0xff]
        %v1203 = vld [vmem:[%s8 + $0x78] sm:$0xff]
        %1205 = vset.pattern.permute.xlu0 0
        %1206 = vperm.xlu0 %1205, %v1188
        %v1207 = vpop.permute.xlu0 %1206
        %1210 = vset.pattern.permute.xlu0 0
        %1211 = vperm.xlu0 %1210, %v1189
        %v1212 = vpop.permute.xlu0 %1211
        %1215 = vset.pattern.permute.xlu0 0
        %1216 = vperm.xlu0 %1215, %v1190
        %v1217 = vpop.permute.xlu0 %1216
        %1220 = vset.pattern.permute.xlu0 0
        %1221 = vperm.xlu0 %1220, %v1191
        %v1222 = vpop.permute.xlu0 %1221
        %1225 = vset.pattern.permute.xlu0 0
        %1226 = vperm.xlu0 %1225, %v1192
        %v1227 = vpop.permute.xlu0 %1226
        %1230 = vset.pattern.permute.xlu0 0
        %1231 = vperm.xlu0 %1230, %v1193
        %v1232 = vpop.permute.xlu0 %1231
        %1235 = vset.pattern.permute.xlu0 0
        %1236 = vperm.xlu0 %1235, %v1194
        %v1237 = vpop.permute.xlu0 %1236
        %1240 = vset.pattern.permute.xlu0 0
        %1241 = vperm.xlu0 %1240, %v1195
        %v1242 = vpop.permute.xlu0 %1241
        %1245 = vset.pattern.permute.xlu0 0
        %1246 = vperm.xlu0 %1245, %v1196
        %v1247 = vpop.permute.xlu0 %1246
        %1250 = vset.pattern.permute.xlu0 0
        %1251 = vperm.xlu0 %1250, %v1197
        %v1252 = vpop.permute.xlu0 %1251
        %1255 = vset.pattern.permute.xlu0 0
        %1256 = vperm.xlu0 %1255, %v1198
        %v1257 = vpop.permute.xlu0 %1256
        %1260 = vset.pattern.permute.xlu0 0
        %1261 = vperm.xlu0 %1260, %v1199
        %v1262 = vpop.permute.xlu0 %1261
        %1265 = vset.pattern.permute.xlu0 0
        %1266 = vperm.xlu0 %1265, %v1200
        %v1267 = vpop.permute.xlu0 %1266
        %1270 = vset.pattern.permute.xlu0 0
        %1271 = vperm.xlu0 %1270, %v1201
        %v1272 = vpop.permute.xlu0 %1271
        %1275 = vset.pattern.permute.xlu0 0
        %1276 = vperm.xlu0 %1275, %v1202
        %v1277 = vpop.permute.xlu0 %1276
        %1280 = vset.pattern.permute.xlu0 0
        %1281 = vperm.xlu0 %1280, %v1203
        %v1282 = vpop.permute.xlu0 %1281
        %v1300 = vunpack.c.l.b16 %v1164
        %v1301 = vunpack.c.l.b16 %v1165
        %v1302 = vunpack.c.l.b16 %v1166
        %v1303 = vunpack.c.l.b16 %v1167
        %v1304 = vunpack.c.l.b16 %v1168
        %v1305 = vunpack.c.l.b16 %v1169
        %v1306 = vunpack.c.l.b16 %v1170
        %v1307 = vunpack.c.l.b16 %v1171
        %v1308 = vunpack.c.l.b16 %v1172
        %v1309 = vunpack.c.l.b16 %v1173
        %v1310 = vunpack.c.l.b16 %v1174
        %v1311 = vunpack.c.l.b16 %v1175
        %v1312 = vunpack.c.l.b16 %v1176
        %v1313 = vunpack.c.l.b16 %v1177
        %v1314 = vunpack.c.l.b16 %v1178
        %v1315 = vunpack.c.l.b16 %v1179
        %v1316 = vpack.c.b16 %v1301, %v1300
        %v1317 = vpack.c.b16 %v1303, %v1302
        %v1318 = vpack.c.b16 %v1305, %v1304
        %v1319 = vpack.c.b16 %v1307, %v1306
        %v1320 = vpack.c.b16 %v1309, %v1308
        %v1321 = vpack.c.b16 %v1311, %v1310
        %v1322 = vpack.c.b16 %v1313, %v1312
        %v1323 = vpack.c.b16 %v1315, %v1314
        %v1325 = vsel %vm877, %v1316, 0
        %v1328 = vsel %vm877, %v1317, 0
        %v1331 = vsel %vm877, %v1318, 0
        %v1334 = vsel %vm877, %v1319, 0
        %v1337 = vsel %vm877, %v1320, 0
        %v1340 = vsel %vm877, %v1321, 0
        %v1343 = vsel %vm877, %v1322, 0
        %v1346 = vsel %vm877, %v1323, 0
        %1348 = vmatprep.subr.bf16.mxu0 0
        %1349 = vmatpush1.bf16.msra.mxu0 0
        %1350 = vmatprep.subr.bf16.mxu0 0
        %1351 = vmatpush1.bf16.msra.mxu0 0
        %1352 = vmatprep.subr.bf16.mxu0 0
        %1353 = vmatpush1.bf16.msra.mxu0 0
        %1354 = vmatprep.subr.bf16.mxu0 0
        %1355 = vmatpush1.bf16.msra.mxu0 0
        %1356 = vmatprep.subr.bf16.mxu0 %v1187
        %1357 = vmatpush1.bf16.msra.mxu0 %v1186
        %1358 = vmatprep.subr.bf16.mxu0 %v1185
        %1359 = vmatpush1.bf16.msra.mxu0 %v1184
        %1360 = vmatprep.subr.bf16.mxu0 %v1183
        %1361 = vmatpush1.bf16.msra.mxu0 %v1182
        %1362 = vmatprep.subr.bf16.mxu0 %v1181
        %1363 = vmatpush1.bf16.msra.mxu0 %v1180
        %1364 = vmatprep.subr.bf16.mxu0 0
        %1365 = vmatpush2.bf16.msra.mxu0 0
        %1366 = vmatprep.subr.bf16.mxu0 0
        %1367 = vmatpush2.bf16.msra.mxu0 0
        %1368 = vmatprep.subr.bf16.mxu0 0
        %1369 = vmatpush2.bf16.msra.mxu0 0
        %1370 = vmatprep.subr.bf16.mxu0 0
        %1371 = vmatpush2.bf16.msra.mxu0 0
        %1372 = vmatprep.subr.bf16.mxu0 0
        %1373 = vmatpush2.bf16.msra.mxu0 0
        %1374 = vmatprep.subr.bf16.mxu0 0
        %1375 = vmatpush2.bf16.msra.mxu0 0
        %1376 = vmatprep.subr.bf16.mxu0 0
        %1377 = vmatpush2.bf16.msra.mxu0 0
        %1378 = vmatprep.subr.bf16.mxu0 0
        %1379 = vmatpush2.bf16.msra.mxu0 0
        %1380 = vmatprep.mubr.bf16.mxu0 0
        %1381 = vmatmul.mubr.bf16.gmra.mxu0 %v1325
        %v1382 = vpop.f32.mrf.mxu0
        %v1383 = vadd.f32 %v1207, %v1382
        %v1384 = vpop.f32.mrf.mxu0
        %v1385 = vadd.f32 %v1207, %v1384
        %v1386 = vpop.f32.mrf.mxu0
        %v1387 = vadd.f32 %v1212, %v1386
        %v1388 = vpop.f32.mrf.mxu0
        %v1389 = vadd.f32 %v1212, %v1388
        %1390 = vmatprep.mubr.bf16.mxu0 0
        %1391 = vmatmul.mubr.bf16.gmra.mxu0 %v1328
        %v1392 = vpop.f32.mrf.mxu0
        %v1393 = vadd.f32 %v1217, %v1392
        %v1394 = vpop.f32.mrf.mxu0
        %v1395 = vadd.f32 %v1217, %v1394
        %v1396 = vpop.f32.mrf.mxu0
        %v1397 = vadd.f32 %v1222, %v1396
        %v1398 = vpop.f32.mrf.mxu0
        %v1399 = vadd.f32 %v1222, %v1398
        %1400 = vmatprep.mubr.bf16.mxu0 0
        %1401 = vmatmul.mubr.bf16.gmra.mxu0 %v1331
        %v1402 = vpop.f32.mrf.mxu0
        %v1403 = vadd.f32 %v1227, %v1402
        %v1404 = vpop.f32.mrf.mxu0
        %v1405 = vadd.f32 %v1227, %v1404
        %v1406 = vpop.f32.mrf.mxu0
        %v1407 = vadd.f32 %v1232, %v1406
        %v1408 = vpop.f32.mrf.mxu0
        %v1409 = vadd.f32 %v1232, %v1408
        %1410 = vmatprep.mubr.bf16.mxu0 0
        %1411 = vmatmul.mubr.bf16.gmra.mxu0 %v1334
        %v1412 = vpop.f32.mrf.mxu0
        %v1413 = vadd.f32 %v1237, %v1412
        %v1414 = vpop.f32.mrf.mxu0
        %v1415 = vadd.f32 %v1237, %v1414
        %v1416 = vpop.f32.mrf.mxu0
        %v1417 = vadd.f32 %v1242, %v1416
        %v1418 = vpop.f32.mrf.mxu0
        %v1419 = vadd.f32 %v1242, %v1418
        %1420 = vmatprep.mubr.bf16.mxu0 0
        %1421 = vmatmul.mubr.bf16.gmra.mxu0 %v1337
        %v1422 = vpop.f32.mrf.mxu0
        %v1423 = vadd.f32 %v1247, %v1422
        %v1424 = vpop.f32.mrf.mxu0
        %v1425 = vadd.f32 %v1247, %v1424
        %v1426 = vpop.f32.mrf.mxu0
        %v1427 = vadd.f32 %v1252, %v1426
        %v1428 = vpop.f32.mrf.mxu0
        %v1429 = vadd.f32 %v1252, %v1428
        %1430 = vmatprep.mubr.bf16.mxu0 0
        %1431 = vmatmul.mubr.bf16.gmra.mxu0 %v1340
        %v1432 = vpop.f32.mrf.mxu0
        %v1433 = vadd.f32 %v1257, %v1432
        %v1434 = vpop.f32.mrf.mxu0
        %v1435 = vadd.f32 %v1257, %v1434
        %v1436 = vpop.f32.mrf.mxu0
        %v1437 = vadd.f32 %v1262, %v1436
        %v1438 = vpop.f32.mrf.mxu0
        %v1439 = vadd.f32 %v1262, %v1438
        %1440 = vmatprep.mubr.bf16.mxu0 0
        %1441 = vmatmul.mubr.bf16.gmra.mxu0 %v1343
        %v1442 = vpop.f32.mrf.mxu0
        %v1443 = vadd.f32 %v1267, %v1442
        %v1444 = vpop.f32.mrf.mxu0
        %v1445 = vadd.f32 %v1267, %v1444
        %v1446 = vpop.f32.mrf.mxu0
        %v1447 = vadd.f32 %v1272, %v1446
        %v1448 = vpop.f32.mrf.mxu0
        %v1449 = vadd.f32 %v1272, %v1448
        %1450 = vmatprep.mubr.bf16.mxu0 0
        %1451 = vmatmul.mubr.bf16.gmra.mxu0 %v1346
        %v1452 = vpop.f32.mrf.mxu0
        %v1453 = vadd.f32 %v1277, %v1452
        %v1454 = vpop.f32.mrf.mxu0
        %v1455 = vadd.f32 %v1277, %v1454
        %v1456 = vpop.f32.mrf.mxu0
        %v1457 = vadd.f32 %v1282, %v1456
        %v1458 = vpop.f32.mrf.mxu0
        %v1459 = vadd.f32 %v1282, %v1458
        %1460 = vdwg.mxu0
        %v1461 = vmax.f32 %v1383, 0.0
        %v1462 = vmax.f32 %v1385, 0.0
        %v1463 = vmax.f32 %v1387, 0.0
        %v1464 = vmax.f32 %v1389, 0.0
        %v1465 = vmax.f32 %v1393, 0.0
        %v1466 = vmax.f32 %v1395, 0.0
        %v1467 = vmax.f32 %v1397, 0.0
        %v1468 = vmax.f32 %v1399, 0.0
        %v1469 = vmax.f32 %v1403, 0.0
        %v1470 = vmax.f32 %v1405, 0.0
        %v1471 = vmax.f32 %v1407, 0.0
        %v1472 = vmax.f32 %v1409, 0.0
        %v1473 = vmax.f32 %v1413, 0.0
        %v1474 = vmax.f32 %v1415, 0.0
        %v1475 = vmax.f32 %v1417, 0.0
        %v1476 = vmax.f32 %v1419, 0.0
        %v1477 = vmax.f32 %v1423, 0.0
        %v1478 = vmax.f32 %v1425, 0.0
        %v1479 = vmax.f32 %v1427, 0.0
        %v1480 = vmax.f32 %v1429, 0.0
        %v1481 = vmax.f32 %v1433, 0.0
        %v1482 = vmax.f32 %v1435, 0.0
        %v1483 = vmax.f32 %v1437, 0.0
        %v1484 = vmax.f32 %v1439, 0.0
        %v1485 = vmax.f32 %v1443, 0.0
        %v1486 = vmax.f32 %v1445, 0.0
        %v1487 = vmax.f32 %v1447, 0.0
        %v1488 = vmax.f32 %v1449, 0.0
        %v1489 = vmax.f32 %v1453, 0.0
        %v1490 = vmax.f32 %v1455, 0.0
        %v1491 = vmax.f32 %v1457, 0.0
        %v1492 = vmax.f32 %v1459, 0.0
        %v1493 = vld [vmem:[%s9] sm:$0xf]
        %v1494 = vld [vmem:[%s9 + $0x4] sm:$0xf]
        %v1495 = vld [vmem:[%s9 + $0x8] sm:$0xf]
        %v1496 = vld [vmem:[%s9 + $0xc] sm:$0xf]
        %v1497 = vld [vmem:[%s9 + $0x10] sm:$0xf]
        %v1498 = vld [vmem:[%s9 + $0x14] sm:$0xf]
        %v1499 = vld [vmem:[%s9 + $0x18] sm:$0xf]
        %v1500 = vld [vmem:[%s9 + $0x1c] sm:$0xf]
        %v1501 = vld [vmem:[%s9 + $0x20] sm:$0xf]
        %v1502 = vld [vmem:[%s9 + $0x24] sm:$0xf]
        %v1503 = vld [vmem:[%s9 + $0x28] sm:$0xf]
        %v1504 = vld [vmem:[%s9 + $0x2c] sm:$0xf]
        %v1505 = vld [vmem:[%s9 + $0x30] sm:$0xf]
        %v1506 = vld [vmem:[%s9 + $0x34] sm:$0xf]
        %v1507 = vld [vmem:[%s9 + $0x38] sm:$0xf]
        %v1508 = vld [vmem:[%s9 + $0x3c] sm:$0xf]
        %v1509 = vld [vmem:[%s9 + $0x40] sm:$0xf]
        %v1510 = vld [vmem:[%s9 + $0x44] sm:$0xf]
        %v1511 = vld [vmem:[%s9 + $0x48] sm:$0xf]
        %v1512 = vld [vmem:[%s9 + $0x4c] sm:$0xf]
        %v1513 = vld [vmem:[%s9 + $0x50] sm:$0xf]
        %v1514 = vld [vmem:[%s9 + $0x54] sm:$0xf]
        %v1515 = vld [vmem:[%s9 + $0x58] sm:$0xf]
        %v1516 = vld [vmem:[%s9 + $0x5c] sm:$0xf]
        %v1517 = vld [vmem:[%s9 + $0x60] sm:$0xf]
        %v1518 = vld [vmem:[%s9 + $0x64] sm:$0xf]
        %v1519 = vld [vmem:[%s9 + $0x68] sm:$0xf]
        %v1520 = vld [vmem:[%s9 + $0x6c] sm:$0xf]
        %v1521 = vld [vmem:[%s9 + $0x70] sm:$0xf]
        %v1522 = vld [vmem:[%s9 + $0x74] sm:$0xf]
        %v1523 = vld [vmem:[%s9 + $0x78] sm:$0xf]
        %v1524 = vld [vmem:[%s9 + $0x7c] sm:$0xf]
        %v1525 = vld [vmem:[%s9 + $0x80] sm:$0xf]
        %v1526 = vld [vmem:[%s9 + $0x84] sm:$0xf]
        %v1527 = vld [vmem:[%s9 + $0x88] sm:$0xf]
        %v1528 = vld [vmem:[%s9 + $0x8c] sm:$0xf]
        %v1529 = vld [vmem:[%s9 + $0x90] sm:$0xf]
        %v1530 = vld [vmem:[%s9 + $0x94] sm:$0xf]
        %v1531 = vld [vmem:[%s9 + $0x98] sm:$0xf]
        %v1532 = vld [vmem:[%s9 + $0x9c] sm:$0xf]
        %v1533 = vld [vmem:[%s9 + $0xa0] sm:$0xf]
        %v1534 = vld [vmem:[%s9 + $0xa4] sm:$0xf]
        %v1535 = vld [vmem:[%s9 + $0xa8] sm:$0xf]
        %v1536 = vld [vmem:[%s9 + $0xac] sm:$0xf]
        %v1537 = vld [vmem:[%s9 + $0xb0] sm:$0xf]
        %v1538 = vld [vmem:[%s9 + $0xb4] sm:$0xf]
        %v1539 = vld [vmem:[%s9 + $0xb8] sm:$0xf]
        %v1540 = vld [vmem:[%s9 + $0xbc] sm:$0xf]
        %v1541 = vld [vmem:[%s9 + $0xc0] sm:$0xf]
        %v1542 = vld [vmem:[%s9 + $0xc4] sm:$0xf]
        %v1543 = vld [vmem:[%s9 + $0xc8] sm:$0xf]
        %v1544 = vld [vmem:[%s9 + $0xcc] sm:$0xf]
        %v1545 = vld [vmem:[%s9 + $0xd0] sm:$0xf]
        %v1546 = vld [vmem:[%s9 + $0xd4] sm:$0xf]
        %v1547 = vld [vmem:[%s9 + $0xd8] sm:$0xf]
        %v1548 = vld [vmem:[%s9 + $0xdc] sm:$0xf]
        %v1549 = vld [vmem:[%s9 + $0xe0] sm:$0xf]
        %v1550 = vld [vmem:[%s9 + $0xe4] sm:$0xf]
        %v1551 = vld [vmem:[%s9 + $0xe8] sm:$0xf]
        %v1552 = vld [vmem:[%s9 + $0xec] sm:$0xf]
        %v1553 = vld [vmem:[%s9 + $0xf0] sm:$0xf]
        %v1554 = vld [vmem:[%s9 + $0xf4] sm:$0xf]
        %v1555 = vld [vmem:[%s9 + $0xf8] sm:$0xf]
        %v1556 = vld [vmem:[%s9 + $0xfc] sm:$0xf]
        %v1557 = vld [vmem:[%s9 + $0x100] sm:$0xf]
        %v1558 = vld [vmem:[%s9 + $0x104] sm:$0xf]
        %v1559 = vld [vmem:[%s9 + $0x108] sm:$0xf]
        %v1560 = vld [vmem:[%s9 + $0x10c] sm:$0xf]
        %v1561 = vld [vmem:[%s9 + $0x110] sm:$0xf]
        %v1562 = vld [vmem:[%s9 + $0x114] sm:$0xf]
        %v1563 = vld [vmem:[%s9 + $0x118] sm:$0xf]
        %v1564 = vld [vmem:[%s9 + $0x11c] sm:$0xf]
        %v1565 = vld [vmem:[%s9 + $0x120] sm:$0xf]
        %v1566 = vld [vmem:[%s9 + $0x124] sm:$0xf]
        %v1567 = vld [vmem:[%s9 + $0x128] sm:$0xf]
        %v1568 = vld [vmem:[%s9 + $0x12c] sm:$0xf]
        %v1569 = vld [vmem:[%s9 + $0x130] sm:$0xf]
        %v1570 = vld [vmem:[%s9 + $0x134] sm:$0xf]
        %v1571 = vld [vmem:[%s9 + $0x138] sm:$0xf]
        %v1572 = vld [vmem:[%s9 + $0x13c] sm:$0xf]
        %v1573 = vld [vmem:[%s9 + $0x140] sm:$0xf]
        %v1574 = vld [vmem:[%s9 + $0x144] sm:$0xf]
        %v1575 = vld [vmem:[%s9 + $0x148] sm:$0xf]
        %v1576 = vld [vmem:[%s9 + $0x14c] sm:$0xf]
        %v1577 = vld [vmem:[%s9 + $0x150] sm:$0xf]
        %v1578 = vld [vmem:[%s9 + $0x154] sm:$0xf]
        %v1579 = vld [vmem:[%s9 + $0x158] sm:$0xf]
        %v1580 = vld [vmem:[%s9 + $0x15c] sm:$0xf]
        %v1581 = vld [vmem:[%s9 + $0x160] sm:$0xf]
        %v1582 = vld [vmem:[%s9 + $0x164] sm:$0xf]
        %v1583 = vld [vmem:[%s9 + $0x168] sm:$0xf]
        %v1584 = vld [vmem:[%s9 + $0x16c] sm:$0xf]
        %v1585 = vld [vmem:[%s9 + $0x170] sm:$0xf]
        %v1586 = vld [vmem:[%s9 + $0x174] sm:$0xf]
        %v1587 = vld [vmem:[%s9 + $0x178] sm:$0xf]
        %v1588 = vld [vmem:[%s9 + $0x17c] sm:$0xf]
        %v1589 = vld [vmem:[%s9 + $0x180] sm:$0xf]
        %v1590 = vld [vmem:[%s9 + $0x184] sm:$0xf]
        %v1591 = vld [vmem:[%s9 + $0x188] sm:$0xf]
        %v1592 = vld [vmem:[%s9 + $0x18c] sm:$0xf]
        %v1593 = vld [vmem:[%s9 + $0x190] sm:$0xf]
        %v1594 = vld [vmem:[%s9 + $0x194] sm:$0xf]
        %v1595 = vld [vmem:[%s9 + $0x198] sm:$0xf]
        %v1596 = vld [vmem:[%s9 + $0x19c] sm:$0xf]
        %v1597 = vld [vmem:[%s9 + $0x1a0] sm:$0xf]
        %v1598 = vld [vmem:[%s9 + $0x1a4] sm:$0xf]
        %v1599 = vld [vmem:[%s9 + $0x1a8] sm:$0xf]
        %v1600 = vld [vmem:[%s9 + $0x1ac] sm:$0xf]
        %v1601 = vld [vmem:[%s9 + $0x1b0] sm:$0xf]
        %v1602 = vld [vmem:[%s9 + $0x1b4] sm:$0xf]
        %v1603 = vld [vmem:[%s9 + $0x1b8] sm:$0xf]
        %v1604 = vld [vmem:[%s9 + $0x1bc] sm:$0xf]
        %v1605 = vld [vmem:[%s9 + $0x1c0] sm:$0xf]
        %v1606 = vld [vmem:[%s9 + $0x1c4] sm:$0xf]
        %v1607 = vld [vmem:[%s9 + $0x1c8] sm:$0xf]
        %v1608 = vld [vmem:[%s9 + $0x1cc] sm:$0xf]
        %v1609 = vld [vmem:[%s9 + $0x1d0] sm:$0xf]
        %v1610 = vld [vmem:[%s9 + $0x1d4] sm:$0xf]
        %v1611 = vld [vmem:[%s9 + $0x1d8] sm:$0xf]
        %v1612 = vld [vmem:[%s9 + $0x1dc] sm:$0xf]
        %v1613 = vld [vmem:[%s9 + $0x1e0] sm:$0xf]
        %v1614 = vld [vmem:[%s9 + $0x1e4] sm:$0xf]
        %v1615 = vld [vmem:[%s9 + $0x1e8] sm:$0xf]
        %v1616 = vld [vmem:[%s9 + $0x1ec] sm:$0xf]
        %v1617 = vld [vmem:[%s9 + $0x1f0] sm:$0xf]
        %v1618 = vld [vmem:[%s9 + $0x1f4] sm:$0xf]
        %v1619 = vld [vmem:[%s9 + $0x1f8] sm:$0xf]
        %v1620 = vld [vmem:[%s9 + $0x1fc] sm:$0xf]
        %v1621 = vpack.c.bf16 %v1463, %v1461
        %v1622 = vpack.c.bf16 %v1464, %v1462
        %v1623 = vpack.c.bf16 %v1467, %v1465
        %v1624 = vpack.c.bf16 %v1468, %v1466
        %v1625 = vpack.c.bf16 %v1471, %v1469
        %v1626 = vpack.c.bf16 %v1472, %v1470
        %v1627 = vpack.c.bf16 %v1475, %v1473
        %v1628 = vpack.c.bf16 %v1476, %v1474
        %v1629 = vpack.c.bf16 %v1479, %v1477
        %v1630 = vpack.c.bf16 %v1480, %v1478
        %v1631 = vpack.c.bf16 %v1483, %v1481
        %v1632 = vpack.c.bf16 %v1484, %v1482
        %v1633 = vpack.c.bf16 %v1487, %v1485
        %v1634 = vpack.c.bf16 %v1488, %v1486
        %v1635 = vpack.c.bf16 %v1491, %v1489
        %v1636 = vpack.c.bf16 %v1492, %v1490
        %v1637 = vld [vmem:[%s10] sm:$0xff]
        %v1638 = vld [vmem:[%s10 + $0x8] sm:$0xff]
        %v1639 = vld [vmem:[%s10 + $0x10] sm:$0xff]
        %v1640 = vld [vmem:[%s10 + $0x18] sm:$0xff]
        %v1641 = vld [vmem:[%s10 + $0x20] sm:$0xff]
        %v1642 = vld [vmem:[%s10 + $0x28] sm:$0xff]
        %v1643 = vld [vmem:[%s10 + $0x30] sm:$0xff]
        %v1644 = vld [vmem:[%s10 + $0x38] sm:$0xff]
        %v1645 = vld [vmem:[%s10 + $0x40] sm:$0xff]
        %v1646 = vld [vmem:[%s10 + $0x48] sm:$0xff]
        %v1647 = vld [vmem:[%s10 + $0x50] sm:$0xff]
        %v1648 = vld [vmem:[%s10 + $0x58] sm:$0xff]
        %v1649 = vld [vmem:[%s10 + $0x60] sm:$0xff]
        %v1650 = vld [vmem:[%s10 + $0x68] sm:$0xff]
        %v1651 = vld [vmem:[%s10 + $0x70] sm:$0xff]
        %v1652 = vld [vmem:[%s10 + $0x78] sm:$0xff]
        %v1653 = vld [vmem:[%s10 + $0x80] sm:$0xff]
        %v1654 = vld [vmem:[%s10 + $0x88] sm:$0xff]
        %v1655 = vld [vmem:[%s10 + $0x90] sm:$0xff]
        %v1656 = vld [vmem:[%s10 + $0x98] sm:$0xff]
        %v1657 = vld [vmem:[%s10 + $0xa0] sm:$0xff]
        %v1658 = vld [vmem:[%s10 + $0xa8] sm:$0xff]
        %v1659 = vld [vmem:[%s10 + $0xb0] sm:$0xff]
        %v1660 = vld [vmem:[%s10 + $0xb8] sm:$0xff]
        %v1661 = vld [vmem:[%s10 + $0xc0] sm:$0xff]
        %v1662 = vld [vmem:[%s10 + $0xc8] sm:$0xff]
        %v1663 = vld [vmem:[%s10 + $0xd0] sm:$0xff]
        %v1664 = vld [vmem:[%s10 + $0xd8] sm:$0xff]
        %v1665 = vld [vmem:[%s10 + $0xe0] sm:$0xff]
        %v1666 = vld [vmem:[%s10 + $0xe8] sm:$0xff]
        %v1667 = vld [vmem:[%s10 + $0xf0] sm:$0xff]
        %v1668 = vld [vmem:[%s10 + $0xf8] sm:$0xff]
        %v1669 = vld [vmem:[%s10 + $0x100] sm:$0xff]
        %v1670 = vld [vmem:[%s10 + $0x108] sm:$0xff]
        %v1671 = vld [vmem:[%s10 + $0x110] sm:$0xff]
        %v1672 = vld [vmem:[%s10 + $0x118] sm:$0xff]
        %v1673 = vld [vmem:[%s10 + $0x120] sm:$0xff]
        %v1674 = vld [vmem:[%s10 + $0x128] sm:$0xff]
        %v1675 = vld [vmem:[%s10 + $0x130] sm:$0xff]
        %v1676 = vld [vmem:[%s10 + $0x138] sm:$0xff]
        %v1677 = vld [vmem:[%s10 + $0x140] sm:$0xff]
        %v1678 = vld [vmem:[%s10 + $0x148] sm:$0xff]
        %v1679 = vld [vmem:[%s10 + $0x150] sm:$0xff]
        %v1680 = vld [vmem:[%s10 + $0x158] sm:$0xff]
        %v1681 = vld [vmem:[%s10 + $0x160] sm:$0xff]
        %v1682 = vld [vmem:[%s10 + $0x168] sm:$0xff]
        %v1683 = vld [vmem:[%s10 + $0x170] sm:$0xff]
        %v1684 = vld [vmem:[%s10 + $0x178] sm:$0xff]
        %v1685 = vld [vmem:[%s10 + $0x180] sm:$0xff]
        %v1686 = vld [vmem:[%s10 + $0x188] sm:$0xff]
        %v1687 = vld [vmem:[%s10 + $0x190] sm:$0xff]
        %v1688 = vld [vmem:[%s10 + $0x198] sm:$0xff]
        %v1689 = vld [vmem:[%s10 + $0x1a0] sm:$0xff]
        %v1690 = vld [vmem:[%s10 + $0x1a8] sm:$0xff]
        %v1691 = vld [vmem:[%s10 + $0x1b0] sm:$0xff]
        %v1692 = vld [vmem:[%s10 + $0x1b8] sm:$0xff]
        %v1693 = vld [vmem:[%s10 + $0x1c0] sm:$0xff]
        %v1694 = vld [vmem:[%s10 + $0x1c8] sm:$0xff]
        %v1695 = vld [vmem:[%s10 + $0x1d0] sm:$0xff]
        %v1696 = vld [vmem:[%s10 + $0x1d8] sm:$0xff]
        %v1697 = vld [vmem:[%s10 + $0x1e0] sm:$0xff]
        %v1698 = vld [vmem:[%s10 + $0x1e8] sm:$0xff]
        %v1699 = vld [vmem:[%s10 + $0x1f0] sm:$0xff]
        %v1700 = vld [vmem:[%s10 + $0x1f8] sm:$0xff]
        %v1701 = vld [vmem:[%s10 + $0x200] sm:$0xff]
        %v1702 = vld [vmem:[%s10 + $0x208] sm:$0xff]
        %v1703 = vld [vmem:[%s10 + $0x210] sm:$0xff]
        %v1704 = vld [vmem:[%s10 + $0x218] sm:$0xff]
        %v1705 = vld [vmem:[%s10 + $0x220] sm:$0xff]
        %v1706 = vld [vmem:[%s10 + $0x228] sm:$0xff]
        %v1707 = vld [vmem:[%s10 + $0x230] sm:$0xff]
        %v1708 = vld [vmem:[%s10 + $0x238] sm:$0xff]
        %v1709 = vld [vmem:[%s10 + $0x240] sm:$0xff]
        %v1710 = vld [vmem:[%s10 + $0x248] sm:$0xff]
        %v1711 = vld [vmem:[%s10 + $0x250] sm:$0xff]
        %v1712 = vld [vmem:[%s10 + $0x258] sm:$0xff]
        %v1713 = vld [vmem:[%s10 + $0x260] sm:$0xff]
        %v1714 = vld [vmem:[%s10 + $0x268] sm:$0xff]
        %v1715 = vld [vmem:[%s10 + $0x270] sm:$0xff]
        %v1716 = vld [vmem:[%s10 + $0x278] sm:$0xff]
        %v1717 = vld [vmem:[%s10 + $0x280] sm:$0xff]
        %v1718 = vld [vmem:[%s10 + $0x288] sm:$0xff]
        %v1719 = vld [vmem:[%s10 + $0x290] sm:$0xff]
        %v1720 = vld [vmem:[%s10 + $0x298] sm:$0xff]
        %v1721 = vld [vmem:[%s10 + $0x2a0] sm:$0xff]
        %v1722 = vld [vmem:[%s10 + $0x2a8] sm:$0xff]
        %v1723 = vld [vmem:[%s10 + $0x2b0] sm:$0xff]
        %v1724 = vld [vmem:[%s10 + $0x2b8] sm:$0xff]
        %v1725 = vld [vmem:[%s10 + $0x2c0] sm:$0xff]
        %v1726 = vld [vmem:[%s10 + $0x2c8] sm:$0xff]
        %v1727 = vld [vmem:[%s10 + $0x2d0] sm:$0xff]
        %v1728 = vld [vmem:[%s10 + $0x2d8] sm:$0xff]
        %v1729 = vld [vmem:[%s10 + $0x2e0] sm:$0xff]
        %v1730 = vld [vmem:[%s10 + $0x2e8] sm:$0xff]
        %v1731 = vld [vmem:[%s10 + $0x2f0] sm:$0xff]
        %v1732 = vld [vmem:[%s10 + $0x2f8] sm:$0xff]
        %v1733 = vld [vmem:[%s10 + $0x300] sm:$0xff]
        %v1734 = vld [vmem:[%s10 + $0x308] sm:$0xff]
        %v1735 = vld [vmem:[%s10 + $0x310] sm:$0xff]
        %v1736 = vld [vmem:[%s10 + $0x318] sm:$0xff]
        %v1737 = vld [vmem:[%s10 + $0x320] sm:$0xff]
        %v1738 = vld [vmem:[%s10 + $0x328] sm:$0xff]
        %v1739 = vld [vmem:[%s10 + $0x330] sm:$0xff]
        %v1740 = vld [vmem:[%s10 + $0x338] sm:$0xff]
        %v1741 = vld [vmem:[%s10 + $0x340] sm:$0xff]
        %v1742 = vld [vmem:[%s10 + $0x348] sm:$0xff]
        %v1743 = vld [vmem:[%s10 + $0x350] sm:$0xff]
        %v1744 = vld [vmem:[%s10 + $0x358] sm:$0xff]
        %v1745 = vld [vmem:[%s10 + $0x360] sm:$0xff]
        %v1746 = vld [vmem:[%s10 + $0x368] sm:$0xff]
        %v1747 = vld [vmem:[%s10 + $0x370] sm:$0xff]
        %v1748 = vld [vmem:[%s10 + $0x378] sm:$0xff]
        %v1749 = vld [vmem:[%s10 + $0x380] sm:$0xff]
        %v1750 = vld [vmem:[%s10 + $0x388] sm:$0xff]
        %v1751 = vld [vmem:[%s10 + $0x390] sm:$0xff]
        %v1752 = vld [vmem:[%s10 + $0x398] sm:$0xff]
        %v1753 = vld [vmem:[%s10 + $0x3a0] sm:$0xff]
        %v1754 = vld [vmem:[%s10 + $0x3a8] sm:$0xff]
        %v1755 = vld [vmem:[%s10 + $0x3b0] sm:$0xff]
        %v1756 = vld [vmem:[%s10 + $0x3b8] sm:$0xff]
        %v1757 = vld [vmem:[%s10 + $0x3c0] sm:$0xff]
        %v1758 = vld [vmem:[%s10 + $0x3c8] sm:$0xff]
        %v1759 = vld [vmem:[%s10 + $0x3d0] sm:$0xff]
        %v1760 = vld [vmem:[%s10 + $0x3d8] sm:$0xff]
        %v1761 = vld [vmem:[%s10 + $0x3e0] sm:$0xff]
        %v1762 = vld [vmem:[%s10 + $0x3e8] sm:$0xff]
        %v1763 = vld [vmem:[%s10 + $0x3f0] sm:$0xff]
        %v1764 = vld [vmem:[%s10 + $0x3f8] sm:$0xff]
        %1766 = vset.pattern.permute.xlu0 0
        %1767 = vperm.xlu0 %1766, %v1637
        %v1768 = vpop.permute.xlu0 %1767
        %1771 = vset.pattern.permute.xlu0 0
        %1772 = vperm.xlu0 %1771, %v1638
        %v1773 = vpop.permute.xlu0 %1772
        %1776 = vset.pattern.permute.xlu0 0
        %1777 = vperm.xlu0 %1776, %v1639
        %v1778 = vpop.permute.xlu0 %1777
        %1781 = vset.pattern.permute.xlu0 0
        %1782 = vperm.xlu0 %1781, %v1640
        %v1783 = vpop.permute.xlu0 %1782
        %1786 = vset.pattern.permute.xlu0 0
        %1787 = vperm.xlu0 %1786, %v1641
        %v1788 = vpop.permute.xlu0 %1787
        %1791 = vset.pattern.permute.xlu0 0
        %1792 = vperm.xlu0 %1791, %v1642
        %v1793 = vpop.permute.xlu0 %1792
        %1796 = vset.pattern.permute.xlu0 0
        %1797 = vperm.xlu0 %1796, %v1643
        %v1798 = vpop.permute.xlu0 %1797
        %1801 = vset.pattern.permute.xlu0 0
        %1802 = vperm.xlu0 %1801, %v1644
        %v1803 = vpop.permute.xlu0 %1802
        %1806 = vset.pattern.permute.xlu0 0
        %1807 = vperm.xlu0 %1806, %v1645
        %v1808 = vpop.permute.xlu0 %1807
        %1811 = vset.pattern.permute.xlu0 0
        %1812 = vperm.xlu0 %1811, %v1646
        %v1813 = vpop.permute.xlu0 %1812
        %1816 = vset.pattern.permute.xlu0 0
        %1817 = vperm.xlu0 %1816, %v1647
        %v1818 = vpop.permute.xlu0 %1817
        %1821 = vset.pattern.permute.xlu0 0
        %1822 = vperm.xlu0 %1821, %v1648
        %v1823 = vpop.permute.xlu0 %1822
        %1826 = vset.pattern.permute.xlu0 0
        %1827 = vperm.xlu0 %1826, %v1649
        %v1828 = vpop.permute.xlu0 %1827
        %1831 = vset.pattern.permute.xlu0 0
        %1832 = vperm.xlu0 %1831, %v1650
        %v1833 = vpop.permute.xlu0 %1832
        %1836 = vset.pattern.permute.xlu0 0
        %1837 = vperm.xlu0 %1836, %v1651
        %v1838 = vpop.permute.xlu0 %1837
        %1841 = vset.pattern.permute.xlu0 0
        %1842 = vperm.xlu0 %1841, %v1652
        %v1843 = vpop.permute.xlu0 %1842
        %1846 = vset.pattern.permute.xlu0 0
        %1847 = vperm.xlu0 %1846, %v1653
        %v1848 = vpop.permute.xlu0 %1847
        %1851 = vset.pattern.permute.xlu0 0
        %1852 = vperm.xlu0 %1851, %v1654
        %v1853 = vpop.permute.xlu0 %1852
        %1856 = vset.pattern.permute.xlu0 0
        %1857 = vperm.xlu0 %1856, %v1655
        %v1858 = vpop.permute.xlu0 %1857
        %1861 = vset.pattern.permute.xlu0 0
        %1862 = vperm.xlu0 %1861, %v1656
        %v1863 = vpop.permute.xlu0 %1862
        %1866 = vset.pattern.permute.xlu0 0
        %1867 = vperm.xlu0 %1866, %v1657
        %v1868 = vpop.permute.xlu0 %1867
        %1871 = vset.pattern.permute.xlu0 0
        %1872 = vperm.xlu0 %1871, %v1658
        %v1873 = vpop.permute.xlu0 %1872
        %1876 = vset.pattern.permute.xlu0 0
        %1877 = vperm.xlu0 %1876, %v1659
        %v1878 = vpop.permute.xlu0 %1877
        %1881 = vset.pattern.permute.xlu0 0
        %1882 = vperm.xlu0 %1881, %v1660
        %v1883 = vpop.permute.xlu0 %1882
        %1886 = vset.pattern.permute.xlu0 0
        %1887 = vperm.xlu0 %1886, %v1661
        %v1888 = vpop.permute.xlu0 %1887
        %1891 = vset.pattern.permute.xlu0 0
        %1892 = vperm.xlu0 %1891, %v1662
        %v1893 = vpop.permute.xlu0 %1892
        %1896 = vset.pattern.permute.xlu0 0
        %1897 = vperm.xlu0 %1896, %v1663
        %v1898 = vpop.permute.xlu0 %1897
        %1901 = vset.pattern.permute.xlu0 0
        %1902 = vperm.xlu0 %1901, %v1664
        %v1903 = vpop.permute.xlu0 %1902
        %1906 = vset.pattern.permute.xlu0 0
        %1907 = vperm.xlu0 %1906, %v1665
        %v1908 = vpop.permute.xlu0 %1907
        %1911 = vset.pattern.permute.xlu0 0
        %1912 = vperm.xlu0 %1911, %v1666
        %v1913 = vpop.permute.xlu0 %1912
        %1916 = vset.pattern.permute.xlu0 0
        %1917 = vperm.xlu0 %1916, %v1667
        %v1918 = vpop.permute.xlu0 %1917
        %1921 = vset.pattern.permute.xlu0 0
        %1922 = vperm.xlu0 %1921, %v1668
        %v1923 = vpop.permute.xlu0 %1922
        %1926 = vset.pattern.permute.xlu0 0
        %1927 = vperm.xlu0 %1926, %v1669
        %v1928 = vpop.permute.xlu0 %1927
        %1931 = vset.pattern.permute.xlu0 0
        %1932 = vperm.xlu0 %1931, %v1670
        %v1933 = vpop.permute.xlu0 %1932
        %1936 = vset.pattern.permute.xlu0 0
        %1937 = vperm.xlu0 %1936, %v1671
        %v1938 = vpop.permute.xlu0 %1937
        %1941 = vset.pattern.permute.xlu0 0
        %1942 = vperm.xlu0 %1941, %v1672
        %v1943 = vpop.permute.xlu0 %1942
        %1946 = vset.pattern.permute.xlu0 0
        %1947 = vperm.xlu0 %1946, %v1673
        %v1948 = vpop.permute.xlu0 %1947
        %1951 = vset.pattern.permute.xlu0 0
        %1952 = vperm.xlu0 %1951, %v1674
        %v1953 = vpop.permute.xlu0 %1952
        %1956 = vset.pattern.permute.xlu0 0
        %1957 = vperm.xlu0 %1956, %v1675
        %v1958 = vpop.permute.xlu0 %1957
        %1961 = vset.pattern.permute.xlu0 0
        %1962 = vperm.xlu0 %1961, %v1676
        %v1963 = vpop.permute.xlu0 %1962
        %1966 = vset.pattern.permute.xlu0 0
        %1967 = vperm.xlu0 %1966, %v1677
        %v1968 = vpop.permute.xlu0 %1967
        %1971 = vset.pattern.permute.xlu0 0
        %1972 = vperm.xlu0 %1971, %v1678
        %v1973 = vpop.permute.xlu0 %1972
        %1976 = vset.pattern.permute.xlu0 0
        %1977 = vperm.xlu0 %1976, %v1679
        %v1978 = vpop.permute.xlu0 %1977
        %1981 = vset.pattern.permute.xlu0 0
        %1982 = vperm.xlu0 %1981, %v1680
        %v1983 = vpop.permute.xlu0 %1982
        %1986 = vset.pattern.permute.xlu0 0
        %1987 = vperm.xlu0 %1986, %v1681
        %v1988 = vpop.permute.xlu0 %1987
        %1991 = vset.pattern.permute.xlu0 0
        %1992 = vperm.xlu0 %1991, %v1682
        %v1993 = vpop.permute.xlu0 %1992
        %1996 = vset.pattern.permute.xlu0 0
        %1997 = vperm.xlu0 %1996, %v1683
        %v1998 = vpop.permute.xlu0 %1997
        %2001 = vset.pattern.permute.xlu0 0
        %2002 = vperm.xlu0 %2001, %v1684
        %v2003 = vpop.permute.xlu0 %2002
        %2006 = vset.pattern.permute.xlu0 0
        %2007 = vperm.xlu0 %2006, %v1685
        %v2008 = vpop.permute.xlu0 %2007
        %2011 = vset.pattern.permute.xlu0 0
        %2012 = vperm.xlu0 %2011, %v1686
        %v2013 = vpop.permute.xlu0 %2012
        %2016 = vset.pattern.permute.xlu0 0
        %2017 = vperm.xlu0 %2016, %v1687
        %v2018 = vpop.permute.xlu0 %2017
        %2021 = vset.pattern.permute.xlu0 0
        %2022 = vperm.xlu0 %2021, %v1688
        %v2023 = vpop.permute.xlu0 %2022
        %2026 = vset.pattern.permute.xlu0 0
        %2027 = vperm.xlu0 %2026, %v1689
        %v2028 = vpop.permute.xlu0 %2027
        %2031 = vset.pattern.permute.xlu0 0
        %2032 = vperm.xlu0 %2031, %v1690
        %v2033 = vpop.permute.xlu0 %2032
        %2036 = vset.pattern.permute.xlu0 0
        %2037 = vperm.xlu0 %2036, %v1691
        %v2038 = vpop.permute.xlu0 %2037
        %2041 = vset.pattern.permute.xlu0 0
        %2042 = vperm.xlu0 %2041, %v1692
        %v2043 = vpop.permute.xlu0 %2042
        %2046 = vset.pattern.permute.xlu0 0
        %2047 = vperm.xlu0 %2046, %v1693
        %v2048 = vpop.permute.xlu0 %2047
        %2051 = vset.pattern.permute.xlu0 0
        %2052 = vperm.xlu0 %2051, %v1694
        %v2053 = vpop.permute.xlu0 %2052
        %2056 = vset.pattern.permute.xlu0 0
        %2057 = vperm.xlu0 %2056, %v1695
        %v2058 = vpop.permute.xlu0 %2057
        %2061 = vset.pattern.permute.xlu0 0
        %2062 = vperm.xlu0 %2061, %v1696
        %v2063 = vpop.permute.xlu0 %2062
        %2066 = vset.pattern.permute.xlu0 0
        %2067 = vperm.xlu0 %2066, %v1697
        %v2068 = vpop.permute.xlu0 %2067
        %2071 = vset.pattern.permute.xlu0 0
        %2072 = vperm.xlu0 %2071, %v1698
        %v2073 = vpop.permute.xlu0 %2072
        %2076 = vset.pattern.permute.xlu0 0
        %2077 = vperm.xlu0 %2076, %v1699
        %v2078 = vpop.permute.xlu0 %2077
        %2081 = vset.pattern.permute.xlu0 0
        %2082 = vperm.xlu0 %2081, %v1700
        %v2083 = vpop.permute.xlu0 %2082
        %2086 = vset.pattern.permute.xlu0 0
        %2087 = vperm.xlu0 %2086, %v1701
        %v2088 = vpop.permute.xlu0 %2087
        %2091 = vset.pattern.permute.xlu0 0
        %2092 = vperm.xlu0 %2091, %v1702
        %v2093 = vpop.permute.xlu0 %2092
        %2096 = vset.pattern.permute.xlu0 0
        %2097 = vperm.xlu0 %2096, %v1703
        %v2098 = vpop.permute.xlu0 %2097
        %2101 = vset.pattern.permute.xlu0 0
        %2102 = vperm.xlu0 %2101, %v1704
        %v2103 = vpop.permute.xlu0 %2102
        %2106 = vset.pattern.permute.xlu0 0
        %2107 = vperm.xlu0 %2106, %v1705
        %v2108 = vpop.permute.xlu0 %2107
        %2111 = vset.pattern.permute.xlu0 0
        %2112 = vperm.xlu0 %2111, %v1706
        %v2113 = vpop.permute.xlu0 %2112
        %2116 = vset.pattern.permute.xlu0 0
        %2117 = vperm.xlu0 %2116, %v1707
        %v2118 = vpop.permute.xlu0 %2117
        %2121 = vset.pattern.permute.xlu0 0
        %2122 = vperm.xlu0 %2121, %v1708
        %v2123 = vpop.permute.xlu0 %2122
        %2126 = vset.pattern.permute.xlu0 0
        %2127 = vperm.xlu0 %2126, %v1709
        %v2128 = vpop.permute.xlu0 %2127
        %2131 = vset.pattern.permute.xlu0 0
        %2132 = vperm.xlu0 %2131, %v1710
        %v2133 = vpop.permute.xlu0 %2132
        %2136 = vset.pattern.permute.xlu0 0
        %2137 = vperm.xlu0 %2136, %v1711
        %v2138 = vpop.permute.xlu0 %2137
        %2141 = vset.pattern.permute.xlu0 0
        %2142 = vperm.xlu0 %2141, %v1712
        %v2143 = vpop.permute.xlu0 %2142
        %2146 = vset.pattern.permute.xlu0 0
        %2147 = vperm.xlu0 %2146, %v1713
        %v2148 = vpop.permute.xlu0 %2147
        %2151 = vset.pattern.permute.xlu0 0
        %2152 = vperm.xlu0 %2151, %v1714
        %v2153 = vpop.permute.xlu0 %2152
        %2156 = vset.pattern.permute.xlu0 0
        %2157 = vperm.xlu0 %2156, %v1715
        %v2158 = vpop.permute.xlu0 %2157
        %2161 = vset.pattern.permute.xlu0 0
        %2162 = vperm.xlu0 %2161, %v1716
        %v2163 = vpop.permute.xlu0 %2162
        %2166 = vset.pattern.permute.xlu0 0
        %2167 = vperm.xlu0 %2166, %v1717
        %v2168 = vpop.permute.xlu0 %2167
        %2171 = vset.pattern.permute.xlu0 0
        %2172 = vperm.xlu0 %2171, %v1718
        %v2173 = vpop.permute.xlu0 %2172
        %2176 = vset.pattern.permute.xlu0 0
        %2177 = vperm.xlu0 %2176, %v1719
        %v2178 = vpop.permute.xlu0 %2177
        %2181 = vset.pattern.permute.xlu0 0
        %2182 = vperm.xlu0 %2181, %v1720
        %v2183 = vpop.permute.xlu0 %2182
        %2186 = vset.pattern.permute.xlu0 0
        %2187 = vperm.xlu0 %2186, %v1721
        %v2188 = vpop.permute.xlu0 %2187
        %2191 = vset.pattern.permute.xlu0 0
        %2192 = vperm.xlu0 %2191, %v1722
        %v2193 = vpop.permute.xlu0 %2192
        %2196 = vset.pattern.permute.xlu0 0
        %2197 = vperm.xlu0 %2196, %v1723
        %v2198 = vpop.permute.xlu0 %2197
        %2201 = vset.pattern.permute.xlu0 0
        %2202 = vperm.xlu0 %2201, %v1724
        %v2203 = vpop.permute.xlu0 %2202
        %2206 = vset.pattern.permute.xlu0 0
        %2207 = vperm.xlu0 %2206, %v1725
        %v2208 = vpop.permute.xlu0 %2207
        %2211 = vset.pattern.permute.xlu0 0
        %2212 = vperm.xlu0 %2211, %v1726
        %v2213 = vpop.permute.xlu0 %2212
        %2216 = vset.pattern.permute.xlu0 0
        %2217 = vperm.xlu0 %2216, %v1727
        %v2218 = vpop.permute.xlu0 %2217
        %2221 = vset.pattern.permute.xlu0 0
        %2222 = vperm.xlu0 %2221, %v1728
        %v2223 = vpop.permute.xlu0 %2222
        %2226 = vset.pattern.permute.xlu0 0
        %2227 = vperm.xlu0 %2226, %v1729
        %v2228 = vpop.permute.xlu0 %2227
        %2231 = vset.pattern.permute.xlu0 0
        %2232 = vperm.xlu0 %2231, %v1730
        %v2233 = vpop.permute.xlu0 %2232
        %2236 = vset.pattern.permute.xlu0 0
        %2237 = vperm.xlu0 %2236, %v1731
        %v2238 = vpop.permute.xlu0 %2237
        %2241 = vset.pattern.permute.xlu0 0
        %2242 = vperm.xlu0 %2241, %v1732
        %v2243 = vpop.permute.xlu0 %2242
        %2246 = vset.pattern.permute.xlu0 0
        %2247 = vperm.xlu0 %2246, %v1733
        %v2248 = vpop.permute.xlu0 %2247
        %2251 = vset.pattern.permute.xlu0 0
        %2252 = vperm.xlu0 %2251, %v1734
        %v2253 = vpop.permute.xlu0 %2252
        %2256 = vset.pattern.permute.xlu0 0
        %2257 = vperm.xlu0 %2256, %v1735
        %v2258 = vpop.permute.xlu0 %2257
        %2261 = vset.pattern.permute.xlu0 0
        %2262 = vperm.xlu0 %2261, %v1736
        %v2263 = vpop.permute.xlu0 %2262
        %2266 = vset.pattern.permute.xlu0 0
        %2267 = vperm.xlu0 %2266, %v1737
        %v2268 = vpop.permute.xlu0 %2267
        %2271 = vset.pattern.permute.xlu0 0
        %2272 = vperm.xlu0 %2271, %v1738
        %v2273 = vpop.permute.xlu0 %2272
        %2276 = vset.pattern.permute.xlu0 0
        %2277 = vperm.xlu0 %2276, %v1739
        %v2278 = vpop.permute.xlu0 %2277
        %2281 = vset.pattern.permute.xlu0 0
        %2282 = vperm.xlu0 %2281, %v1740
        %v2283 = vpop.permute.xlu0 %2282
        %2286 = vset.pattern.permute.xlu0 0
        %2287 = vperm.xlu0 %2286, %v1741
        %v2288 = vpop.permute.xlu0 %2287
        %2291 = vset.pattern.permute.xlu0 0
        %2292 = vperm.xlu0 %2291, %v1742
        %v2293 = vpop.permute.xlu0 %2292
        %2296 = vset.pattern.permute.xlu0 0
        %2297 = vperm.xlu0 %2296, %v1743
        %v2298 = vpop.permute.xlu0 %2297
        %2301 = vset.pattern.permute.xlu0 0
        %2302 = vperm.xlu0 %2301, %v1744
        %v2303 = vpop.permute.xlu0 %2302
        %2306 = vset.pattern.permute.xlu0 0
        %2307 = vperm.xlu0 %2306, %v1745
        %v2308 = vpop.permute.xlu0 %2307
        %2311 = vset.pattern.permute.xlu0 0
        %2312 = vperm.xlu0 %2311, %v1746
        %v2313 = vpop.permute.xlu0 %2312
        %2316 = vset.pattern.permute.xlu0 0
        %2317 = vperm.xlu0 %2316, %v1747
        %v2318 = vpop.permute.xlu0 %2317
        %2321 = vset.pattern.permute.xlu0 0
        %2322 = vperm.xlu0 %2321, %v1748
        %v2323 = vpop.permute.xlu0 %2322
        %2326 = vset.pattern.permute.xlu0 0
        %2327 = vperm.xlu0 %2326, %v1749
        %v2328 = vpop.permute.xlu0 %2327
        %2331 = vset.pattern.permute.xlu0 0
        %2332 = vperm.xlu0 %2331, %v1750
        %v2333 = vpop.permute.xlu0 %2332
        %2336 = vset.pattern.permute.xlu0 0
        %2337 = vperm.xlu0 %2336, %v1751
        %v2338 = vpop.permute.xlu0 %2337
        %2341 = vset.pattern.permute.xlu0 0
        %2342 = vperm.xlu0 %2341, %v1752
        %v2343 = vpop.permute.xlu0 %2342
        %2346 = vset.pattern.permute.xlu0 0
        %2347 = vperm.xlu0 %2346, %v1753
        %v2348 = vpop.permute.xlu0 %2347
        %2351 = vset.pattern.permute.xlu0 0
        %2352 = vperm.xlu0 %2351, %v1754
        %v2353 = vpop.permute.xlu0 %2352
        %2356 = vset.pattern.permute.xlu0 0
        %2357 = vperm.xlu0 %2356, %v1755
        %v2358 = vpop.permute.xlu0 %2357
        %2361 = vset.pattern.permute.xlu0 0
        %2362 = vperm.xlu0 %2361, %v1756
        %v2363 = vpop.permute.xlu0 %2362
        %2366 = vset.pattern.permute.xlu0 0
        %2367 = vperm.xlu0 %2366, %v1757
        %v2368 = vpop.permute.xlu0 %2367
        %2371 = vset.pattern.permute.xlu0 0
        %2372 = vperm.xlu0 %2371, %v1758
        %v2373 = vpop.permute.xlu0 %2372
        %2376 = vset.pattern.permute.xlu0 0
        %2377 = vperm.xlu0 %2376, %v1759
        %v2378 = vpop.permute.xlu0 %2377
        %2381 = vset.pattern.permute.xlu0 0
        %2382 = vperm.xlu0 %2381, %v1760
        %v2383 = vpop.permute.xlu0 %2382
        %2386 = vset.pattern.permute.xlu0 0
        %2387 = vperm.xlu0 %2386, %v1761
        %v2388 = vpop.permute.xlu0 %2387
        %2391 = vset.pattern.permute.xlu0 0
        %2392 = vperm.xlu0 %2391, %v1762
        %v2393 = vpop.permute.xlu0 %2392
        %2396 = vset.pattern.permute.xlu0 0
        %2397 = vperm.xlu0 %2396, %v1763
        %v2398 = vpop.permute.xlu0 %2397
        %2401 = vset.pattern.permute.xlu0 0
        %2402 = vperm.xlu0 %2401, %v1764
        %v2403 = vpop.permute.xlu0 %2402
        %v2533 = vunpack.c.l.b16 %v1493
        %v2534 = vunpack.c.l.b16 %v1494
        %v2535 = vunpack.c.l.b16 %v1495
        %v2536 = vunpack.c.l.b16 %v1496
        %v2537 = vunpack.c.l.b16 %v1497
        %v2538 = vunpack.c.l.b16 %v1498
        %v2539 = vunpack.c.l.b16 %v1499
        %v2540 = vunpack.c.l.b16 %v1500
        %v2541 = vunpack.c.l.b16 %v1501
        %v2542 = vunpack.c.l.b16 %v1502
        %v2543 = vunpack.c.l.b16 %v1503
        %v2544 = vunpack.c.l.b16 %v1504
        %v2545 = vunpack.c.l.b16 %v1505
        %v2546 = vunpack.c.l.b16 %v1506
        %v2547 = vunpack.c.l.b16 %v1507
        %v2548 = vunpack.c.l.b16 %v1508
        %v2549 = vunpack.c.l.b16 %v1509
        %v2550 = vunpack.c.l.b16 %v1510
        %v2551 = vunpack.c.l.b16 %v1511
        %v2552 = vunpack.c.l.b16 %v1512
        %v2553 = vunpack.c.l.b16 %v1513
        %v2554 = vunpack.c.l.b16 %v1514
        %v2555 = vunpack.c.l.b16 %v1515
        %v2556 = vunpack.c.l.b16 %v1516
        %v2557 = vunpack.c.l.b16 %v1517
        %v2558 = vunpack.c.l.b16 %v1518
        %v2559 = vunpack.c.l.b16 %v1519
        %v2560 = vunpack.c.l.b16 %v1520
        %v2561 = vunpack.c.l.b16 %v1521
        %v2562 = vunpack.c.l.b16 %v1522
        %v2563 = vunpack.c.l.b16 %v1523
        %v2564 = vunpack.c.l.b16 %v1524
        %v2565 = vunpack.c.l.b16 %v1525
        %v2566 = vunpack.c.l.b16 %v1526
        %v2567 = vunpack.c.l.b16 %v1527
        %v2568 = vunpack.c.l.b16 %v1528
        %v2569 = vunpack.c.l.b16 %v1529
        %v2570 = vunpack.c.l.b16 %v1530
        %v2571 = vunpack.c.l.b16 %v1531
        %v2572 = vunpack.c.l.b16 %v1532
        %v2573 = vunpack.c.l.b16 %v1533
        %v2574 = vunpack.c.l.b16 %v1534
        %v2575 = vunpack.c.l.b16 %v1535
        %v2576 = vunpack.c.l.b16 %v1536
        %v2577 = vunpack.c.l.b16 %v1537
        %v2578 = vunpack.c.l.b16 %v1538
        %v2579 = vunpack.c.l.b16 %v1539
        %v2580 = vunpack.c.l.b16 %v1540
        %v2581 = vunpack.c.l.b16 %v1541
        %v2582 = vunpack.c.l.b16 %v1542
        %v2583 = vunpack.c.l.b16 %v1543
        %v2584 = vunpack.c.l.b16 %v1544
        %v2585 = vunpack.c.l.b16 %v1545
        %v2586 = vunpack.c.l.b16 %v1546
        %v2587 = vunpack.c.l.b16 %v1547
        %v2588 = vunpack.c.l.b16 %v1548
        %v2589 = vunpack.c.l.b16 %v1549
        %v2590 = vunpack.c.l.b16 %v1550
        %v2591 = vunpack.c.l.b16 %v1551
        %v2592 = vunpack.c.l.b16 %v1552
        %v2593 = vunpack.c.l.b16 %v1553
        %v2594 = vunpack.c.l.b16 %v1554
        %v2595 = vunpack.c.l.b16 %v1555
        %v2596 = vunpack.c.l.b16 %v1556
        %v2597 = vunpack.c.l.b16 %v1557
        %v2598 = vunpack.c.l.b16 %v1558
        %v2599 = vunpack.c.l.b16 %v1559
        %v2600 = vunpack.c.l.b16 %v1560
        %v2601 = vunpack.c.l.b16 %v1561
        %v2602 = vunpack.c.l.b16 %v1562
        %v2603 = vunpack.c.l.b16 %v1563
        %v2604 = vunpack.c.l.b16 %v1564
        %v2605 = vunpack.c.l.b16 %v1565
        %v2606 = vunpack.c.l.b16 %v1566
        %v2607 = vunpack.c.l.b16 %v1567
        %v2608 = vunpack.c.l.b16 %v1568
        %v2609 = vunpack.c.l.b16 %v1569
        %v2610 = vunpack.c.l.b16 %v1570
        %v2611 = vunpack.c.l.b16 %v1571
        %v2612 = vunpack.c.l.b16 %v1572
        %v2613 = vunpack.c.l.b16 %v1573
        %v2614 = vunpack.c.l.b16 %v1574
        %v2615 = vunpack.c.l.b16 %v1575
        %v2616 = vunpack.c.l.b16 %v1576
        %v2617 = vunpack.c.l.b16 %v1577
        %v2618 = vunpack.c.l.b16 %v1578
        %v2619 = vunpack.c.l.b16 %v1579
        %v2620 = vunpack.c.l.b16 %v1580
        %v2621 = vunpack.c.l.b16 %v1581
        %v2622 = vunpack.c.l.b16 %v1582
        %v2623 = vunpack.c.l.b16 %v1583
        %v2624 = vunpack.c.l.b16 %v1584
        %v2625 = vunpack.c.l.b16 %v1585
        %v2626 = vunpack.c.l.b16 %v1586
        %v2627 = vunpack.c.l.b16 %v1587
        %v2628 = vunpack.c.l.b16 %v1588
        %v2629 = vunpack.c.l.b16 %v1589
        %v2630 = vunpack.c.l.b16 %v1590
        %v2631 = vunpack.c.l.b16 %v1591
        %v2632 = vunpack.c.l.b16 %v1592
        %v2633 = vunpack.c.l.b16 %v1593
        %v2634 = vunpack.c.l.b16 %v1594
        %v2635 = vunpack.c.l.b16 %v1595
        %v2636 = vunpack.c.l.b16 %v1596
        %v2637 = vunpack.c.l.b16 %v1597
        %v2638 = vunpack.c.l.b16 %v1598
        %v2639 = vunpack.c.l.b16 %v1599
        %v2640 = vunpack.c.l.b16 %v1600
        %v2641 = vunpack.c.l.b16 %v1601
        %v2642 = vunpack.c.l.b16 %v1602
        %v2643 = vunpack.c.l.b16 %v1603
        %v2644 = vunpack.c.l.b16 %v1604
        %v2645 = vunpack.c.l.b16 %v1605
        %v2646 = vunpack.c.l.b16 %v1606
        %v2647 = vunpack.c.l.b16 %v1607
        %v2648 = vunpack.c.l.b16 %v1608
        %v2649 = vunpack.c.l.b16 %v1609
        %v2650 = vunpack.c.l.b16 %v1610
        %v2651 = vunpack.c.l.b16 %v1611
        %v2652 = vunpack.c.l.b16 %v1612
        %v2653 = vunpack.c.l.b16 %v1613
        %v2654 = vunpack.c.l.b16 %v1614
        %v2655 = vunpack.c.l.b16 %v1615
        %v2656 = vunpack.c.l.b16 %v1616
        %v2657 = vunpack.c.l.b16 %v1617
        %v2658 = vunpack.c.l.b16 %v1618
        %v2659 = vunpack.c.l.b16 %v1619
        %v2660 = vunpack.c.l.b16 %v1620
        %v2661 = vpack.c.b16 %v2534, %v2533
        %v2662 = vpack.c.b16 %v2536, %v2535
        %v2663 = vpack.c.b16 %v2538, %v2537
        %v2664 = vpack.c.b16 %v2540, %v2539
        %v2665 = vpack.c.b16 %v2542, %v2541
        %v2666 = vpack.c.b16 %v2544, %v2543
        %v2667 = vpack.c.b16 %v2546, %v2545
        %v2668 = vpack.c.b16 %v2548, %v2547
        %v2669 = vpack.c.b16 %v2550, %v2549
        %v2670 = vpack.c.b16 %v2552, %v2551
        %v2671 = vpack.c.b16 %v2554, %v2553
        %v2672 = vpack.c.b16 %v2556, %v2555
        %v2673 = vpack.c.b16 %v2558, %v2557
        %v2674 = vpack.c.b16 %v2560, %v2559
        %v2675 = vpack.c.b16 %v2562, %v2561
        %v2676 = vpack.c.b16 %v2564, %v2563
        %v2677 = vpack.c.b16 %v2566, %v2565
        %v2678 = vpack.c.b16 %v2568, %v2567
        %v2679 = vpack.c.b16 %v2570, %v2569
        %v2680 = vpack.c.b16 %v2572, %v2571
        %v2681 = vpack.c.b16 %v2574, %v2573
        %v2682 = vpack.c.b16 %v2576, %v2575
        %v2683 = vpack.c.b16 %v2578, %v2577
        %v2684 = vpack.c.b16 %v2580, %v2579
        %v2685 = vpack.c.b16 %v2582, %v2581
        %v2686 = vpack.c.b16 %v2584, %v2583
        %v2687 = vpack.c.b16 %v2586, %v2585
        %v2688 = vpack.c.b16 %v2588, %v2587
        %v2689 = vpack.c.b16 %v2590, %v2589
        %v2690 = vpack.c.b16 %v2592, %v2591
        %v2691 = vpack.c.b16 %v2594, %v2593
        %v2692 = vpack.c.b16 %v2596, %v2595
        %v2693 = vpack.c.b16 %v2598, %v2597
        %v2694 = vpack.c.b16 %v2600, %v2599
        %v2695 = vpack.c.b16 %v2602, %v2601
        %v2696 = vpack.c.b16 %v2604, %v2603
        %v2697 = vpack.c.b16 %v2606, %v2605
        %v2698 = vpack.c.b16 %v2608, %v2607
        %v2699 = vpack.c.b16 %v2610, %v2609
        %v2700 = vpack.c.b16 %v2612, %v2611
        %v2701 = vpack.c.b16 %v2614, %v2613
        %v2702 = vpack.c.b16 %v2616, %v2615
        %v2703 = vpack.c.b16 %v2618, %v2617
        %v2704 = vpack.c.b16 %v2620, %v2619
        %v2705 = vpack.c.b16 %v2622, %v2621
        %v2706 = vpack.c.b16 %v2624, %v2623
        %v2707 = vpack.c.b16 %v2626, %v2625
        %v2708 = vpack.c.b16 %v2628, %v2627
        %v2709 = vpack.c.b16 %v2630, %v2629
        %v2710 = vpack.c.b16 %v2632, %v2631
        %v2711 = vpack.c.b16 %v2634, %v2633
        %v2712 = vpack.c.b16 %v2636, %v2635
        %v2713 = vpack.c.b16 %v2638, %v2637
        %v2714 = vpack.c.b16 %v2640, %v2639
        %v2715 = vpack.c.b16 %v2642, %v2641
        %v2716 = vpack.c.b16 %v2644, %v2643
        %v2717 = vpack.c.b16 %v2646, %v2645
        %v2718 = vpack.c.b16 %v2648, %v2647
        %v2719 = vpack.c.b16 %v2650, %v2649
        %v2720 = vpack.c.b16 %v2652, %v2651
        %v2721 = vpack.c.b16 %v2654, %v2653
        %v2722 = vpack.c.b16 %v2656, %v2655
        %v2723 = vpack.c.b16 %v2658, %v2657
        %v2724 = vpack.c.b16 %v2660, %v2659
        %2789 = vmatprep.subr.bf16.mxu0 %v1636
        %2790 = vmatpush1.bf16.msra.mxu0 %v1635
        %2791 = vmatprep.subr.bf16.mxu0 %v1634
        %2792 = vmatpush1.bf16.msra.mxu0 %v1633
        %2793 = vmatprep.subr.bf16.mxu0 %v1632
        %2794 = vmatpush1.bf16.msra.mxu0 %v1631
        %2795 = vmatprep.subr.bf16.mxu0 %v1630
        %2796 = vmatpush1.bf16.msra.mxu0 %v1629
        %2797 = vmatprep.subr.bf16.mxu0 %v1628
        %2798 = vmatpush1.bf16.msra.mxu0 %v1627
        %2799 = vmatprep.subr.bf16.mxu0 %v1626
        %2800 = vmatpush1.bf16.msra.mxu0 %v1625
        %2801 = vmatprep.subr.bf16.mxu0 %v1624
        %2802 = vmatpush1.bf16.msra.mxu0 %v1623
        %2803 = vmatprep.subr.bf16.mxu0 %v1622
        %2804 = vmatpush1.bf16.msra.mxu0 %v1621
        %2805 = vmatprep.subr.bf16.mxu0 0
        %2806 = vmatpush2.bf16.msra.mxu0 0
        %2807 = vmatprep.subr.bf16.mxu0 0
        %2808 = vmatpush2.bf16.msra.mxu0 0
        %2809 = vmatprep.subr.bf16.mxu0 0
        %2810 = vmatpush2.bf16.msra.mxu0 0
        %2811 = vmatprep.subr.bf16.mxu0 0
        %2812 = vmatpush2.bf16.msra.mxu0 0
        %2813 = vmatprep.subr.bf16.mxu0 0
        %2814 = vmatpush2.bf16.msra.mxu0 0
        %2815 = vmatprep.subr.bf16.mxu0 0
        %2816 = vmatpush2.bf16.msra.mxu0 0
        %2817 = vmatprep.subr.bf16.mxu0 0
        %2818 = vmatpush2.bf16.msra.mxu0 0
        %2819 = vmatprep.subr.bf16.mxu0 0
        %2820 = vmatpush2.bf16.msra.mxu0 0
        %2821 = vmatprep.mubr.bf16.mxu0 0
        %2822 = vmatmul.mubr.bf16.gmra.mxu0 %v2661
        %v2823 = vpop.f32.mrf.mxu0
        %v2824 = vadd.f32 %v1768, %v2823
        %v2825 = vpop.f32.mrf.mxu0
        %v2826 = vadd.f32 %v1768, %v2825
        %v2827 = vpop.f32.mrf.mxu0
        %v2828 = vadd.f32 %v1773, %v2827
        %v2829 = vpop.f32.mrf.mxu0
        %v2830 = vadd.f32 %v1773, %v2829
        %2831 = vmatprep.mubr.bf16.mxu0 0
        %2832 = vmatmul.mubr.bf16.gmra.mxu0 %v2662
        %v2833 = vpop.f32.mrf.mxu0
        %v2834 = vadd.f32 %v1778, %v2833
        %v2835 = vpop.f32.mrf.mxu0
        %v2836 = vadd.f32 %v1778, %v2835
        %v2837 = vpop.f32.mrf.mxu0
        %v2838 = vadd.f32 %v1783, %v2837
        %v2839 = vpop.f32.mrf.mxu0
        %v2840 = vadd.f32 %v1783, %v2839
        %2841 = vmatprep.mubr.bf16.mxu0 0
        %2842 = vmatmul.mubr.bf16.gmra.mxu0 %v2663
        %v2843 = vpop.f32.mrf.mxu0
        %v2844 = vadd.f32 %v1788, %v2843
        %v2845 = vpop.f32.mrf.mxu0
        %v2846 = vadd.f32 %v1788, %v2845
        %v2847 = vpop.f32.mrf.mxu0
        %v2848 = vadd.f32 %v1793, %v2847
        %v2849 = vpop.f32.mrf.mxu0
        %v2850 = vadd.f32 %v1793, %v2849
        %2851 = vmatprep.mubr.bf16.mxu0 0
        %2852 = vmatmul.mubr.bf16.gmra.mxu0 %v2664
        %v2853 = vpop.f32.mrf.mxu0
        %v2854 = vadd.f32 %v1798, %v2853
        %v2855 = vpop.f32.mrf.mxu0
        %v2856 = vadd.f32 %v1798, %v2855
        %v2857 = vpop.f32.mrf.mxu0
        %v2858 = vadd.f32 %v1803, %v2857
        %v2859 = vpop.f32.mrf.mxu0
        %v2860 = vadd.f32 %v1803, %v2859
        %2861 = vmatprep.mubr.bf16.mxu0 0
        %2862 = vmatmul.mubr.bf16.gmra.mxu0 %v2665
        %v2863 = vpop.f32.mrf.mxu0
        %v2864 = vadd.f32 %v1808, %v2863
        %v2865 = vpop.f32.mrf.mxu0
        %v2866 = vadd.f32 %v1808, %v2865
        %v2867 = vpop.f32.mrf.mxu0
        %v2868 = vadd.f32 %v1813, %v2867
        %v2869 = vpop.f32.mrf.mxu0
        %v2870 = vadd.f32 %v1813, %v2869
        %2871 = vmatprep.mubr.bf16.mxu0 0
        %2872 = vmatmul.mubr.bf16.gmra.mxu0 %v2666
        %v2873 = vpop.f32.mrf.mxu0
        %v2874 = vadd.f32 %v1818, %v2873
        %v2875 = vpop.f32.mrf.mxu0
        %v2876 = vadd.f32 %v1818, %v2875
        %v2877 = vpop.f32.mrf.mxu0
        %v2878 = vadd.f32 %v1823, %v2877
        %v2879 = vpop.f32.mrf.mxu0
        %v2880 = vadd.f32 %v1823, %v2879
        %2881 = vmatprep.mubr.bf16.mxu0 0
        %2882 = vmatmul.mubr.bf16.gmra.mxu0 %v2667
        %v2883 = vpop.f32.mrf.mxu0
        %v2884 = vadd.f32 %v1828, %v2883
        %v2885 = vpop.f32.mrf.mxu0
        %v2886 = vadd.f32 %v1828, %v2885
        %v2887 = vpop.f32.mrf.mxu0
        %v2888 = vadd.f32 %v1833, %v2887
        %v2889 = vpop.f32.mrf.mxu0
        %v2890 = vadd.f32 %v1833, %v2889
        %2891 = vmatprep.mubr.bf16.mxu0 0
        %2892 = vmatmul.mubr.bf16.gmra.mxu0 %v2668
        %v2893 = vpop.f32.mrf.mxu0
        %v2894 = vadd.f32 %v1838, %v2893
        %v2895 = vpop.f32.mrf.mxu0
        %v2896 = vadd.f32 %v1838, %v2895
        %v2897 = vpop.f32.mrf.mxu0
        %v2898 = vadd.f32 %v1843, %v2897
        %v2899 = vpop.f32.mrf.mxu0
        %v2900 = vadd.f32 %v1843, %v2899
        %2901 = vmatprep.mubr.bf16.mxu0 0
        %2902 = vmatmul.mubr.bf16.gmra.mxu0 %v2669
        %v2903 = vpop.f32.mrf.mxu0
        %v2904 = vadd.f32 %v1848, %v2903
        %v2905 = vpop.f32.mrf.mxu0
        %v2906 = vadd.f32 %v1848, %v2905
        %v2907 = vpop.f32.mrf.mxu0
        %v2908 = vadd.f32 %v1853, %v2907
        %v2909 = vpop.f32.mrf.mxu0
        %v2910 = vadd.f32 %v1853, %v2909
        %2911 = vmatprep.mubr.bf16.mxu0 0
        %2912 = vmatmul.mubr.bf16.gmra.mxu0 %v2670
        %v2913 = vpop.f32.mrf.mxu0
        %v2914 = vadd.f32 %v1858, %v2913
        %v2915 = vpop.f32.mrf.mxu0
        %v2916 = vadd.f32 %v1858, %v2915
        %v2917 = vpop.f32.mrf.mxu0
        %v2918 = vadd.f32 %v1863, %v2917
        %v2919 = vpop.f32.mrf.mxu0
        %v2920 = vadd.f32 %v1863, %v2919
        %2921 = vmatprep.mubr.bf16.mxu0 0
        %2922 = vmatmul.mubr.bf16.gmra.mxu0 %v2671
        %v2923 = vpop.f32.mrf.mxu0
        %v2924 = vadd.f32 %v1868, %v2923
        %v2925 = vpop.f32.mrf.mxu0
        %v2926 = vadd.f32 %v1868, %v2925
        %v2927 = vpop.f32.mrf.mxu0
        %v2928 = vadd.f32 %v1873, %v2927
        %v2929 = vpop.f32.mrf.mxu0
        %v2930 = vadd.f32 %v1873, %v2929
        %2931 = vmatprep.mubr.bf16.mxu0 0
        %2932 = vmatmul.mubr.bf16.gmra.mxu0 %v2672
        %v2933 = vpop.f32.mrf.mxu0
        %v2934 = vadd.f32 %v1878, %v2933
        %v2935 = vpop.f32.mrf.mxu0
        %v2936 = vadd.f32 %v1878, %v2935
        %v2937 = vpop.f32.mrf.mxu0
        %v2938 = vadd.f32 %v1883, %v2937
        %v2939 = vpop.f32.mrf.mxu0
        %v2940 = vadd.f32 %v1883, %v2939
        %2941 = vmatprep.mubr.bf16.mxu0 0
        %2942 = vmatmul.mubr.bf16.gmra.mxu0 %v2673
        %v2943 = vpop.f32.mrf.mxu0
        %v2944 = vadd.f32 %v1888, %v2943
        %v2945 = vpop.f32.mrf.mxu0
        %v2946 = vadd.f32 %v1888, %v2945
        %v2947 = vpop.f32.mrf.mxu0
        %v2948 = vadd.f32 %v1893, %v2947
        %v2949 = vpop.f32.mrf.mxu0
        %v2950 = vadd.f32 %v1893, %v2949
        %2951 = vmatprep.mubr.bf16.mxu0 0
        %2952 = vmatmul.mubr.bf16.gmra.mxu0 %v2674
        %v2953 = vpop.f32.mrf.mxu0
        %v2954 = vadd.f32 %v1898, %v2953
        %v2955 = vpop.f32.mrf.mxu0
        %v2956 = vadd.f32 %v1898, %v2955
        %v2957 = vpop.f32.mrf.mxu0
        %v2958 = vadd.f32 %v1903, %v2957
        %v2959 = vpop.f32.mrf.mxu0
        %v2960 = vadd.f32 %v1903, %v2959
        %2961 = vmatprep.mubr.bf16.mxu0 0
        %2962 = vmatmul.mubr.bf16.gmra.mxu0 %v2675
        %v2963 = vpop.f32.mrf.mxu0
        %v2964 = vadd.f32 %v1908, %v2963
        %v2965 = vpop.f32.mrf.mxu0
        %v2966 = vadd.f32 %v1908, %v2965
        %v2967 = vpop.f32.mrf.mxu0
        %v2968 = vadd.f32 %v1913, %v2967
        %v2969 = vpop.f32.mrf.mxu0
        %v2970 = vadd.f32 %v1913, %v2969
        %2971 = vmatprep.mubr.bf16.mxu0 0
        %2972 = vmatmul.mubr.bf16.gmra.mxu0 %v2676
        %v2973 = vpop.f32.mrf.mxu0
        %v2974 = vadd.f32 %v1918, %v2973
        %v2975 = vpop.f32.mrf.mxu0
        %v2976 = vadd.f32 %v1918, %v2975
        %v2977 = vpop.f32.mrf.mxu0
        %v2978 = vadd.f32 %v1923, %v2977
        %v2979 = vpop.f32.mrf.mxu0
        %v2980 = vadd.f32 %v1923, %v2979
        %2981 = vmatprep.mubr.bf16.mxu0 0
        %2982 = vmatmul.mubr.bf16.gmra.mxu0 %v2677
        %v2983 = vpop.f32.mrf.mxu0
        %v2984 = vadd.f32 %v1928, %v2983
        %v2985 = vpop.f32.mrf.mxu0
        %v2986 = vadd.f32 %v1928, %v2985
        %v2987 = vpop.f32.mrf.mxu0
        %v2988 = vadd.f32 %v1933, %v2987
        %v2989 = vpop.f32.mrf.mxu0
        %v2990 = vadd.f32 %v1933, %v2989
        %2991 = vmatprep.mubr.bf16.mxu0 0
        %2992 = vmatmul.mubr.bf16.gmra.mxu0 %v2678
        %v2993 = vpop.f32.mrf.mxu0
        %v2994 = vadd.f32 %v1938, %v2993
        %v2995 = vpop.f32.mrf.mxu0
        %v2996 = vadd.f32 %v1938, %v2995
        %v2997 = vpop.f32.mrf.mxu0
        %v2998 = vadd.f32 %v1943, %v2997
        %v2999 = vpop.f32.mrf.mxu0
        %v3000 = vadd.f32 %v1943, %v2999
        %3001 = vmatprep.mubr.bf16.mxu0 0
        %3002 = vmatmul.mubr.bf16.gmra.mxu0 %v2679
        %v3003 = vpop.f32.mrf.mxu0
        %v3004 = vadd.f32 %v1948, %v3003
        %v3005 = vpop.f32.mrf.mxu0
        %v3006 = vadd.f32 %v1948, %v3005
        %v3007 = vpop.f32.mrf.mxu0
        %v3008 = vadd.f32 %v1953, %v3007
        %v3009 = vpop.f32.mrf.mxu0
        %v3010 = vadd.f32 %v1953, %v3009
        %3011 = vmatprep.mubr.bf16.mxu0 0
        %3012 = vmatmul.mubr.bf16.gmra.mxu0 %v2680
        %v3013 = vpop.f32.mrf.mxu0
        %v3014 = vadd.f32 %v1958, %v3013
        %v3015 = vpop.f32.mrf.mxu0
        %v3016 = vadd.f32 %v1958, %v3015
        %v3017 = vpop.f32.mrf.mxu0
        %v3018 = vadd.f32 %v1963, %v3017
        %v3019 = vpop.f32.mrf.mxu0
        %v3020 = vadd.f32 %v1963, %v3019
        %3021 = vmatprep.mubr.bf16.mxu0 0
        %3022 = vmatmul.mubr.bf16.gmra.mxu0 %v2681
        %v3023 = vpop.f32.mrf.mxu0
        %v3024 = vadd.f32 %v1968, %v3023
        %v3025 = vpop.f32.mrf.mxu0
        %v3026 = vadd.f32 %v1968, %v3025
        %v3027 = vpop.f32.mrf.mxu0
        %v3028 = vadd.f32 %v1973, %v3027
        %v3029 = vpop.f32.mrf.mxu0
        %v3030 = vadd.f32 %v1973, %v3029
        %3031 = vmatprep.mubr.bf16.mxu0 0
        %3032 = vmatmul.mubr.bf16.gmra.mxu0 %v2682
        %v3033 = vpop.f32.mrf.mxu0
        %v3034 = vadd.f32 %v1978, %v3033
        %v3035 = vpop.f32.mrf.mxu0
        %v3036 = vadd.f32 %v1978, %v3035
        %v3037 = vpop.f32.mrf.mxu0
        %v3038 = vadd.f32 %v1983, %v3037
        %v3039 = vpop.f32.mrf.mxu0
        %v3040 = vadd.f32 %v1983, %v3039
        %3041 = vmatprep.mubr.bf16.mxu0 0
        %3042 = vmatmul.mubr.bf16.gmra.mxu0 %v2683
        %v3043 = vpop.f32.mrf.mxu0
        %v3044 = vadd.f32 %v1988, %v3043
        %v3045 = vpop.f32.mrf.mxu0
        %v3046 = vadd.f32 %v1988, %v3045
        %v3047 = vpop.f32.mrf.mxu0
        %v3048 = vadd.f32 %v1993, %v3047
        %v3049 = vpop.f32.mrf.mxu0
        %v3050 = vadd.f32 %v1993, %v3049
        %3051 = vmatprep.mubr.bf16.mxu0 0
        %3052 = vmatmul.mubr.bf16.gmra.mxu0 %v2684
        %v3053 = vpop.f32.mrf.mxu0
        %v3054 = vadd.f32 %v1998, %v3053
        %v3055 = vpop.f32.mrf.mxu0
        %v3056 = vadd.f32 %v1998, %v3055
        %v3057 = vpop.f32.mrf.mxu0
        %v3058 = vadd.f32 %v2003, %v3057
        %v3059 = vpop.f32.mrf.mxu0
        %v3060 = vadd.f32 %v2003, %v3059
        %3061 = vmatprep.mubr.bf16.mxu0 0
        %3062 = vmatmul.mubr.bf16.gmra.mxu0 %v2685
        %v3063 = vpop.f32.mrf.mxu0
        %v3064 = vadd.f32 %v2008, %v3063
        %v3065 = vpop.f32.mrf.mxu0
        %v3066 = vadd.f32 %v2008, %v3065
        %v3067 = vpop.f32.mrf.mxu0
        %v3068 = vadd.f32 %v2013, %v3067
        %v3069 = vpop.f32.mrf.mxu0
        %v3070 = vadd.f32 %v2013, %v3069
        %3071 = vmatprep.mubr.bf16.mxu0 0
        %3072 = vmatmul.mubr.bf16.gmra.mxu0 %v2686
        %v3073 = vpop.f32.mrf.mxu0
        %v3074 = vadd.f32 %v2018, %v3073
        %v3075 = vpop.f32.mrf.mxu0
        %v3076 = vadd.f32 %v2018, %v3075
        %v3077 = vpop.f32.mrf.mxu0
        %v3078 = vadd.f32 %v2023, %v3077
        %v3079 = vpop.f32.mrf.mxu0
        %v3080 = vadd.f32 %v2023, %v3079
        %3081 = vmatprep.mubr.bf16.mxu0 0
        %3082 = vmatmul.mubr.bf16.gmra.mxu0 %v2687
        %v3083 = vpop.f32.mrf.mxu0
        %v3084 = vadd.f32 %v2028, %v3083
        %v3085 = vpop.f32.mrf.mxu0
        %v3086 = vadd.f32 %v2028, %v3085
        %v3087 = vpop.f32.mrf.mxu0
        %v3088 = vadd.f32 %v2033, %v3087
        %v3089 = vpop.f32.mrf.mxu0
        %v3090 = vadd.f32 %v2033, %v3089
        %3091 = vmatprep.mubr.bf16.mxu0 0
        %3092 = vmatmul.mubr.bf16.gmra.mxu0 %v2688
        %v3093 = vpop.f32.mrf.mxu0
        %v3094 = vadd.f32 %v2038, %v3093
        %v3095 = vpop.f32.mrf.mxu0
        %v3096 = vadd.f32 %v2038, %v3095
        %v3097 = vpop.f32.mrf.mxu0
        %v3098 = vadd.f32 %v2043, %v3097
        %v3099 = vpop.f32.mrf.mxu0
        %v3100 = vadd.f32 %v2043, %v3099
        %3101 = vmatprep.mubr.bf16.mxu0 0
        %3102 = vmatmul.mubr.bf16.gmra.mxu0 %v2689
        %v3103 = vpop.f32.mrf.mxu0
        %v3104 = vadd.f32 %v2048, %v3103
        %v3105 = vpop.f32.mrf.mxu0
        %v3106 = vadd.f32 %v2048, %v3105
        %v3107 = vpop.f32.mrf.mxu0
        %v3108 = vadd.f32 %v2053, %v3107
        %v3109 = vpop.f32.mrf.mxu0
        %v3110 = vadd.f32 %v2053, %v3109
        %3111 = vmatprep.mubr.bf16.mxu0 0
        %3112 = vmatmul.mubr.bf16.gmra.mxu0 %v2690
        %v3113 = vpop.f32.mrf.mxu0
        %v3114 = vadd.f32 %v2058, %v3113
        %v3115 = vpop.f32.mrf.mxu0
        %v3116 = vadd.f32 %v2058, %v3115
        %v3117 = vpop.f32.mrf.mxu0
        %v3118 = vadd.f32 %v2063, %v3117
        %v3119 = vpop.f32.mrf.mxu0
        %v3120 = vadd.f32 %v2063, %v3119
        %3121 = vmatprep.mubr.bf16.mxu0 0
        %3122 = vmatmul.mubr.bf16.gmra.mxu0 %v2691
        %v3123 = vpop.f32.mrf.mxu0
        %v3124 = vadd.f32 %v2068, %v3123
        %v3125 = vpop.f32.mrf.mxu0
        %v3126 = vadd.f32 %v2068, %v3125
        %v3127 = vpop.f32.mrf.mxu0
        %v3128 = vadd.f32 %v2073, %v3127
        %v3129 = vpop.f32.mrf.mxu0
        %v3130 = vadd.f32 %v2073, %v3129
        %3131 = vmatprep.mubr.bf16.mxu0 0
        %3132 = vmatmul.mubr.bf16.gmra.mxu0 %v2692
        %v3133 = vpop.f32.mrf.mxu0
        %v3134 = vadd.f32 %v2078, %v3133
        %v3135 = vpop.f32.mrf.mxu0
        %v3136 = vadd.f32 %v2078, %v3135
        %v3137 = vpop.f32.mrf.mxu0
        %v3138 = vadd.f32 %v2083, %v3137
        %v3139 = vpop.f32.mrf.mxu0
        %v3140 = vadd.f32 %v2083, %v3139
        %3141 = vmatprep.mubr.bf16.mxu0 0
        %3142 = vmatmul.mubr.bf16.gmra.mxu0 %v2693
        %v3143 = vpop.f32.mrf.mxu0
        %v3144 = vadd.f32 %v2088, %v3143
        %v3145 = vpop.f32.mrf.mxu0
        %v3146 = vadd.f32 %v2088, %v3145
        %v3147 = vpop.f32.mrf.mxu0
        %v3148 = vadd.f32 %v2093, %v3147
        %v3149 = vpop.f32.mrf.mxu0
        %v3150 = vadd.f32 %v2093, %v3149
        %3151 = vmatprep.mubr.bf16.mxu0 0
        %3152 = vmatmul.mubr.bf16.gmra.mxu0 %v2694
        %v3153 = vpop.f32.mrf.mxu0
        %v3154 = vadd.f32 %v2098, %v3153
        %v3155 = vpop.f32.mrf.mxu0
        %v3156 = vadd.f32 %v2098, %v3155
        %v3157 = vpop.f32.mrf.mxu0
        %v3158 = vadd.f32 %v2103, %v3157
        %v3159 = vpop.f32.mrf.mxu0
        %v3160 = vadd.f32 %v2103, %v3159
        %3161 = vmatprep.mubr.bf16.mxu0 0
        %3162 = vmatmul.mubr.bf16.gmra.mxu0 %v2695
        %v3163 = vpop.f32.mrf.mxu0
        %v3164 = vadd.f32 %v2108, %v3163
        %v3165 = vpop.f32.mrf.mxu0
        %v3166 = vadd.f32 %v2108, %v3165
        %v3167 = vpop.f32.mrf.mxu0
        %v3168 = vadd.f32 %v2113, %v3167
        %v3169 = vpop.f32.mrf.mxu0
        %v3170 = vadd.f32 %v2113, %v3169
        %3171 = vmatprep.mubr.bf16.mxu0 0
        %3172 = vmatmul.mubr.bf16.gmra.mxu0 %v2696
        %v3173 = vpop.f32.mrf.mxu0
        %v3174 = vadd.f32 %v2118, %v3173
        %v3175 = vpop.f32.mrf.mxu0
        %v3176 = vadd.f32 %v2118, %v3175
        %v3177 = vpop.f32.mrf.mxu0
        %v3178 = vadd.f32 %v2123, %v3177
        %v3179 = vpop.f32.mrf.mxu0
        %v3180 = vadd.f32 %v2123, %v3179
        %3181 = vmatprep.mubr.bf16.mxu0 0
        %3182 = vmatmul.mubr.bf16.gmra.mxu0 %v2697
        %v3183 = vpop.f32.mrf.mxu0
        %v3184 = vadd.f32 %v2128, %v3183
        %v3185 = vpop.f32.mrf.mxu0
        %v3186 = vadd.f32 %v2128, %v3185
        %v3187 = vpop.f32.mrf.mxu0
        %v3188 = vadd.f32 %v2133, %v3187
        %v3189 = vpop.f32.mrf.mxu0
        %v3190 = vadd.f32 %v2133, %v3189
        %3191 = vmatprep.mubr.bf16.mxu0 0
        %3192 = vmatmul.mubr.bf16.gmra.mxu0 %v2698
        %v3193 = vpop.f32.mrf.mxu0
        %v3194 = vadd.f32 %v2138, %v3193
        %v3195 = vpop.f32.mrf.mxu0
        %v3196 = vadd.f32 %v2138, %v3195
        %v3197 = vpop.f32.mrf.mxu0
        %v3198 = vadd.f32 %v2143, %v3197
        %v3199 = vpop.f32.mrf.mxu0
        %v3200 = vadd.f32 %v2143, %v3199
        %3201 = vmatprep.mubr.bf16.mxu0 0
        %3202 = vmatmul.mubr.bf16.gmra.mxu0 %v2699
        %v3203 = vpop.f32.mrf.mxu0
        %v3204 = vadd.f32 %v2148, %v3203
        %v3205 = vpop.f32.mrf.mxu0
        %v3206 = vadd.f32 %v2148, %v3205
        %v3207 = vpop.f32.mrf.mxu0
        %v3208 = vadd.f32 %v2153, %v3207
        %v3209 = vpop.f32.mrf.mxu0
        %v3210 = vadd.f32 %v2153, %v3209
        %3211 = vmatprep.mubr.bf16.mxu0 0
        %3212 = vmatmul.mubr.bf16.gmra.mxu0 %v2700
        %v3213 = vpop.f32.mrf.mxu0
        %v3214 = vadd.f32 %v2158, %v3213
        %v3215 = vpop.f32.mrf.mxu0
        %v3216 = vadd.f32 %v2158, %v3215
        %v3217 = vpop.f32.mrf.mxu0
        %v3218 = vadd.f32 %v2163, %v3217
        %v3219 = vpop.f32.mrf.mxu0
        %v3220 = vadd.f32 %v2163, %v3219
        %3221 = vmatprep.mubr.bf16.mxu0 0
        %3222 = vmatmul.mubr.bf16.gmra.mxu0 %v2701
        %v3223 = vpop.f32.mrf.mxu0
        %v3224 = vadd.f32 %v2168, %v3223
        %v3225 = vpop.f32.mrf.mxu0
        %v3226 = vadd.f32 %v2168, %v3225
        %v3227 = vpop.f32.mrf.mxu0
        %v3228 = vadd.f32 %v2173, %v3227
        %v3229 = vpop.f32.mrf.mxu0
        %v3230 = vadd.f32 %v2173, %v3229
        %3231 = vmatprep.mubr.bf16.mxu0 0
        %3232 = vmatmul.mubr.bf16.gmra.mxu0 %v2702
        %v3233 = vpop.f32.mrf.mxu0
        %v3234 = vadd.f32 %v2178, %v3233
        %v3235 = vpop.f32.mrf.mxu0
        %v3236 = vadd.f32 %v2178, %v3235
        %v3237 = vpop.f32.mrf.mxu0
        %v3238 = vadd.f32 %v2183, %v3237
        %v3239 = vpop.f32.mrf.mxu0
        %v3240 = vadd.f32 %v2183, %v3239
        %3241 = vmatprep.mubr.bf16.mxu0 0
        %3242 = vmatmul.mubr.bf16.gmra.mxu0 %v2703
        %v3243 = vpop.f32.mrf.mxu0
        %v3244 = vadd.f32 %v2188, %v3243
        %v3245 = vpop.f32.mrf.mxu0
        %v3246 = vadd.f32 %v2188, %v3245
        %v3247 = vpop.f32.mrf.mxu0
        %v3248 = vadd.f32 %v2193, %v3247
        %v3249 = vpop.f32.mrf.mxu0
        %v3250 = vadd.f32 %v2193, %v3249
        %3251 = vmatprep.mubr.bf16.mxu0 0
        %3252 = vmatmul.mubr.bf16.gmra.mxu0 %v2704
        %v3253 = vpop.f32.mrf.mxu0
        %v3254 = vadd.f32 %v2198, %v3253
        %v3255 = vpop.f32.mrf.mxu0
        %v3256 = vadd.f32 %v2198, %v3255
        %v3257 = vpop.f32.mrf.mxu0
        %v3258 = vadd.f32 %v2203, %v3257
        %v3259 = vpop.f32.mrf.mxu0
        %v3260 = vadd.f32 %v2203, %v3259
        %3261 = vmatprep.mubr.bf16.mxu0 0
        %3262 = vmatmul.mubr.bf16.gmra.mxu0 %v2705
        %v3263 = vpop.f32.mrf.mxu0
        %v3264 = vadd.f32 %v2208, %v3263
        %v3265 = vpop.f32.mrf.mxu0
        %v3266 = vadd.f32 %v2208, %v3265
        %v3267 = vpop.f32.mrf.mxu0
        %v3268 = vadd.f32 %v2213, %v3267
        %v3269 = vpop.f32.mrf.mxu0
        %v3270 = vadd.f32 %v2213, %v3269
        %3271 = vmatprep.mubr.bf16.mxu0 0
        %3272 = vmatmul.mubr.bf16.gmra.mxu0 %v2706
        %v3273 = vpop.f32.mrf.mxu0
        %v3274 = vadd.f32 %v2218, %v3273
        %v3275 = vpop.f32.mrf.mxu0
        %v3276 = vadd.f32 %v2218, %v3275
        %v3277 = vpop.f32.mrf.mxu0
        %v3278 = vadd.f32 %v2223, %v3277
        %v3279 = vpop.f32.mrf.mxu0
        %v3280 = vadd.f32 %v2223, %v3279
        %3281 = vmatprep.mubr.bf16.mxu0 0
        %3282 = vmatmul.mubr.bf16.gmra.mxu0 %v2707
        %v3283 = vpop.f32.mrf.mxu0
        %v3284 = vadd.f32 %v2228, %v3283
        %v3285 = vpop.f32.mrf.mxu0
        %v3286 = vadd.f32 %v2228, %v3285
        %v3287 = vpop.f32.mrf.mxu0
        %v3288 = vadd.f32 %v2233, %v3287
        %v3289 = vpop.f32.mrf.mxu0
        %v3290 = vadd.f32 %v2233, %v3289
        %3291 = vmatprep.mubr.bf16.mxu0 0
        %3292 = vmatmul.mubr.bf16.gmra.mxu0 %v2708
        %v3293 = vpop.f32.mrf.mxu0
        %v3294 = vadd.f32 %v2238, %v3293
        %v3295 = vpop.f32.mrf.mxu0
        %v3296 = vadd.f32 %v2238, %v3295
        %v3297 = vpop.f32.mrf.mxu0
        %v3298 = vadd.f32 %v2243, %v3297
        %v3299 = vpop.f32.mrf.mxu0
        %v3300 = vadd.f32 %v2243, %v3299
        %3301 = vmatprep.mubr.bf16.mxu0 0
        %3302 = vmatmul.mubr.bf16.gmra.mxu0 %v2709
        %v3303 = vpop.f32.mrf.mxu0
        %v3304 = vadd.f32 %v2248, %v3303
        %v3305 = vpop.f32.mrf.mxu0
        %v3306 = vadd.f32 %v2248, %v3305
        %v3307 = vpop.f32.mrf.mxu0
        %v3308 = vadd.f32 %v2253, %v3307
        %v3309 = vpop.f32.mrf.mxu0
        %v3310 = vadd.f32 %v2253, %v3309
        %3311 = vmatprep.mubr.bf16.mxu0 0
        %3312 = vmatmul.mubr.bf16.gmra.mxu0 %v2710
        %v3313 = vpop.f32.mrf.mxu0
        %v3314 = vadd.f32 %v2258, %v3313
        %v3315 = vpop.f32.mrf.mxu0
        %v3316 = vadd.f32 %v2258, %v3315
        %v3317 = vpop.f32.mrf.mxu0
        %v3318 = vadd.f32 %v2263, %v3317
        %v3319 = vpop.f32.mrf.mxu0
        %v3320 = vadd.f32 %v2263, %v3319
        %3321 = vmatprep.mubr.bf16.mxu0 0
        %3322 = vmatmul.mubr.bf16.gmra.mxu0 %v2711
        %v3323 = vpop.f32.mrf.mxu0
        %v3324 = vadd.f32 %v2268, %v3323
        %v3325 = vpop.f32.mrf.mxu0
        %v3326 = vadd.f32 %v2268, %v3325
        %v3327 = vpop.f32.mrf.mxu0
        %v3328 = vadd.f32 %v2273, %v3327
        %v3329 = vpop.f32.mrf.mxu0
        %v3330 = vadd.f32 %v2273, %v3329
        %3331 = vmatprep.mubr.bf16.mxu0 0
        %3332 = vmatmul.mubr.bf16.gmra.mxu0 %v2712
        %v3333 = vpop.f32.mrf.mxu0
        %v3334 = vadd.f32 %v2278, %v3333
        %v3335 = vpop.f32.mrf.mxu0
        %v3336 = vadd.f32 %v2278, %v3335
        %v3337 = vpop.f32.mrf.mxu0
        %v3338 = vadd.f32 %v2283, %v3337
        %v3339 = vpop.f32.mrf.mxu0
        %v3340 = vadd.f32 %v2283, %v3339
        %3341 = vmatprep.mubr.bf16.mxu0 0
        %3342 = vmatmul.mubr.bf16.gmra.mxu0 %v2713
        %v3343 = vpop.f32.mrf.mxu0
        %v3344 = vadd.f32 %v2288, %v3343
        %v3345 = vpop.f32.mrf.mxu0
        %v3346 = vadd.f32 %v2288, %v3345
        %v3347 = vpop.f32.mrf.mxu0
        %v3348 = vadd.f32 %v2293, %v3347
        %v3349 = vpop.f32.mrf.mxu0
        %v3350 = vadd.f32 %v2293, %v3349
        %3351 = vmatprep.mubr.bf16.mxu0 0
        %3352 = vmatmul.mubr.bf16.gmra.mxu0 %v2714
        %v3353 = vpop.f32.mrf.mxu0
        %v3354 = vadd.f32 %v2298, %v3353
        %v3355 = vpop.f32.mrf.mxu0
        %v3356 = vadd.f32 %v2298, %v3355
        %v3357 = vpop.f32.mrf.mxu0
        %v3358 = vadd.f32 %v2303, %v3357
        %v3359 = vpop.f32.mrf.mxu0
        %v3360 = vadd.f32 %v2303, %v3359
        %3361 = vmatprep.mubr.bf16.mxu0 0
        %3362 = vmatmul.mubr.bf16.gmra.mxu0 %v2715
        %v3363 = vpop.f32.mrf.mxu0
        %v3364 = vadd.f32 %v2308, %v3363
        %v3365 = vpop.f32.mrf.mxu0
        %v3366 = vadd.f32 %v2308, %v3365
        %v3367 = vpop.f32.mrf.mxu0
        %v3368 = vadd.f32 %v2313, %v3367
        %v3369 = vpop.f32.mrf.mxu0
        %v3370 = vadd.f32 %v2313, %v3369
        %3371 = vmatprep.mubr.bf16.mxu0 0
        %3372 = vmatmul.mubr.bf16.gmra.mxu0 %v2716
        %v3373 = vpop.f32.mrf.mxu0
        %v3374 = vadd.f32 %v2318, %v3373
        %v3375 = vpop.f32.mrf.mxu0
        %v3376 = vadd.f32 %v2318, %v3375
        %v3377 = vpop.f32.mrf.mxu0
        %v3378 = vadd.f32 %v2323, %v3377
        %v3379 = vpop.f32.mrf.mxu0
        %v3380 = vadd.f32 %v2323, %v3379
        %3381 = vmatprep.mubr.bf16.mxu0 0
        %3382 = vmatmul.mubr.bf16.gmra.mxu0 %v2717
        %v3383 = vpop.f32.mrf.mxu0
        %v3384 = vadd.f32 %v2328, %v3383
        %v3385 = vpop.f32.mrf.mxu0
        %v3386 = vadd.f32 %v2328, %v3385
        %v3387 = vpop.f32.mrf.mxu0
        %v3388 = vadd.f32 %v2333, %v3387
        %v3389 = vpop.f32.mrf.mxu0
        %v3390 = vadd.f32 %v2333, %v3389
        %3391 = vmatprep.mubr.bf16.mxu0 0
        %3392 = vmatmul.mubr.bf16.gmra.mxu0 %v2718
        %v3393 = vpop.f32.mrf.mxu0
        %v3394 = vadd.f32 %v2338, %v3393
        %v3395 = vpop.f32.mrf.mxu0
        %v3396 = vadd.f32 %v2338, %v3395
        %v3397 = vpop.f32.mrf.mxu0
        %v3398 = vadd.f32 %v2343, %v3397
        %v3399 = vpop.f32.mrf.mxu0
        %v3400 = vadd.f32 %v2343, %v3399
        %3401 = vmatprep.mubr.bf16.mxu0 0
        %3402 = vmatmul.mubr.bf16.gmra.mxu0 %v2719
        %v3403 = vpop.f32.mrf.mxu0
        %v3404 = vadd.f32 %v2348, %v3403
        %v3405 = vpop.f32.mrf.mxu0
        %v3406 = vadd.f32 %v2348, %v3405
        %v3407 = vpop.f32.mrf.mxu0
        %v3408 = vadd.f32 %v2353, %v3407
        %v3409 = vpop.f32.mrf.mxu0
        %v3410 = vadd.f32 %v2353, %v3409
        %3411 = vmatprep.mubr.bf16.mxu0 0
        %3412 = vmatmul.mubr.bf16.gmra.mxu0 %v2720
        %v3413 = vpop.f32.mrf.mxu0
        %v3414 = vadd.f32 %v2358, %v3413
        %v3415 = vpop.f32.mrf.mxu0
        %v3416 = vadd.f32 %v2358, %v3415
        %v3417 = vpop.f32.mrf.mxu0
        %v3418 = vadd.f32 %v2363, %v3417
        %v3419 = vpop.f32.mrf.mxu0
        %v3420 = vadd.f32 %v2363, %v3419
        %3421 = vmatprep.mubr.bf16.mxu0 0
        %3422 = vmatmul.mubr.bf16.gmra.mxu0 %v2721
        %v3423 = vpop.f32.mrf.mxu0
        %v3424 = vadd.f32 %v2368, %v3423
        %v3425 = vpop.f32.mrf.mxu0
        %v3426 = vadd.f32 %v2368, %v3425
        %v3427 = vpop.f32.mrf.mxu0
        %v3428 = vadd.f32 %v2373, %v3427
        %v3429 = vpop.f32.mrf.mxu0
        %v3430 = vadd.f32 %v2373, %v3429
        %3431 = vmatprep.mubr.bf16.mxu0 0
        %3432 = vmatmul.mubr.bf16.gmra.mxu0 %v2722
        %v3433 = vpop.f32.mrf.mxu0
        %v3434 = vadd.f32 %v2378, %v3433
        %v3435 = vpop.f32.mrf.mxu0
        %v3436 = vadd.f32 %v2378, %v3435
        %v3437 = vpop.f32.mrf.mxu0
        %v3438 = vadd.f32 %v2383, %v3437
        %v3439 = vpop.f32.mrf.mxu0
        %v3440 = vadd.f32 %v2383, %v3439
        %3441 = vmatprep.mubr.bf16.mxu0 0
        %3442 = vmatmul.mubr.bf16.gmra.mxu0 %v2723
        %v3443 = vpop.f32.mrf.mxu0
        %v3444 = vadd.f32 %v2388, %v3443
        %v3445 = vpop.f32.mrf.mxu0
        %v3446 = vadd.f32 %v2388, %v3445
        %v3447 = vpop.f32.mrf.mxu0
        %v3448 = vadd.f32 %v2393, %v3447
        %v3449 = vpop.f32.mrf.mxu0
        %v3450 = vadd.f32 %v2393, %v3449
        %3451 = vmatprep.mubr.bf16.mxu0 0
        %3452 = vmatmul.mubr.bf16.gmra.mxu0 %v2724
        %v3453 = vpop.f32.mrf.mxu0
        %v3454 = vadd.f32 %v2398, %v3453
        %v3455 = vpop.f32.mrf.mxu0
        %v3456 = vadd.f32 %v2398, %v3455
        %v3457 = vpop.f32.mrf.mxu0
        %v3458 = vadd.f32 %v2403, %v3457
        %v3459 = vpop.f32.mrf.mxu0
        %v3460 = vadd.f32 %v2403, %v3459
        %3461 = vdwg.mxu0
        %v3462 = vmax.f32 %v2824, 0.0
        %v3463 = vmax.f32 %v2826, 0.0
        %v3464 = vmax.f32 %v2828, 0.0
        %v3465 = vmax.f32 %v2830, 0.0
        %v3466 = vmax.f32 %v2834, 0.0
        %v3467 = vmax.f32 %v2836, 0.0
        %v3468 = vmax.f32 %v2838, 0.0
        %v3469 = vmax.f32 %v2840, 0.0
        %v3470 = vmax.f32 %v2844, 0.0
        %v3471 = vmax.f32 %v2846, 0.0
        %v3472 = vmax.f32 %v2848, 0.0
        %v3473 = vmax.f32 %v2850, 0.0
        %v3474 = vmax.f32 %v2854, 0.0
        %v3475 = vmax.f32 %v2856, 0.0
        %v3476 = vmax.f32 %v2858, 0.0
        %v3477 = vmax.f32 %v2860, 0.0
        %v3478 = vmax.f32 %v2864, 0.0
        %v3479 = vmax.f32 %v2866, 0.0
        %v3480 = vmax.f32 %v2868, 0.0
        %v3481 = vmax.f32 %v2870, 0.0
        %v3482 = vmax.f32 %v2874, 0.0
        %v3483 = vmax.f32 %v2876, 0.0
        %v3484 = vmax.f32 %v2878, 0.0
        %v3485 = vmax.f32 %v2880, 0.0
        %v3486 = vmax.f32 %v2884, 0.0
        %v3487 = vmax.f32 %v2886, 0.0
        %v3488 = vmax.f32 %v2888, 0.0
        %v3489 = vmax.f32 %v2890, 0.0
        %v3490 = vmax.f32 %v2894, 0.0
        %v3491 = vmax.f32 %v2896, 0.0
        %v3492 = vmax.f32 %v2898, 0.0
        %v3493 = vmax.f32 %v2900, 0.0
        %v3494 = vmax.f32 %v2904, 0.0
        %v3495 = vmax.f32 %v2906, 0.0
        %v3496 = vmax.f32 %v2908, 0.0
        %v3497 = vmax.f32 %v2910, 0.0
        %v3498 = vmax.f32 %v2914, 0.0
        %v3499 = vmax.f32 %v2916, 0.0
        %v3500 = vmax.f32 %v2918, 0.0
        %v3501 = vmax.f32 %v2920, 0.0
        %v3502 = vmax.f32 %v2924, 0.0
        %v3503 = vmax.f32 %v2926, 0.0
        %v3504 = vmax.f32 %v2928, 0.0
        %v3505 = vmax.f32 %v2930, 0.0
        %v3506 = vmax.f32 %v2934, 0.0
        %v3507 = vmax.f32 %v2936, 0.0
        %v3508 = vmax.f32 %v2938, 0.0
        %v3509 = vmax.f32 %v2940, 0.0
        %v3510 = vmax.f32 %v2944, 0.0
        %v3511 = vmax.f32 %v2946, 0.0
        %v3512 = vmax.f32 %v2948, 0.0
        %v3513 = vmax.f32 %v2950, 0.0
        %v3514 = vmax.f32 %v2954, 0.0
        %v3515 = vmax.f32 %v2956, 0.0
        %v3516 = vmax.f32 %v2958, 0.0
        %v3517 = vmax.f32 %v2960, 0.0
        %v3518 = vmax.f32 %v2964, 0.0
        %v3519 = vmax.f32 %v2966, 0.0
        %v3520 = vmax.f32 %v2968, 0.0
        %v3521 = vmax.f32 %v2970, 0.0
        %v3522 = vmax.f32 %v2974, 0.0
        %v3523 = vmax.f32 %v2976, 0.0
        %v3524 = vmax.f32 %v2978, 0.0
        %v3525 = vmax.f32 %v2980, 0.0
        %v3526 = vmax.f32 %v2984, 0.0
        %v3527 = vmax.f32 %v2986, 0.0
        %v3528 = vmax.f32 %v2988, 0.0
        %v3529 = vmax.f32 %v2990, 0.0
        %v3530 = vmax.f32 %v2994, 0.0
        %v3531 = vmax.f32 %v2996, 0.0
        %v3532 = vmax.f32 %v2998, 0.0
        %v3533 = vmax.f32 %v3000, 0.0
        %v3534 = vmax.f32 %v3004, 0.0
        %v3535 = vmax.f32 %v3006, 0.0
        %v3536 = vmax.f32 %v3008, 0.0
        %v3537 = vmax.f32 %v3010, 0.0
        %v3538 = vmax.f32 %v3014, 0.0
        %v3539 = vmax.f32 %v3016, 0.0
        %v3540 = vmax.f32 %v3018, 0.0
        %v3541 = vmax.f32 %v3020, 0.0
        %v3542 = vmax.f32 %v3024, 0.0
        %v3543 = vmax.f32 %v3026, 0.0
        %v3544 = vmax.f32 %v3028, 0.0
        %v3545 = vmax.f32 %v3030, 0.0
        %v3546 = vmax.f32 %v3034, 0.0
        %v3547 = vmax.f32 %v3036, 0.0
        %v3548 = vmax.f32 %v3038, 0.0
        %v3549 = vmax.f32 %v3040, 0.0
        %v3550 = vmax.f32 %v3044, 0.0
        %v3551 = vmax.f32 %v3046, 0.0
        %v3552 = vmax.f32 %v3048, 0.0
        %v3553 = vmax.f32 %v3050, 0.0
        %v3554 = vmax.f32 %v3054, 0.0
        %v3555 = vmax.f32 %v3056, 0.0
        %v3556 = vmax.f32 %v3058, 0.0
        %v3557 = vmax.f32 %v3060, 0.0
        %v3558 = vmax.f32 %v3064, 0.0
        %v3559 = vmax.f32 %v3066, 0.0
        %v3560 = vmax.f32 %v3068, 0.0
        %v3561 = vmax.f32 %v3070, 0.0
        %v3562 = vmax.f32 %v3074, 0.0
        %v3563 = vmax.f32 %v3076, 0.0
        %v3564 = vmax.f32 %v3078, 0.0
        %v3565 = vmax.f32 %v3080, 0.0
        %v3566 = vmax.f32 %v3084, 0.0
        %v3567 = vmax.f32 %v3086, 0.0
        %v3568 = vmax.f32 %v3088, 0.0
        %v3569 = vmax.f32 %v3090, 0.0
        %v3570 = vmax.f32 %v3094, 0.0
        %v3571 = vmax.f32 %v3096, 0.0
        %v3572 = vmax.f32 %v3098, 0.0
        %v3573 = vmax.f32 %v3100, 0.0
        %v3574 = vmax.f32 %v3104, 0.0
        %v3575 = vmax.f32 %v3106, 0.0
        %v3576 = vmax.f32 %v3108, 0.0
        %v3577 = vmax.f32 %v3110, 0.0
        %v3578 = vmax.f32 %v3114, 0.0
        %v3579 = vmax.f32 %v3116, 0.0
        %v3580 = vmax.f32 %v3118, 0.0
        %v3581 = vmax.f32 %v3120, 0.0
        %v3582 = vmax.f32 %v3124, 0.0
        %v3583 = vmax.f32 %v3126, 0.0
        %v3584 = vmax.f32 %v3128, 0.0
        %v3585 = vmax.f32 %v3130, 0.0
        %v3586 = vmax.f32 %v3134, 0.0
        %v3587 = vmax.f32 %v3136, 0.0
        %v3588 = vmax.f32 %v3138, 0.0
        %v3589 = vmax.f32 %v3140, 0.0
        %v3590 = vmax.f32 %v3144, 0.0
        %v3591 = vmax.f32 %v3146, 0.0
        %v3592 = vmax.f32 %v3148, 0.0
        %v3593 = vmax.f32 %v3150, 0.0
        %v3594 = vmax.f32 %v3154, 0.0
        %v3595 = vmax.f32 %v3156, 0.0
        %v3596 = vmax.f32 %v3158, 0.0
        %v3597 = vmax.f32 %v3160, 0.0
        %v3598 = vmax.f32 %v3164, 0.0
        %v3599 = vmax.f32 %v3166, 0.0
        %v3600 = vmax.f32 %v3168, 0.0
        %v3601 = vmax.f32 %v3170, 0.0
        %v3602 = vmax.f32 %v3174, 0.0
        %v3603 = vmax.f32 %v3176, 0.0
        %v3604 = vmax.f32 %v3178, 0.0
        %v3605 = vmax.f32 %v3180, 0.0
        %v3606 = vmax.f32 %v3184, 0.0
        %v3607 = vmax.f32 %v3186, 0.0
        %v3608 = vmax.f32 %v3188, 0.0
        %v3609 = vmax.f32 %v3190, 0.0
        %v3610 = vmax.f32 %v3194, 0.0
        %v3611 = vmax.f32 %v3196, 0.0
        %v3612 = vmax.f32 %v3198, 0.0
        %v3613 = vmax.f32 %v3200, 0.0
        %v3614 = vmax.f32 %v3204, 0.0
        %v3615 = vmax.f32 %v3206, 0.0
        %v3616 = vmax.f32 %v3208, 0.0
        %v3617 = vmax.f32 %v3210, 0.0
        %v3618 = vmax.f32 %v3214, 0.0
        %v3619 = vmax.f32 %v3216, 0.0
        %v3620 = vmax.f32 %v3218, 0.0
        %v3621 = vmax.f32 %v3220, 0.0
        %v3622 = vmax.f32 %v3224, 0.0
        %v3623 = vmax.f32 %v3226, 0.0
        %v3624 = vmax.f32 %v3228, 0.0
        %v3625 = vmax.f32 %v3230, 0.0
        %v3626 = vmax.f32 %v3234, 0.0
        %v3627 = vmax.f32 %v3236, 0.0
        %v3628 = vmax.f32 %v3238, 0.0
        %v3629 = vmax.f32 %v3240, 0.0
        %v3630 = vmax.f32 %v3244, 0.0
        %v3631 = vmax.f32 %v3246, 0.0
        %v3632 = vmax.f32 %v3248, 0.0
        %v3633 = vmax.f32 %v3250, 0.0
        %v3634 = vmax.f32 %v3254, 0.0
        %v3635 = vmax.f32 %v3256, 0.0
        %v3636 = vmax.f32 %v3258, 0.0
        %v3637 = vmax.f32 %v3260, 0.0
        %v3638 = vmax.f32 %v3264, 0.0
        %v3639 = vmax.f32 %v3266, 0.0
        %v3640 = vmax.f32 %v3268, 0.0
        %v3641 = vmax.f32 %v3270, 0.0
        %v3642 = vmax.f32 %v3274, 0.0
        %v3643 = vmax.f32 %v3276, 0.0
        %v3644 = vmax.f32 %v3278, 0.0
        %v3645 = vmax.f32 %v3280, 0.0
        %v3646 = vmax.f32 %v3284, 0.0
        %v3647 = vmax.f32 %v3286, 0.0
        %v3648 = vmax.f32 %v3288, 0.0
        %v3649 = vmax.f32 %v3290, 0.0
        %v3650 = vmax.f32 %v3294, 0.0
        %v3651 = vmax.f32 %v3296, 0.0
        %v3652 = vmax.f32 %v3298, 0.0
        %v3653 = vmax.f32 %v3300, 0.0
        %v3654 = vmax.f32 %v3304, 0.0
        %v3655 = vmax.f32 %v3306, 0.0
        %v3656 = vmax.f32 %v3308, 0.0
        %v3657 = vmax.f32 %v3310, 0.0
        %v3658 = vmax.f32 %v3314, 0.0
        %v3659 = vmax.f32 %v3316, 0.0
        %v3660 = vmax.f32 %v3318, 0.0
        %v3661 = vmax.f32 %v3320, 0.0
        %v3662 = vmax.f32 %v3324, 0.0
        %v3663 = vmax.f32 %v3326, 0.0
        %v3664 = vmax.f32 %v3328, 0.0
        %v3665 = vmax.f32 %v3330, 0.0
        %v3666 = vmax.f32 %v3334, 0.0
        %v3667 = vmax.f32 %v3336, 0.0
        %v3668 = vmax.f32 %v3338, 0.0
        %v3669 = vmax.f32 %v3340, 0.0
        %v3670 = vmax.f32 %v3344, 0.0
        %v3671 = vmax.f32 %v3346, 0.0
        %v3672 = vmax.f32 %v3348, 0.0
        %v3673 = vmax.f32 %v3350, 0.0
        %v3674 = vmax.f32 %v3354, 0.0
        %v3675 = vmax.f32 %v3356, 0.0
        %v3676 = vmax.f32 %v3358, 0.0
        %v3677 = vmax.f32 %v3360, 0.0
        %v3678 = vmax.f32 %v3364, 0.0
        %v3679 = vmax.f32 %v3366, 0.0
        %v3680 = vmax.f32 %v3368, 0.0
        %v3681 = vmax.f32 %v3370, 0.0
        %v3682 = vmax.f32 %v3374, 0.0
        %v3683 = vmax.f32 %v3376, 0.0
        %v3684 = vmax.f32 %v3378, 0.0
        %v3685 = vmax.f32 %v3380, 0.0
        %v3686 = vmax.f32 %v3384, 0.0
        %v3687 = vmax.f32 %v3386, 0.0
        %v3688 = vmax.f32 %v3388, 0.0
        %v3689 = vmax.f32 %v3390, 0.0
        %v3690 = vmax.f32 %v3394, 0.0
        %v3691 = vmax.f32 %v3396, 0.0
        %v3692 = vmax.f32 %v3398, 0.0
        %v3693 = vmax.f32 %v3400, 0.0
        %v3694 = vmax.f32 %v3404, 0.0
        %v3695 = vmax.f32 %v3406, 0.0
        %v3696 = vmax.f32 %v3408, 0.0
        %v3697 = vmax.f32 %v3410, 0.0
        %v3698 = vmax.f32 %v3414, 0.0
        %v3699 = vmax.f32 %v3416, 0.0
        %v3700 = vmax.f32 %v3418, 0.0
        %v3701 = vmax.f32 %v3420, 0.0
        %v3702 = vmax.f32 %v3424, 0.0
        %v3703 = vmax.f32 %v3426, 0.0
        %v3704 = vmax.f32 %v3428, 0.0
        %v3705 = vmax.f32 %v3430, 0.0
        %v3706 = vmax.f32 %v3434, 0.0
        %v3707 = vmax.f32 %v3436, 0.0
        %v3708 = vmax.f32 %v3438, 0.0
        %v3709 = vmax.f32 %v3440, 0.0
        %v3710 = vmax.f32 %v3444, 0.0
        %v3711 = vmax.f32 %v3446, 0.0
        %v3712 = vmax.f32 %v3448, 0.0
        %v3713 = vmax.f32 %v3450, 0.0
        %v3714 = vmax.f32 %v3454, 0.0
        %v3715 = vmax.f32 %v3456, 0.0
        %v3716 = vmax.f32 %v3458, 0.0
        %v3717 = vmax.f32 %v3460, 0.0
        %v3718 = vpack.c.bf16 %v3464, %v3462
        %v3719 = vpack.c.bf16 %v3465, %v3463
        %v3720 = vpack.c.bf16 %v3468, %v3466
        %v3721 = vpack.c.bf16 %v3469, %v3467
        %v3722 = vpack.c.bf16 %v3472, %v3470
        %v3723 = vpack.c.bf16 %v3473, %v3471
        %v3724 = vpack.c.bf16 %v3476, %v3474
        %v3725 = vpack.c.bf16 %v3477, %v3475
        %v3726 = vpack.c.bf16 %v3480, %v3478
        %v3727 = vpack.c.bf16 %v3481, %v3479
        %v3728 = vpack.c.bf16 %v3484, %v3482
        %v3729 = vpack.c.bf16 %v3485, %v3483
        %v3730 = vpack.c.bf16 %v3488, %v3486
        %v3731 = vpack.c.bf16 %v3489, %v3487
        %v3732 = vpack.c.bf16 %v3492, %v3490
        %v3733 = vpack.c.bf16 %v3493, %v3491
        %v3734 = vpack.c.bf16 %v3496, %v3494
        %v3735 = vpack.c.bf16 %v3497, %v3495
        %v3736 = vpack.c.bf16 %v3500, %v3498
        %v3737 = vpack.c.bf16 %v3501, %v3499
        %v3738 = vpack.c.bf16 %v3504, %v3502
        %v3739 = vpack.c.bf16 %v3505, %v3503
        %v3740 = vpack.c.bf16 %v3508, %v3506
        %v3741 = vpack.c.bf16 %v3509, %v3507
        %v3742 = vpack.c.bf16 %v3512, %v3510
        %v3743 = vpack.c.bf16 %v3513, %v3511
        %v3744 = vpack.c.bf16 %v3516, %v3514
        %v3745 = vpack.c.bf16 %v3517, %v3515
        %v3746 = vpack.c.bf16 %v3520, %v3518
        %v3747 = vpack.c.bf16 %v3521, %v3519
        %v3748 = vpack.c.bf16 %v3524, %v3522
        %v3749 = vpack.c.bf16 %v3525, %v3523
        %v3750 = vpack.c.bf16 %v3528, %v3526
        %v3751 = vpack.c.bf16 %v3529, %v3527
        %v3752 = vpack.c.bf16 %v3532, %v3530
        %v3753 = vpack.c.bf16 %v3533, %v3531
        %v3754 = vpack.c.bf16 %v3536, %v3534
        %v3755 = vpack.c.bf16 %v3537, %v3535
        %v3756 = vpack.c.bf16 %v3540, %v3538
        %v3757 = vpack.c.bf16 %v3541, %v3539
        %v3758 = vpack.c.bf16 %v3544, %v3542
        %v3759 = vpack.c.bf16 %v3545, %v3543
        %v3760 = vpack.c.bf16 %v3548, %v3546
        %v3761 = vpack.c.bf16 %v3549, %v3547
        %v3762 = vpack.c.bf16 %v3552, %v3550
        %v3763 = vpack.c.bf16 %v3553, %v3551
        %v3764 = vpack.c.bf16 %v3556, %v3554
        %v3765 = vpack.c.bf16 %v3557, %v3555
        %v3766 = vpack.c.bf16 %v3560, %v3558
        %v3767 = vpack.c.bf16 %v3561, %v3559
        %v3768 = vpack.c.bf16 %v3564, %v3562
        %v3769 = vpack.c.bf16 %v3565, %v3563
        %v3770 = vpack.c.bf16 %v3568, %v3566
        %v3771 = vpack.c.bf16 %v3569, %v3567
        %v3772 = vpack.c.bf16 %v3572, %v3570
        %v3773 = vpack.c.bf16 %v3573, %v3571
        %v3774 = vpack.c.bf16 %v3576, %v3574
        %v3775 = vpack.c.bf16 %v3577, %v3575
        %v3776 = vpack.c.bf16 %v3580, %v3578
        %v3777 = vpack.c.bf16 %v3581, %v3579
        %v3778 = vpack.c.bf16 %v3584, %v3582
        %v3779 = vpack.c.bf16 %v3585, %v3583
        %v3780 = vpack.c.bf16 %v3588, %v3586
        %v3781 = vpack.c.bf16 %v3589, %v3587
        %v3782 = vpack.c.bf16 %v3592, %v3590
        %v3783 = vpack.c.bf16 %v3593, %v3591
        %v3784 = vpack.c.bf16 %v3596, %v3594
        %v3785 = vpack.c.bf16 %v3597, %v3595
        %v3786 = vpack.c.bf16 %v3600, %v3598
        %v3787 = vpack.c.bf16 %v3601, %v3599
        %v3788 = vpack.c.bf16 %v3604, %v3602
        %v3789 = vpack.c.bf16 %v3605, %v3603
        %v3790 = vpack.c.bf16 %v3608, %v3606
        %v3791 = vpack.c.bf16 %v3609, %v3607
        %v3792 = vpack.c.bf16 %v3612, %v3610
        %v3793 = vpack.c.bf16 %v3613, %v3611
        %v3794 = vpack.c.bf16 %v3616, %v3614
        %v3795 = vpack.c.bf16 %v3617, %v3615
        %v3796 = vpack.c.bf16 %v3620, %v3618
        %v3797 = vpack.c.bf16 %v3621, %v3619
        %v3798 = vpack.c.bf16 %v3624, %v3622
        %v3799 = vpack.c.bf16 %v3625, %v3623
        %v3800 = vpack.c.bf16 %v3628, %v3626
        %v3801 = vpack.c.bf16 %v3629, %v3627
        %v3802 = vpack.c.bf16 %v3632, %v3630
        %v3803 = vpack.c.bf16 %v3633, %v3631
        %v3804 = vpack.c.bf16 %v3636, %v3634
        %v3805 = vpack.c.bf16 %v3637, %v3635
        %v3806 = vpack.c.bf16 %v3640, %v3638
        %v3807 = vpack.c.bf16 %v3641, %v3639
        %v3808 = vpack.c.bf16 %v3644, %v3642
        %v3809 = vpack.c.bf16 %v3645, %v3643
        %v3810 = vpack.c.bf16 %v3648, %v3646
        %v3811 = vpack.c.bf16 %v3649, %v3647
        %v3812 = vpack.c.bf16 %v3652, %v3650
        %v3813 = vpack.c.bf16 %v3653, %v3651
        %v3814 = vpack.c.bf16 %v3656, %v3654
        %v3815 = vpack.c.bf16 %v3657, %v3655
        %v3816 = vpack.c.bf16 %v3660, %v3658
        %v3817 = vpack.c.bf16 %v3661, %v3659
        %v3818 = vpack.c.bf16 %v3664, %v3662
        %v3819 = vpack.c.bf16 %v3665, %v3663
        %v3820 = vpack.c.bf16 %v3668, %v3666
        %v3821 = vpack.c.bf16 %v3669, %v3667
        %v3822 = vpack.c.bf16 %v3672, %v3670
        %v3823 = vpack.c.bf16 %v3673, %v3671
        %v3824 = vpack.c.bf16 %v3676, %v3674
        %v3825 = vpack.c.bf16 %v3677, %v3675
        %v3826 = vpack.c.bf16 %v3680, %v3678
        %v3827 = vpack.c.bf16 %v3681, %v3679
        %v3828 = vpack.c.bf16 %v3684, %v3682
        %v3829 = vpack.c.bf16 %v3685, %v3683
        %v3830 = vpack.c.bf16 %v3688, %v3686
        %v3831 = vpack.c.bf16 %v3689, %v3687
        %v3832 = vpack.c.bf16 %v3692, %v3690
        %v3833 = vpack.c.bf16 %v3693, %v3691
        %v3834 = vpack.c.bf16 %v3696, %v3694
        %v3835 = vpack.c.bf16 %v3697, %v3695
        %v3836 = vpack.c.bf16 %v3700, %v3698
        %v3837 = vpack.c.bf16 %v3701, %v3699
        %v3838 = vpack.c.bf16 %v3704, %v3702
        %v3839 = vpack.c.bf16 %v3705, %v3703
        %v3840 = vpack.c.bf16 %v3708, %v3706
        %v3841 = vpack.c.bf16 %v3709, %v3707
        %v3842 = vpack.c.bf16 %v3712, %v3710
        %v3843 = vpack.c.bf16 %v3713, %v3711
        %v3844 = vpack.c.bf16 %v3716, %v3714
        %v3845 = vpack.c.bf16 %v3717, %v3715
        %v3974 = vunpack.c.l.b16 %v3718
        %v3975 = vunpack.c.l.b16 %v3719
        %v3976 = vunpack.c.h.b16 %v3718
        %v3977 = vunpack.c.h.b16 %v3719
        %v3978 = vunpack.c.l.b16 %v3720
        %v3979 = vunpack.c.l.b16 %v3721
        %v3980 = vunpack.c.h.b16 %v3720
        %v3981 = vunpack.c.h.b16 %v3721
        %v3982 = vunpack.c.l.b16 %v3722
        %v3983 = vunpack.c.l.b16 %v3723
        %v3984 = vunpack.c.h.b16 %v3722
        %v3985 = vunpack.c.h.b16 %v3723
        %v3986 = vunpack.c.l.b16 %v3724
        %v3987 = vunpack.c.l.b16 %v3725
        %v3988 = vunpack.c.h.b16 %v3724
        %v3989 = vunpack.c.h.b16 %v3725
        %v3990 = vunpack.c.l.b16 %v3726
        %v3991 = vunpack.c.l.b16 %v3727
        %v3992 = vunpack.c.h.b16 %v3726
        %v3993 = vunpack.c.h.b16 %v3727
        %v3994 = vunpack.c.l.b16 %v3728
        %v3995 = vunpack.c.l.b16 %v3729
        %v3996 = vunpack.c.h.b16 %v3728
        %v3997 = vunpack.c.h.b16 %v3729
        %v3998 = vunpack.c.l.b16 %v3730
        %v3999 = vunpack.c.l.b16 %v3731
        %v4000 = vunpack.c.h.b16 %v3730
        %v4001 = vunpack.c.h.b16 %v3731
        %v4002 = vunpack.c.l.b16 %v3732
        %v4003 = vunpack.c.l.b16 %v3733
        %v4004 = vunpack.c.h.b16 %v3732
        %v4005 = vunpack.c.h.b16 %v3733
        %v4006 = vunpack.c.l.b16 %v3734
        %v4007 = vunpack.c.l.b16 %v3735
        %v4008 = vunpack.c.h.b16 %v3734
        %v4009 = vunpack.c.h.b16 %v3735
        %v4010 = vunpack.c.l.b16 %v3736
        %v4011 = vunpack.c.l.b16 %v3737
        %v4012 = vunpack.c.h.b16 %v3736
        %v4013 = vunpack.c.h.b16 %v3737
        %v4014 = vunpack.c.l.b16 %v3738
        %v4015 = vunpack.c.l.b16 %v3739
        %v4016 = vunpack.c.h.b16 %v3738
        %v4017 = vunpack.c.h.b16 %v3739
        %v4018 = vunpack.c.l.b16 %v3740
        %v4019 = vunpack.c.l.b16 %v3741
        %v4020 = vunpack.c.h.b16 %v3740
        %v4021 = vunpack.c.h.b16 %v3741
        %v4022 = vunpack.c.l.b16 %v3742
        %v4023 = vunpack.c.l.b16 %v3743
        %v4024 = vunpack.c.h.b16 %v3742
        %v4025 = vunpack.c.h.b16 %v3743
        %v4026 = vunpack.c.l.b16 %v3744
        %v4027 = vunpack.c.l.b16 %v3745
        %v4028 = vunpack.c.h.b16 %v3744
        %v4029 = vunpack.c.h.b16 %v3745
        %v4030 = vunpack.c.l.b16 %v3746
        %v4031 = vunpack.c.l.b16 %v3747
        %v4032 = vunpack.c.h.b16 %v3746
        %v4033 = vunpack.c.h.b16 %v3747
        %v4034 = vunpack.c.l.b16 %v3748
        %v4035 = vunpack.c.l.b16 %v3749
        %v4036 = vunpack.c.h.b16 %v3748
        %v4037 = vunpack.c.h.b16 %v3749
        %v4038 = vunpack.c.l.b16 %v3750
        %v4039 = vunpack.c.l.b16 %v3751
        %v4040 = vunpack.c.h.b16 %v3750
        %v4041 = vunpack.c.h.b16 %v3751
        %v4042 = vunpack.c.l.b16 %v3752
        %v4043 = vunpack.c.l.b16 %v3753
        %v4044 = vunpack.c.h.b16 %v3752
        %v4045 = vunpack.c.h.b16 %v3753
        %v4046 = vunpack.c.l.b16 %v3754
        %v4047 = vunpack.c.l.b16 %v3755
        %v4048 = vunpack.c.h.b16 %v3754
        %v4049 = vunpack.c.h.b16 %v3755
        %v4050 = vunpack.c.l.b16 %v3756
        %v4051 = vunpack.c.l.b16 %v3757
        %v4052 = vunpack.c.h.b16 %v3756
        %v4053 = vunpack.c.h.b16 %v3757
        %v4054 = vunpack.c.l.b16 %v3758
        %v4055 = vunpack.c.l.b16 %v3759
        %v4056 = vunpack.c.h.b16 %v3758
        %v4057 = vunpack.c.h.b16 %v3759
        %v4058 = vunpack.c.l.b16 %v3760
        %v4059 = vunpack.c.l.b16 %v3761
        %v4060 = vunpack.c.h.b16 %v3760
        %v4061 = vunpack.c.h.b16 %v3761
        %v4062 = vunpack.c.l.b16 %v3762
        %v4063 = vunpack.c.l.b16 %v3763
        %v4064 = vunpack.c.h.b16 %v3762
        %v4065 = vunpack.c.h.b16 %v3763
        %v4066 = vunpack.c.l.b16 %v3764
        %v4067 = vunpack.c.l.b16 %v3765
        %v4068 = vunpack.c.h.b16 %v3764
        %v4069 = vunpack.c.h.b16 %v3765
        %v4070 = vunpack.c.l.b16 %v3766
        %v4071 = vunpack.c.l.b16 %v3767
        %v4072 = vunpack.c.h.b16 %v3766
        %v4073 = vunpack.c.h.b16 %v3767
        %v4074 = vunpack.c.l.b16 %v3768
        %v4075 = vunpack.c.l.b16 %v3769
        %v4076 = vunpack.c.h.b16 %v3768
        %v4077 = vunpack.c.h.b16 %v3769
        %v4078 = vunpack.c.l.b16 %v3770
        %v4079 = vunpack.c.l.b16 %v3771
        %v4080 = vunpack.c.h.b16 %v3770
        %v4081 = vunpack.c.h.b16 %v3771
        %v4082 = vunpack.c.l.b16 %v3772
        %v4083 = vunpack.c.l.b16 %v3773
        %v4084 = vunpack.c.h.b16 %v3772
        %v4085 = vunpack.c.h.b16 %v3773
        %v4086 = vunpack.c.l.b16 %v3774
        %v4087 = vunpack.c.l.b16 %v3775
        %v4088 = vunpack.c.h.b16 %v3774
        %v4089 = vunpack.c.h.b16 %v3775
        %v4090 = vunpack.c.l.b16 %v3776
        %v4091 = vunpack.c.l.b16 %v3777
        %v4092 = vunpack.c.h.b16 %v3776
        %v4093 = vunpack.c.h.b16 %v3777
        %v4094 = vunpack.c.l.b16 %v3778
        %v4095 = vunpack.c.l.b16 %v3779
        %v4096 = vunpack.c.h.b16 %v3778
        %v4097 = vunpack.c.h.b16 %v3779
        %v4098 = vunpack.c.l.b16 %v3780
        %v4099 = vunpack.c.l.b16 %v3781
        %v4100 = vunpack.c.h.b16 %v3780
        %v4101 = vunpack.c.h.b16 %v3781
        %v4102 = vunpack.c.l.b16 %v3782
        %v4103 = vunpack.c.l.b16 %v3783
        %v4104 = vunpack.c.h.b16 %v3782
        %v4105 = vunpack.c.h.b16 %v3783
        %v4106 = vunpack.c.l.b16 %v3784
        %v4107 = vunpack.c.l.b16 %v3785
        %v4108 = vunpack.c.h.b16 %v3784
        %v4109 = vunpack.c.h.b16 %v3785
        %v4110 = vunpack.c.l.b16 %v3786
        %v4111 = vunpack.c.l.b16 %v3787
        %v4112 = vunpack.c.h.b16 %v3786
        %v4113 = vunpack.c.h.b16 %v3787
        %v4114 = vunpack.c.l.b16 %v3788
        %v4115 = vunpack.c.l.b16 %v3789
        %v4116 = vunpack.c.h.b16 %v3788
        %v4117 = vunpack.c.h.b16 %v3789
        %v4118 = vunpack.c.l.b16 %v3790
        %v4119 = vunpack.c.l.b16 %v3791
        %v4120 = vunpack.c.h.b16 %v3790
        %v4121 = vunpack.c.h.b16 %v3791
        %v4122 = vunpack.c.l.b16 %v3792
        %v4123 = vunpack.c.l.b16 %v3793
        %v4124 = vunpack.c.h.b16 %v3792
        %v4125 = vunpack.c.h.b16 %v3793
        %v4126 = vunpack.c.l.b16 %v3794
        %v4127 = vunpack.c.l.b16 %v3795
        %v4128 = vunpack.c.h.b16 %v3794
        %v4129 = vunpack.c.h.b16 %v3795
        %v4130 = vunpack.c.l.b16 %v3796
        %v4131 = vunpack.c.l.b16 %v3797
        %v4132 = vunpack.c.h.b16 %v3796
        %v4133 = vunpack.c.h.b16 %v3797
        %v4134 = vunpack.c.l.b16 %v3798
        %v4135 = vunpack.c.l.b16 %v3799
        %v4136 = vunpack.c.h.b16 %v3798
        %v4137 = vunpack.c.h.b16 %v3799
        %v4138 = vunpack.c.l.b16 %v3800
        %v4139 = vunpack.c.l.b16 %v3801
        %v4140 = vunpack.c.h.b16 %v3800
        %v4141 = vunpack.c.h.b16 %v3801
        %v4142 = vunpack.c.l.b16 %v3802
        %v4143 = vunpack.c.l.b16 %v3803
        %v4144 = vunpack.c.h.b16 %v3802
        %v4145 = vunpack.c.h.b16 %v3803
        %v4146 = vunpack.c.l.b16 %v3804
        %v4147 = vunpack.c.l.b16 %v3805
        %v4148 = vunpack.c.h.b16 %v3804
        %v4149 = vunpack.c.h.b16 %v3805
        %v4150 = vunpack.c.l.b16 %v3806
        %v4151 = vunpack.c.l.b16 %v3807
        %v4152 = vunpack.c.h.b16 %v3806
        %v4153 = vunpack.c.h.b16 %v3807
        %v4154 = vunpack.c.l.b16 %v3808
        %v4155 = vunpack.c.l.b16 %v3809
        %v4156 = vunpack.c.h.b16 %v3808
        %v4157 = vunpack.c.h.b16 %v3809
        %v4158 = vunpack.c.l.b16 %v3810
        %v4159 = vunpack.c.l.b16 %v3811
        %v4160 = vunpack.c.h.b16 %v3810
        %v4161 = vunpack.c.h.b16 %v3811
        %v4162 = vunpack.c.l.b16 %v3812
        %v4163 = vunpack.c.l.b16 %v3813
        %v4164 = vunpack.c.h.b16 %v3812
        %v4165 = vunpack.c.h.b16 %v3813
        %v4166 = vunpack.c.l.b16 %v3814
        %v4167 = vunpack.c.l.b16 %v3815
        %v4168 = vunpack.c.h.b16 %v3814
        %v4169 = vunpack.c.h.b16 %v3815
        %v4170 = vunpack.c.l.b16 %v3816
        %v4171 = vunpack.c.l.b16 %v3817
        %v4172 = vunpack.c.h.b16 %v3816
        %v4173 = vunpack.c.h.b16 %v3817
        %v4174 = vunpack.c.l.b16 %v3818
        %v4175 = vunpack.c.l.b16 %v3819
        %v4176 = vunpack.c.h.b16 %v3818
        %v4177 = vunpack.c.h.b16 %v3819
        %v4178 = vunpack.c.l.b16 %v3820
        %v4179 = vunpack.c.l.b16 %v3821
        %v4180 = vunpack.c.h.b16 %v3820
        %v4181 = vunpack.c.h.b16 %v3821
        %v4182 = vunpack.c.l.b16 %v3822
        %v4183 = vunpack.c.l.b16 %v3823
        %v4184 = vunpack.c.h.b16 %v3822
        %v4185 = vunpack.c.h.b16 %v3823
        %v4186 = vunpack.c.l.b16 %v3824
        %v4187 = vunpack.c.l.b16 %v3825
        %v4188 = vunpack.c.h.b16 %v3824
        %v4189 = vunpack.c.h.b16 %v3825
        %v4190 = vunpack.c.l.b16 %v3826
        %v4191 = vunpack.c.l.b16 %v3827
        %v4192 = vunpack.c.h.b16 %v3826
        %v4193 = vunpack.c.h.b16 %v3827
        %v4194 = vunpack.c.l.b16 %v3828
        %v4195 = vunpack.c.l.b16 %v3829
        %v4196 = vunpack.c.h.b16 %v3828
        %v4197 = vunpack.c.h.b16 %v3829
        %v4198 = vunpack.c.l.b16 %v3830
        %v4199 = vunpack.c.l.b16 %v3831
        %v4200 = vunpack.c.h.b16 %v3830
        %v4201 = vunpack.c.h.b16 %v3831
        %v4202 = vunpack.c.l.b16 %v3832
        %v4203 = vunpack.c.l.b16 %v3833
        %v4204 = vunpack.c.h.b16 %v3832
        %v4205 = vunpack.c.h.b16 %v3833
        %v4206 = vunpack.c.l.b16 %v3834
        %v4207 = vunpack.c.l.b16 %v3835
        %v4208 = vunpack.c.h.b16 %v3834
        %v4209 = vunpack.c.h.b16 %v3835
        %v4210 = vunpack.c.l.b16 %v3836
        %v4211 = vunpack.c.l.b16 %v3837
        %v4212 = vunpack.c.h.b16 %v3836
        %v4213 = vunpack.c.h.b16 %v3837
        %v4214 = vunpack.c.l.b16 %v3838
        %v4215 = vunpack.c.l.b16 %v3839
        %v4216 = vunpack.c.h.b16 %v3838
        %v4217 = vunpack.c.h.b16 %v3839
        %v4218 = vunpack.c.l.b16 %v3840
        %v4219 = vunpack.c.l.b16 %v3841
        %v4220 = vunpack.c.h.b16 %v3840
        %v4221 = vunpack.c.h.b16 %v3841
        %v4222 = vunpack.c.l.b16 %v3842
        %v4223 = vunpack.c.l.b16 %v3843
        %v4224 = vunpack.c.h.b16 %v3842
        %v4225 = vunpack.c.h.b16 %v3843
        %v4226 = vunpack.c.l.b16 %v3844
        %v4227 = vunpack.c.l.b16 %v3845
        %v4228 = vunpack.c.h.b16 %v3844
        %v4229 = vunpack.c.h.b16 %v3845
        %v4230 = vpack.c.b16 %v3975, %v3974
        %v4231 = vpack.c.b16 %v3977, %v3976
        %v4232 = vpack.c.b16 %v3979, %v3978
        %v4233 = vpack.c.b16 %v3981, %v3980
        %v4234 = vpack.c.b16 %v3983, %v3982
        %v4235 = vpack.c.b16 %v3985, %v3984
        %v4236 = vpack.c.b16 %v3987, %v3986
        %v4237 = vpack.c.b16 %v3989, %v3988
        %v4238 = vpack.c.b16 %v3991, %v3990
        %v4239 = vpack.c.b16 %v3993, %v3992
        %v4240 = vpack.c.b16 %v3995, %v3994
        %v4241 = vpack.c.b16 %v3997, %v3996
        %v4242 = vpack.c.b16 %v3999, %v3998
        %v4243 = vpack.c.b16 %v4001, %v4000
        %v4244 = vpack.c.b16 %v4003, %v4002
        %v4245 = vpack.c.b16 %v4005, %v4004
        %v4246 = vpack.c.b16 %v4007, %v4006
        %v4247 = vpack.c.b16 %v4009, %v4008
        %v4248 = vpack.c.b16 %v4011, %v4010
        %v4249 = vpack.c.b16 %v4013, %v4012
        %v4250 = vpack.c.b16 %v4015, %v4014
        %v4251 = vpack.c.b16 %v4017, %v4016
        %v4252 = vpack.c.b16 %v4019, %v4018
        %v4253 = vpack.c.b16 %v4021, %v4020
        %v4254 = vpack.c.b16 %v4023, %v4022
        %v4255 = vpack.c.b16 %v4025, %v4024
        %v4256 = vpack.c.b16 %v4027, %v4026
        %v4257 = vpack.c.b16 %v4029, %v4028
        %v4258 = vpack.c.b16 %v4031, %v4030
        %v4259 = vpack.c.b16 %v4033, %v4032
        %v4260 = vpack.c.b16 %v4035, %v4034
        %v4261 = vpack.c.b16 %v4037, %v4036
        %v4262 = vpack.c.b16 %v4039, %v4038
        %v4263 = vpack.c.b16 %v4041, %v4040
        %v4264 = vpack.c.b16 %v4043, %v4042
        %v4265 = vpack.c.b16 %v4045, %v4044
        %v4266 = vpack.c.b16 %v4047, %v4046
        %v4267 = vpack.c.b16 %v4049, %v4048
        %v4268 = vpack.c.b16 %v4051, %v4050
        %v4269 = vpack.c.b16 %v4053, %v4052
        %v4270 = vpack.c.b16 %v4055, %v4054
        %v4271 = vpack.c.b16 %v4057, %v4056
        %v4272 = vpack.c.b16 %v4059, %v4058
        %v4273 = vpack.c.b16 %v4061, %v4060
        %v4274 = vpack.c.b16 %v4063, %v4062
        %v4275 = vpack.c.b16 %v4065, %v4064
        %v4276 = vpack.c.b16 %v4067, %v4066
        %v4277 = vpack.c.b16 %v4069, %v4068
        %v4278 = vpack.c.b16 %v4071, %v4070
        %v4279 = vpack.c.b16 %v4073, %v4072
        %v4280 = vpack.c.b16 %v4075, %v4074
        %v4281 = vpack.c.b16 %v4077, %v4076
        %v4282 = vpack.c.b16 %v4079, %v4078
        %v4283 = vpack.c.b16 %v4081, %v4080
        %v4284 = vpack.c.b16 %v4083, %v4082
        %v4285 = vpack.c.b16 %v4085, %v4084
        %v4286 = vpack.c.b16 %v4087, %v4086
        %v4287 = vpack.c.b16 %v4089, %v4088
        %v4288 = vpack.c.b16 %v4091, %v4090
        %v4289 = vpack.c.b16 %v4093, %v4092
        %v4290 = vpack.c.b16 %v4095, %v4094
        %v4291 = vpack.c.b16 %v4097, %v4096
        %v4292 = vpack.c.b16 %v4099, %v4098
        %v4293 = vpack.c.b16 %v4101, %v4100
        %v4294 = vpack.c.b16 %v4103, %v4102
        %v4295 = vpack.c.b16 %v4105, %v4104
        %v4296 = vpack.c.b16 %v4107, %v4106
        %v4297 = vpack.c.b16 %v4109, %v4108
        %v4298 = vpack.c.b16 %v4111, %v4110
        %v4299 = vpack.c.b16 %v4113, %v4112
        %v4300 = vpack.c.b16 %v4115, %v4114
        %v4301 = vpack.c.b16 %v4117, %v4116
        %v4302 = vpack.c.b16 %v4119, %v4118
        %v4303 = vpack.c.b16 %v4121, %v4120
        %v4304 = vpack.c.b16 %v4123, %v4122
        %v4305 = vpack.c.b16 %v4125, %v4124
        %v4306 = vpack.c.b16 %v4127, %v4126
        %v4307 = vpack.c.b16 %v4129, %v4128
        %v4308 = vpack.c.b16 %v4131, %v4130
        %v4309 = vpack.c.b16 %v4133, %v4132
        %v4310 = vpack.c.b16 %v4135, %v4134
        %v4311 = vpack.c.b16 %v4137, %v4136
        %v4312 = vpack.c.b16 %v4139, %v4138
        %v4313 = vpack.c.b16 %v4141, %v4140
        %v4314 = vpack.c.b16 %v4143, %v4142
        %v4315 = vpack.c.b16 %v4145, %v4144
        %v4316 = vpack.c.b16 %v4147, %v4146
        %v4317 = vpack.c.b16 %v4149, %v4148
        %v4318 = vpack.c.b16 %v4151, %v4150
        %v4319 = vpack.c.b16 %v4153, %v4152
        %v4320 = vpack.c.b16 %v4155, %v4154
        %v4321 = vpack.c.b16 %v4157, %v4156
        %v4322 = vpack.c.b16 %v4159, %v4158
        %v4323 = vpack.c.b16 %v4161, %v4160
        %v4324 = vpack.c.b16 %v4163, %v4162
        %v4325 = vpack.c.b16 %v4165, %v4164
        %v4326 = vpack.c.b16 %v4167, %v4166
        %v4327 = vpack.c.b16 %v4169, %v4168
        %v4328 = vpack.c.b16 %v4171, %v4170
        %v4329 = vpack.c.b16 %v4173, %v4172
        %v4330 = vpack.c.b16 %v4175, %v4174
        %v4331 = vpack.c.b16 %v4177, %v4176
        %v4332 = vpack.c.b16 %v4179, %v4178
        %v4333 = vpack.c.b16 %v4181, %v4180
        %v4334 = vpack.c.b16 %v4183, %v4182
        %v4335 = vpack.c.b16 %v4185, %v4184
        %v4336 = vpack.c.b16 %v4187, %v4186
        %v4337 = vpack.c.b16 %v4189, %v4188
        %v4338 = vpack.c.b16 %v4191, %v4190
        %v4339 = vpack.c.b16 %v4193, %v4192
        %v4340 = vpack.c.b16 %v4195, %v4194
        %v4341 = vpack.c.b16 %v4197, %v4196
        %v4342 = vpack.c.b16 %v4199, %v4198
        %v4343 = vpack.c.b16 %v4201, %v4200
        %v4344 = vpack.c.b16 %v4203, %v4202
        %v4345 = vpack.c.b16 %v4205, %v4204
        %v4346 = vpack.c.b16 %v4207, %v4206
        %v4347 = vpack.c.b16 %v4209, %v4208
        %v4348 = vpack.c.b16 %v4211, %v4210
        %v4349 = vpack.c.b16 %v4213, %v4212
        %v4350 = vpack.c.b16 %v4215, %v4214
        %v4351 = vpack.c.b16 %v4217, %v4216
        %v4352 = vpack.c.b16 %v4219, %v4218
        %v4353 = vpack.c.b16 %v4221, %v4220
        %v4354 = vpack.c.b16 %v4223, %v4222
        %v4355 = vpack.c.b16 %v4225, %v4224
        %v4356 = vpack.c.b16 %v4227, %v4226
        %v4357 = vpack.c.b16 %v4229, %v4228
        %4486 = vst [vmem:[%s434] sm:$0xff] %v4230
        %4487 = vst [vmem:[%s434 + $0x8] sm:$0xff] %v4231
        %4488 = vst [vmem:[%s434 + $0x10] sm:$0xff] %v4232
        %4489 = vst [vmem:[%s434 + $0x18] sm:$0xff] %v4233
        %4490 = vst [vmem:[%s434 + $0x20] sm:$0xff] %v4234
        %4491 = vst [vmem:[%s434 + $0x28] sm:$0xff] %v4235
        %4492 = vst [vmem:[%s434 + $0x30] sm:$0xff] %v4236
        %4493 = vst [vmem:[%s434 + $0x38] sm:$0xff] %v4237
        %4494 = vst [vmem:[%s434 + $0x40] sm:$0xff] %v4238
        %4495 = vst [vmem:[%s434 + $0x48] sm:$0xff] %v4239
        %4496 = vst [vmem:[%s434 + $0x50] sm:$0xff] %v4240
        %4497 = vst [vmem:[%s434 + $0x58] sm:$0xff] %v4241
        %4498 = vst [vmem:[%s434 + $0x60] sm:$0xff] %v4242
        %4499 = vst [vmem:[%s434 + $0x68] sm:$0xff] %v4243
        %4500 = vst [vmem:[%s434 + $0x70] sm:$0xff] %v4244
        %4501 = vst [vmem:[%s434 + $0x78] sm:$0xff] %v4245
        %4502 = vst [vmem:[%s434 + $0x80] sm:$0xff] %v4246
        %4503 = vst [vmem:[%s434 + $0x88] sm:$0xff] %v4247
        %4504 = vst [vmem:[%s434 + $0x90] sm:$0xff] %v4248
        %4505 = vst [vmem:[%s434 + $0x98] sm:$0xff] %v4249
        %4506 = vst [vmem:[%s434 + $0xa0] sm:$0xff] %v4250
        %4507 = vst [vmem:[%s434 + $0xa8] sm:$0xff] %v4251
        %4508 = vst [vmem:[%s434 + $0xb0] sm:$0xff] %v4252
        %4509 = vst [vmem:[%s434 + $0xb8] sm:$0xff] %v4253
        %4510 = vst [vmem:[%s434 + $0xc0] sm:$0xff] %v4254
        %4511 = vst [vmem:[%s434 + $0xc8] sm:$0xff] %v4255
        %4512 = vst [vmem:[%s434 + $0xd0] sm:$0xff] %v4256
        %4513 = vst [vmem:[%s434 + $0xd8] sm:$0xff] %v4257
        %4514 = vst [vmem:[%s434 + $0xe0] sm:$0xff] %v4258
        %4515 = vst [vmem:[%s434 + $0xe8] sm:$0xff] %v4259
        %4516 = vst [vmem:[%s434 + $0xf0] sm:$0xff] %v4260
        %4517 = vst [vmem:[%s434 + $0xf8] sm:$0xff] %v4261
        %4518 = vst [vmem:[%s434 + $0x100] sm:$0xff] %v4262
        %4519 = vst [vmem:[%s434 + $0x108] sm:$0xff] %v4263
        %4520 = vst [vmem:[%s434 + $0x110] sm:$0xff] %v4264
        %4521 = vst [vmem:[%s434 + $0x118] sm:$0xff] %v4265
        %4522 = vst [vmem:[%s434 + $0x120] sm:$0xff] %v4266
        %4523 = vst [vmem:[%s434 + $0x128] sm:$0xff] %v4267
        %4524 = vst [vmem:[%s434 + $0x130] sm:$0xff] %v4268
        %4525 = vst [vmem:[%s434 + $0x138] sm:$0xff] %v4269
        %4526 = vst [vmem:[%s434 + $0x140] sm:$0xff] %v4270
        %4527 = vst [vmem:[%s434 + $0x148] sm:$0xff] %v4271
        %4528 = vst [vmem:[%s434 + $0x150] sm:$0xff] %v4272
        %4529 = vst [vmem:[%s434 + $0x158] sm:$0xff] %v4273
        %4530 = vst [vmem:[%s434 + $0x160] sm:$0xff] %v4274
        %4531 = vst [vmem:[%s434 + $0x168] sm:$0xff] %v4275
        %4532 = vst [vmem:[%s434 + $0x170] sm:$0xff] %v4276
        %4533 = vst [vmem:[%s434 + $0x178] sm:$0xff] %v4277
        %4534 = vst [vmem:[%s434 + $0x180] sm:$0xff] %v4278
        %4535 = vst [vmem:[%s434 + $0x188] sm:$0xff] %v4279
        %4536 = vst [vmem:[%s434 + $0x190] sm:$0xff] %v4280
        %4537 = vst [vmem:[%s434 + $0x198] sm:$0xff] %v4281
        %4538 = vst [vmem:[%s434 + $0x1a0] sm:$0xff] %v4282
        %4539 = vst [vmem:[%s434 + $0x1a8] sm:$0xff] %v4283
        %4540 = vst [vmem:[%s434 + $0x1b0] sm:$0xff] %v4284
        %4541 = vst [vmem:[%s434 + $0x1b8] sm:$0xff] %v4285
        %4542 = vst [vmem:[%s434 + $0x1c0] sm:$0xff] %v4286
        %4543 = vst [vmem:[%s434 + $0x1c8] sm:$0xff] %v4287
        %4544 = vst [vmem:[%s434 + $0x1d0] sm:$0xff] %v4288
        %4545 = vst [vmem:[%s434 + $0x1d8] sm:$0xff] %v4289
        %4546 = vst [vmem:[%s434 + $0x1e0] sm:$0xff] %v4290
        %4547 = vst [vmem:[%s434 + $0x1e8] sm:$0xff] %v4291
        %4548 = vst [vmem:[%s434 + $0x1f0] sm:$0xff] %v4292
        %4549 = vst [vmem:[%s434 + $0x1f8] sm:$0xff] %v4293
        %4550 = vst [vmem:[%s434 + $0x200] sm:$0xff] %v4294
        %4551 = vst [vmem:[%s434 + $0x208] sm:$0xff] %v4295
        %4552 = vst [vmem:[%s434 + $0x210] sm:$0xff] %v4296
        %4553 = vst [vmem:[%s434 + $0x218] sm:$0xff] %v4297
        %4554 = vst [vmem:[%s434 + $0x220] sm:$0xff] %v4298
        %4555 = vst [vmem:[%s434 + $0x228] sm:$0xff] %v4299
        %4556 = vst [vmem:[%s434 + $0x230] sm:$0xff] %v4300
        %4557 = vst [vmem:[%s434 + $0x238] sm:$0xff] %v4301
        %4558 = vst [vmem:[%s434 + $0x240] sm:$0xff] %v4302
        %4559 = vst [vmem:[%s434 + $0x248] sm:$0xff] %v4303
        %4560 = vst [vmem:[%s434 + $0x250] sm:$0xff] %v4304
        %4561 = vst [vmem:[%s434 + $0x258] sm:$0xff] %v4305
        %4562 = vst [vmem:[%s434 + $0x260] sm:$0xff] %v4306
        %4563 = vst [vmem:[%s434 + $0x268] sm:$0xff] %v4307
        %4564 = vst [vmem:[%s434 + $0x270] sm:$0xff] %v4308
        %4565 = vst [vmem:[%s434 + $0x278] sm:$0xff] %v4309
        %4566 = vst [vmem:[%s434 + $0x280] sm:$0xff] %v4310
        %4567 = vst [vmem:[%s434 + $0x288] sm:$0xff] %v4311
        %4568 = vst [vmem:[%s434 + $0x290] sm:$0xff] %v4312
        %4569 = vst [vmem:[%s434 + $0x298] sm:$0xff] %v4313
        %4570 = vst [vmem:[%s434 + $0x2a0] sm:$0xff] %v4314
        %4571 = vst [vmem:[%s434 + $0x2a8] sm:$0xff] %v4315
        %4572 = vst [vmem:[%s434 + $0x2b0] sm:$0xff] %v4316
        %4573 = vst [vmem:[%s434 + $0x2b8] sm:$0xff] %v4317
        %4574 = vst [vmem:[%s434 + $0x2c0] sm:$0xff] %v4318
        %4575 = vst [vmem:[%s434 + $0x2c8] sm:$0xff] %v4319
        %4576 = vst [vmem:[%s434 + $0x2d0] sm:$0xff] %v4320
        %4577 = vst [vmem:[%s434 + $0x2d8] sm:$0xff] %v4321
        %4578 = vst [vmem:[%s434 + $0x2e0] sm:$0xff] %v4322
        %4579 = vst [vmem:[%s434 + $0x2e8] sm:$0xff] %v4323
        %4580 = vst [vmem:[%s434 + $0x2f0] sm:$0xff] %v4324
        %4581 = vst [vmem:[%s434 + $0x2f8] sm:$0xff] %v4325
        %4582 = vst [vmem:[%s434 + $0x300] sm:$0xff] %v4326
        %4583 = vst [vmem:[%s434 + $0x308] sm:$0xff] %v4327
        %4584 = vst [vmem:[%s434 + $0x310] sm:$0xff] %v4328
        %4585 = vst [vmem:[%s434 + $0x318] sm:$0xff] %v4329
        %4586 = vst [vmem:[%s434 + $0x320] sm:$0xff] %v4330
        %4587 = vst [vmem:[%s434 + $0x328] sm:$0xff] %v4331
        %4588 = vst [vmem:[%s434 + $0x330] sm:$0xff] %v4332
        %4589 = vst [vmem:[%s434 + $0x338] sm:$0xff] %v4333
        %4590 = vst [vmem:[%s434 + $0x340] sm:$0xff] %v4334
        %4591 = vst [vmem:[%s434 + $0x348] sm:$0xff] %v4335
        %4592 = vst [vmem:[%s434 + $0x350] sm:$0xff] %v4336
        %4593 = vst [vmem:[%s434 + $0x358] sm:$0xff] %v4337
        %4594 = vst [vmem:[%s434 + $0x360] sm:$0xff] %v4338
        %4595 = vst [vmem:[%s434 + $0x368] sm:$0xff] %v4339
        %4596 = vst [vmem:[%s434 + $0x370] sm:$0xff] %v4340
        %4597 = vst [vmem:[%s434 + $0x378] sm:$0xff] %v4341
        %4598 = vst [vmem:[%s434 + $0x380] sm:$0xff] %v4342
        %4599 = vst [vmem:[%s434 + $0x388] sm:$0xff] %v4343
        %4600 = vst [vmem:[%s434 + $0x390] sm:$0xff] %v4344
        %4601 = vst [vmem:[%s434 + $0x398] sm:$0xff] %v4345
        %4602 = vst [vmem:[%s434 + $0x3a0] sm:$0xff] %v4346
        %4603 = vst [vmem:[%s434 + $0x3a8] sm:$0xff] %v4347
        %4604 = vst [vmem:[%s434 + $0x3b0] sm:$0xff] %v4348
        %4605 = vst [vmem:[%s434 + $0x3b8] sm:$0xff] %v4349
        %4606 = vst [vmem:[%s434 + $0x3c0] sm:$0xff] %v4350
        %4607 = vst [vmem:[%s434 + $0x3c8] sm:$0xff] %v4351
        %4608 = vst [vmem:[%s434 + $0x3d0] sm:$0xff] %v4352
        %4609 = vst [vmem:[%s434 + $0x3d8] sm:$0xff] %v4353
        %4610 = vst [vmem:[%s434 + $0x3e0] sm:$0xff] %v4354
        %4611 = vst [vmem:[%s434 + $0x3e8] sm:$0xff] %v4355
        %4612 = vst [vmem:[%s434 + $0x3f0] sm:$0xff] %v4356
        %4613 = vst [vmem:[%s434 + $0x3f8] sm:$0xff] %v4357
        %v4614 = vmax.f32 %v3462, %v3463
        %4615 = vmax.xlane.f32.xlu0 %v4614
        %v4616 = vpop.xlane.xlu0 %4615
        %v4617 = vmax.f32 %v3464, %v3465
        %4618 = vmax.xlane.f32.xlu0 %v4617
        %v4619 = vpop.xlane.xlu0 %4618
        %v4620 = vmax.f32 %v3466, %v3467
        %4621 = vmax.xlane.f32.xlu0 %v4620
        %v4622 = vpop.xlane.xlu0 %4621
        %v4623 = vmax.f32 %v3468, %v3469
        %4624 = vmax.xlane.f32.xlu0 %v4623
        %v4625 = vpop.xlane.xlu0 %4624
        %v4626 = vmax.f32 %v3470, %v3471
        %4627 = vmax.xlane.f32.xlu0 %v4626
        %v4628 = vpop.xlane.xlu0 %4627
        %v4629 = vmax.f32 %v3472, %v3473
        %4630 = vmax.xlane.f32.xlu0 %v4629
        %v4631 = vpop.xlane.xlu0 %4630
        %v4632 = vmax.f32 %v3474, %v3475
        %4633 = vmax.xlane.f32.xlu0 %v4632
        %v4634 = vpop.xlane.xlu0 %4633
        %v4635 = vmax.f32 %v3476, %v3477
        %4636 = vmax.xlane.f32.xlu0 %v4635
        %v4637 = vpop.xlane.xlu0 %4636
        %v4638 = vmax.f32 %v3478, %v3479
        %4639 = vmax.xlane.f32.xlu0 %v4638
        %v4640 = vpop.xlane.xlu0 %4639
        %v4641 = vmax.f32 %v3480, %v3481
        %4642 = vmax.xlane.f32.xlu0 %v4641
        %v4643 = vpop.xlane.xlu0 %4642
        %v4644 = vmax.f32 %v3482, %v3483
        %4645 = vmax.xlane.f32.xlu0 %v4644
        %v4646 = vpop.xlane.xlu0 %4645
        %v4647 = vmax.f32 %v3484, %v3485
        %4648 = vmax.xlane.f32.xlu0 %v4647
        %v4649 = vpop.xlane.xlu0 %4648
        %v4650 = vmax.f32 %v3486, %v3487
        %4651 = vmax.xlane.f32.xlu0 %v4650
        %v4652 = vpop.xlane.xlu0 %4651
        %v4653 = vmax.f32 %v3488, %v3489
        %4654 = vmax.xlane.f32.xlu0 %v4653
        %v4655 = vpop.xlane.xlu0 %4654
        %v4656 = vmax.f32 %v3490, %v3491
        %4657 = vmax.xlane.f32.xlu0 %v4656
        %v4658 = vpop.xlane.xlu0 %4657
        %v4659 = vmax.f32 %v3492, %v3493
        %4660 = vmax.xlane.f32.xlu0 %v4659
        %v4661 = vpop.xlane.xlu0 %4660
        %v4662 = vmax.f32 %v3494, %v3495
        %4663 = vmax.xlane.f32.xlu0 %v4662
        %v4664 = vpop.xlane.xlu0 %4663
        %v4665 = vmax.f32 %v3496, %v3497
        %4666 = vmax.xlane.f32.xlu0 %v4665
        %v4667 = vpop.xlane.xlu0 %4666
        %v4668 = vmax.f32 %v3498, %v3499
        %4669 = vmax.xlane.f32.xlu0 %v4668
        %v4670 = vpop.xlane.xlu0 %4669
        %v4671 = vmax.f32 %v3500, %v3501
        %4672 = vmax.xlane.f32.xlu0 %v4671
        %v4673 = vpop.xlane.xlu0 %4672
        %v4674 = vmax.f32 %v3502, %v3503
        %4675 = vmax.xlane.f32.xlu0 %v4674
        %v4676 = vpop.xlane.xlu0 %4675
        %v4677 = vmax.f32 %v3504, %v3505
        %4678 = vmax.xlane.f32.xlu0 %v4677
        %v4679 = vpop.xlane.xlu0 %4678
        %v4680 = vmax.f32 %v3506, %v3507
        %4681 = vmax.xlane.f32.xlu0 %v4680
        %v4682 = vpop.xlane.xlu0 %4681
        %v4683 = vmax.f32 %v3508, %v3509
        %4684 = vmax.xlane.f32.xlu0 %v4683
        %v4685 = vpop.xlane.xlu0 %4684
        %v4686 = vmax.f32 %v3510, %v3511
        %4687 = vmax.xlane.f32.xlu0 %v4686
        %v4688 = vpop.xlane.xlu0 %4687
        %v4689 = vmax.f32 %v3512, %v3513
        %4690 = vmax.xlane.f32.xlu0 %v4689
        %v4691 = vpop.xlane.xlu0 %4690
        %v4692 = vmax.f32 %v3514, %v3515
        %4693 = vmax.xlane.f32.xlu0 %v4692
        %v4694 = vpop.xlane.xlu0 %4693
        %v4695 = vmax.f32 %v3516, %v3517
        %4696 = vmax.xlane.f32.xlu0 %v4695
        %v4697 = vpop.xlane.xlu0 %4696
        %v4698 = vmax.f32 %v3518, %v3519
        %4699 = vmax.xlane.f32.xlu0 %v4698
        %v4700 = vpop.xlane.xlu0 %4699
        %v4701 = vmax.f32 %v3520, %v3521
        %4702 = vmax.xlane.f32.xlu0 %v4701
        %v4703 = vpop.xlane.xlu0 %4702
        %v4704 = vmax.f32 %v3522, %v3523
        %4705 = vmax.xlane.f32.xlu0 %v4704
        %v4706 = vpop.xlane.xlu0 %4705
        %v4707 = vmax.f32 %v3524, %v3525
        %4708 = vmax.xlane.f32.xlu0 %v4707
        %v4709 = vpop.xlane.xlu0 %4708
        %v4710 = vmax.f32 %v3526, %v3527
        %4711 = vmax.xlane.f32.xlu0 %v4710
        %v4712 = vpop.xlane.xlu0 %4711
        %v4713 = vmax.f32 %v3528, %v3529
        %4714 = vmax.xlane.f32.xlu0 %v4713
        %v4715 = vpop.xlane.xlu0 %4714
        %v4716 = vmax.f32 %v3530, %v3531
        %4717 = vmax.xlane.f32.xlu0 %v4716
        %v4718 = vpop.xlane.xlu0 %4717
        %v4719 = vmax.f32 %v3532, %v3533
        %4720 = vmax.xlane.f32.xlu0 %v4719
        %v4721 = vpop.xlane.xlu0 %4720
        %v4722 = vmax.f32 %v3534, %v3535
        %4723 = vmax.xlane.f32.xlu0 %v4722
        %v4724 = vpop.xlane.xlu0 %4723
        %v4725 = vmax.f32 %v3536, %v3537
        %4726 = vmax.xlane.f32.xlu0 %v4725
        %v4727 = vpop.xlane.xlu0 %4726
        %v4728 = vmax.f32 %v3538, %v3539
        %4729 = vmax.xlane.f32.xlu0 %v4728
        %v4730 = vpop.xlane.xlu0 %4729
        %v4731 = vmax.f32 %v3540, %v3541
        %4732 = vmax.xlane.f32.xlu0 %v4731
        %v4733 = vpop.xlane.xlu0 %4732
        %v4734 = vmax.f32 %v3542, %v3543
        %4735 = vmax.xlane.f32.xlu0 %v4734
        %v4736 = vpop.xlane.xlu0 %4735
        %v4737 = vmax.f32 %v3544, %v3545
        %4738 = vmax.xlane.f32.xlu0 %v4737
        %v4739 = vpop.xlane.xlu0 %4738
        %v4740 = vmax.f32 %v3546, %v3547
        %4741 = vmax.xlane.f32.xlu0 %v4740
        %v4742 = vpop.xlane.xlu0 %4741
        %v4743 = vmax.f32 %v3548, %v3549
        %4744 = vmax.xlane.f32.xlu0 %v4743
        %v4745 = vpop.xlane.xlu0 %4744
        %v4746 = vmax.f32 %v3550, %v3551
        %4747 = vmax.xlane.f32.xlu0 %v4746
        %v4748 = vpop.xlane.xlu0 %4747
        %v4749 = vmax.f32 %v3552, %v3553
        %4750 = vmax.xlane.f32.xlu0 %v4749
        %v4751 = vpop.xlane.xlu0 %4750
        %v4752 = vmax.f32 %v3554, %v3555
        %4753 = vmax.xlane.f32.xlu0 %v4752
        %v4754 = vpop.xlane.xlu0 %4753
        %v4755 = vmax.f32 %v3556, %v3557
        %4756 = vmax.xlane.f32.xlu0 %v4755
        %v4757 = vpop.xlane.xlu0 %4756
        %v4758 = vmax.f32 %v3558, %v3559
        %4759 = vmax.xlane.f32.xlu0 %v4758
        %v4760 = vpop.xlane.xlu0 %4759
        %v4761 = vmax.f32 %v3560, %v3561
        %4762 = vmax.xlane.f32.xlu0 %v4761
        %v4763 = vpop.xlane.xlu0 %4762
        %v4764 = vmax.f32 %v3562, %v3563
        %4765 = vmax.xlane.f32.xlu0 %v4764
        %v4766 = vpop.xlane.xlu0 %4765
        %v4767 = vmax.f32 %v3564, %v3565
        %4768 = vmax.xlane.f32.xlu0 %v4767
        %v4769 = vpop.xlane.xlu0 %4768
        %v4770 = vmax.f32 %v3566, %v3567
        %4771 = vmax.xlane.f32.xlu0 %v4770
        %v4772 = vpop.xlane.xlu0 %4771
        %v4773 = vmax.f32 %v3568, %v3569
        %4774 = vmax.xlane.f32.xlu0 %v4773
        %v4775 = vpop.xlane.xlu0 %4774
        %v4776 = vmax.f32 %v3570, %v3571
        %4777 = vmax.xlane.f32.xlu0 %v4776
        %v4778 = vpop.xlane.xlu0 %4777
        %v4779 = vmax.f32 %v3572, %v3573
        %4780 = vmax.xlane.f32.xlu0 %v4779
        %v4781 = vpop.xlane.xlu0 %4780
        %v4782 = vmax.f32 %v3574, %v3575
        %4783 = vmax.xlane.f32.xlu0 %v4782
        %v4784 = vpop.xlane.xlu0 %4783
        %v4785 = vmax.f32 %v3576, %v3577
        %4786 = vmax.xlane.f32.xlu0 %v4785
        %v4787 = vpop.xlane.xlu0 %4786
        %v4788 = vmax.f32 %v3578, %v3579
        %4789 = vmax.xlane.f32.xlu0 %v4788
        %v4790 = vpop.xlane.xlu0 %4789
        %v4791 = vmax.f32 %v3580, %v3581
        %4792 = vmax.xlane.f32.xlu0 %v4791
        %v4793 = vpop.xlane.xlu0 %4792
        %v4794 = vmax.f32 %v3582, %v3583
        %4795 = vmax.xlane.f32.xlu0 %v4794
        %v4796 = vpop.xlane.xlu0 %4795
        %v4797 = vmax.f32 %v3584, %v3585
        %4798 = vmax.xlane.f32.xlu0 %v4797
        %v4799 = vpop.xlane.xlu0 %4798
        %v4800 = vmax.f32 %v3586, %v3587
        %4801 = vmax.xlane.f32.xlu0 %v4800
        %v4802 = vpop.xlane.xlu0 %4801
        %v4803 = vmax.f32 %v3588, %v3589
        %4804 = vmax.xlane.f32.xlu0 %v4803
        %v4805 = vpop.xlane.xlu0 %4804
        %v4806 = vmax.f32 %v3590, %v3591
        %4807 = vmax.xlane.f32.xlu0 %v4806
        %v4808 = vpop.xlane.xlu0 %4807
        %v4809 = vmax.f32 %v3592, %v3593
        %4810 = vmax.xlane.f32.xlu0 %v4809
        %v4811 = vpop.xlane.xlu0 %4810
        %v4812 = vmax.f32 %v3594, %v3595
        %4813 = vmax.xlane.f32.xlu0 %v4812
        %v4814 = vpop.xlane.xlu0 %4813
        %v4815 = vmax.f32 %v3596, %v3597
        %4816 = vmax.xlane.f32.xlu0 %v4815
        %v4817 = vpop.xlane.xlu0 %4816
        %v4818 = vmax.f32 %v3598, %v3599
        %4819 = vmax.xlane.f32.xlu0 %v4818
        %v4820 = vpop.xlane.xlu0 %4819
        %v4821 = vmax.f32 %v3600, %v3601
        %4822 = vmax.xlane.f32.xlu0 %v4821
        %v4823 = vpop.xlane.xlu0 %4822
        %v4824 = vmax.f32 %v3602, %v3603
        %4825 = vmax.xlane.f32.xlu0 %v4824
        %v4826 = vpop.xlane.xlu0 %4825
        %v4827 = vmax.f32 %v3604, %v3605
        %4828 = vmax.xlane.f32.xlu0 %v4827
        %v4829 = vpop.xlane.xlu0 %4828
        %v4830 = vmax.f32 %v3606, %v3607
        %4831 = vmax.xlane.f32.xlu0 %v4830
        %v4832 = vpop.xlane.xlu0 %4831
        %v4833 = vmax.f32 %v3608, %v3609
        %4834 = vmax.xlane.f32.xlu0 %v4833
        %v4835 = vpop.xlane.xlu0 %4834
        %v4836 = vmax.f32 %v3610, %v3611
        %4837 = vmax.xlane.f32.xlu0 %v4836
        %v4838 = vpop.xlane.xlu0 %4837
        %v4839 = vmax.f32 %v3612, %v3613
        %4840 = vmax.xlane.f32.xlu0 %v4839
        %v4841 = vpop.xlane.xlu0 %4840
        %v4842 = vmax.f32 %v3614, %v3615
        %4843 = vmax.xlane.f32.xlu0 %v4842
        %v4844 = vpop.xlane.xlu0 %4843
        %v4845 = vmax.f32 %v3616, %v3617
        %4846 = vmax.xlane.f32.xlu0 %v4845
        %v4847 = vpop.xlane.xlu0 %4846
        %v4848 = vmax.f32 %v3618, %v3619
        %4849 = vmax.xlane.f32.xlu0 %v4848
        %v4850 = vpop.xlane.xlu0 %4849
        %v4851 = vmax.f32 %v3620, %v3621
        %4852 = vmax.xlane.f32.xlu0 %v4851
        %v4853 = vpop.xlane.xlu0 %4852
        %v4854 = vmax.f32 %v3622, %v3623
        %4855 = vmax.xlane.f32.xlu0 %v4854
        %v4856 = vpop.xlane.xlu0 %4855
        %v4857 = vmax.f32 %v3624, %v3625
        %4858 = vmax.xlane.f32.xlu0 %v4857
        %v4859 = vpop.xlane.xlu0 %4858
        %v4860 = vmax.f32 %v3626, %v3627
        %4861 = vmax.xlane.f32.xlu0 %v4860
        %v4862 = vpop.xlane.xlu0 %4861
        %v4863 = vmax.f32 %v3628, %v3629
        %4864 = vmax.xlane.f32.xlu0 %v4863
        %v4865 = vpop.xlane.xlu0 %4864
        %v4866 = vmax.f32 %v3630, %v3631
        %4867 = vmax.xlane.f32.xlu0 %v4866
        %v4868 = vpop.xlane.xlu0 %4867
        %v4869 = vmax.f32 %v3632, %v3633
        %4870 = vmax.xlane.f32.xlu0 %v4869
        %v4871 = vpop.xlane.xlu0 %4870
        %v4872 = vmax.f32 %v3634, %v3635
        %4873 = vmax.xlane.f32.xlu0 %v4872
        %v4874 = vpop.xlane.xlu0 %4873
        %v4875 = vmax.f32 %v3636, %v3637
        %4876 = vmax.xlane.f32.xlu0 %v4875
        %v4877 = vpop.xlane.xlu0 %4876
        %v4878 = vmax.f32 %v3638, %v3639
        %4879 = vmax.xlane.f32.xlu0 %v4878
        %v4880 = vpop.xlane.xlu0 %4879
        %v4881 = vmax.f32 %v3640, %v3641
        %4882 = vmax.xlane.f32.xlu0 %v4881
        %v4883 = vpop.xlane.xlu0 %4882
        %v4884 = vmax.f32 %v3642, %v3643
        %4885 = vmax.xlane.f32.xlu0 %v4884
        %v4886 = vpop.xlane.xlu0 %4885
        %v4887 = vmax.f32 %v3644, %v3645
        %4888 = vmax.xlane.f32.xlu0 %v4887
        %v4889 = vpop.xlane.xlu0 %4888
        %v4890 = vmax.f32 %v3646, %v3647
        %4891 = vmax.xlane.f32.xlu0 %v4890
        %v4892 = vpop.xlane.xlu0 %4891
        %v4893 = vmax.f32 %v3648, %v3649
        %4894 = vmax.xlane.f32.xlu0 %v4893
        %v4895 = vpop.xlane.xlu0 %4894
        %v4896 = vmax.f32 %v3650, %v3651
        %4897 = vmax.xlane.f32.xlu0 %v4896
        %v4898 = vpop.xlane.xlu0 %4897
        %v4899 = vmax.f32 %v3652, %v3653
        %4900 = vmax.xlane.f32.xlu0 %v4899
        %v4901 = vpop.xlane.xlu0 %4900
        %v4902 = vmax.f32 %v3654, %v3655
        %4903 = vmax.xlane.f32.xlu0 %v4902
        %v4904 = vpop.xlane.xlu0 %4903
        %v4905 = vmax.f32 %v3656, %v3657
        %4906 = vmax.xlane.f32.xlu0 %v4905
        %v4907 = vpop.xlane.xlu0 %4906
        %v4908 = vmax.f32 %v3658, %v3659
        %4909 = vmax.xlane.f32.xlu0 %v4908
        %v4910 = vpop.xlane.xlu0 %4909
        %v4911 = vmax.f32 %v3660, %v3661
        %4912 = vmax.xlane.f32.xlu0 %v4911
        %v4913 = vpop.xlane.xlu0 %4912
        %v4914 = vmax.f32 %v3662, %v3663
        %4915 = vmax.xlane.f32.xlu0 %v4914
        %v4916 = vpop.xlane.xlu0 %4915
        %v4917 = vmax.f32 %v3664, %v3665
        %4918 = vmax.xlane.f32.xlu0 %v4917
        %v4919 = vpop.xlane.xlu0 %4918
        %v4920 = vmax.f32 %v3666, %v3667
        %4921 = vmax.xlane.f32.xlu0 %v4920
        %v4922 = vpop.xlane.xlu0 %4921
        %v4923 = vmax.f32 %v3668, %v3669
        %4924 = vmax.xlane.f32.xlu0 %v4923
        %v4925 = vpop.xlane.xlu0 %4924
        %v4926 = vmax.f32 %v3670, %v3671
        %4927 = vmax.xlane.f32.xlu0 %v4926
        %v4928 = vpop.xlane.xlu0 %4927
        %v4929 = vmax.f32 %v3672, %v3673
        %4930 = vmax.xlane.f32.xlu0 %v4929
        %v4931 = vpop.xlane.xlu0 %4930
        %v4932 = vmax.f32 %v3674, %v3675
        %4933 = vmax.xlane.f32.xlu0 %v4932
        %v4934 = vpop.xlane.xlu0 %4933
        %v4935 = vmax.f32 %v3676, %v3677
        %4936 = vmax.xlane.f32.xlu0 %v4935
        %v4937 = vpop.xlane.xlu0 %4936
        %v4938 = vmax.f32 %v3678, %v3679
        %4939 = vmax.xlane.f32.xlu0 %v4938
        %v4940 = vpop.xlane.xlu0 %4939
        %v4941 = vmax.f32 %v3680, %v3681
        %4942 = vmax.xlane.f32.xlu0 %v4941
        %v4943 = vpop.xlane.xlu0 %4942
        %v4944 = vmax.f32 %v3682, %v3683
        %4945 = vmax.xlane.f32.xlu0 %v4944
        %v4946 = vpop.xlane.xlu0 %4945
        %v4947 = vmax.f32 %v3684, %v3685
        %4948 = vmax.xlane.f32.xlu0 %v4947
        %v4949 = vpop.xlane.xlu0 %4948
        %v4950 = vmax.f32 %v3686, %v3687
        %4951 = vmax.xlane.f32.xlu0 %v4950
        %v4952 = vpop.xlane.xlu0 %4951
        %v4953 = vmax.f32 %v3688, %v3689
        %4954 = vmax.xlane.f32.xlu0 %v4953
        %v4955 = vpop.xlane.xlu0 %4954
        %v4956 = vmax.f32 %v3690, %v3691
        %4957 = vmax.xlane.f32.xlu0 %v4956
        %v4958 = vpop.xlane.xlu0 %4957
        %v4959 = vmax.f32 %v3692, %v3693
        %4960 = vmax.xlane.f32.xlu0 %v4959
        %v4961 = vpop.xlane.xlu0 %4960
        %v4962 = vmax.f32 %v3694, %v3695
        %4963 = vmax.xlane.f32.xlu0 %v4962
        %v4964 = vpop.xlane.xlu0 %4963
        %v4965 = vmax.f32 %v3696, %v3697
        %4966 = vmax.xlane.f32.xlu0 %v4965
        %v4967 = vpop.xlane.xlu0 %4966
        %v4968 = vmax.f32 %v3698, %v3699
        %4969 = vmax.xlane.f32.xlu0 %v4968
        %v4970 = vpop.xlane.xlu0 %4969
        %v4971 = vmax.f32 %v3700, %v3701
        %4972 = vmax.xlane.f32.xlu0 %v4971
        %v4973 = vpop.xlane.xlu0 %4972
        %v4974 = vmax.f32 %v3702, %v3703
        %4975 = vmax.xlane.f32.xlu0 %v4974
        %v4976 = vpop.xlane.xlu0 %4975
        %v4977 = vmax.f32 %v3704, %v3705
        %4978 = vmax.xlane.f32.xlu0 %v4977
        %v4979 = vpop.xlane.xlu0 %4978
        %v4980 = vmax.f32 %v3706, %v3707
        %4981 = vmax.xlane.f32.xlu0 %v4980
        %v4982 = vpop.xlane.xlu0 %4981
        %v4983 = vmax.f32 %v3708, %v3709
        %4984 = vmax.xlane.f32.xlu0 %v4983
        %v4985 = vpop.xlane.xlu0 %4984
        %v4986 = vmax.f32 %v3710, %v3711
        %4987 = vmax.xlane.f32.xlu0 %v4986
        %v4988 = vpop.xlane.xlu0 %4987
        %v4989 = vmax.f32 %v3712, %v3713
        %4990 = vmax.xlane.f32.xlu0 %v4989
        %v4991 = vpop.xlane.xlu0 %4990
        %v4992 = vmax.f32 %v3714, %v3715
        %4993 = vmax.xlane.f32.xlu0 %v4992
        %v4994 = vpop.xlane.xlu0 %4993
        %v4995 = vmax.f32 %v3716, %v3717
        %4996 = vmax.xlane.f32.xlu0 %v4995
        %v4997 = vpop.xlane.xlu0 %4996
        %vm4998 = vcmask 7168
        %4999 = vst.msk [vmem:[%s463] sm:$0xff] %vm4998, %v4616
        %5000 = vst.msk [vmem:[%s463 + $0x8] sm:$0xff] %vm4998, %v4619
        %5001 = vst.msk [vmem:[%s463 + $0x10] sm:$0xff] %vm4998, %v4622
        %5002 = vst.msk [vmem:[%s463 + $0x18] sm:$0xff] %vm4998, %v4625
        %5003 = vst.msk [vmem:[%s463 + $0x20] sm:$0xff] %vm4998, %v4628
        %5004 = vst.msk [vmem:[%s463 + $0x28] sm:$0xff] %vm4998, %v4631
        %5005 = vst.msk [vmem:[%s463 + $0x30] sm:$0xff] %vm4998, %v4634
        %5006 = vst.msk [vmem:[%s463 + $0x38] sm:$0xff] %vm4998, %v4637
        %5007 = vst.msk [vmem:[%s463 + $0x40] sm:$0xff] %vm4998, %v4640
        %5008 = vst.msk [vmem:[%s463 + $0x48] sm:$0xff] %vm4998, %v4643
        %5009 = vst.msk [vmem:[%s463 + $0x50] sm:$0xff] %vm4998, %v4646
        %5010 = vst.msk [vmem:[%s463 + $0x58] sm:$0xff] %vm4998, %v4649
        %5011 = vst.msk [vmem:[%s463 + $0x60] sm:$0xff] %vm4998, %v4652
        %5012 = vst.msk [vmem:[%s463 + $0x68] sm:$0xff] %vm4998, %v4655
        %5013 = vst.msk [vmem:[%s463 + $0x70] sm:$0xff] %vm4998, %v4658
        %5014 = vst.msk [vmem:[%s463 + $0x78] sm:$0xff] %vm4998, %v4661
        %5015 = vst.msk [vmem:[%s463 + $0x80] sm:$0xff] %vm4998, %v4664
        %5016 = vst.msk [vmem:[%s463 + $0x88] sm:$0xff] %vm4998, %v4667
        %5017 = vst.msk [vmem:[%s463 + $0x90] sm:$0xff] %vm4998, %v4670
        %5018 = vst.msk [vmem:[%s463 + $0x98] sm:$0xff] %vm4998, %v4673
        %5019 = vst.msk [vmem:[%s463 + $0xa0] sm:$0xff] %vm4998, %v4676
        %5020 = vst.msk [vmem:[%s463 + $0xa8] sm:$0xff] %vm4998, %v4679
        %5021 = vst.msk [vmem:[%s463 + $0xb0] sm:$0xff] %vm4998, %v4682
        %5022 = vst.msk [vmem:[%s463 + $0xb8] sm:$0xff] %vm4998, %v4685
        %5023 = vst.msk [vmem:[%s463 + $0xc0] sm:$0xff] %vm4998, %v4688
        %5024 = vst.msk [vmem:[%s463 + $0xc8] sm:$0xff] %vm4998, %v4691
        %5025 = vst.msk [vmem:[%s463 + $0xd0] sm:$0xff] %vm4998, %v4694
        %5026 = vst.msk [vmem:[%s463 + $0xd8] sm:$0xff] %vm4998, %v4697
        %5027 = vst.msk [vmem:[%s463 + $0xe0] sm:$0xff] %vm4998, %v4700
        %5028 = vst.msk [vmem:[%s463 + $0xe8] sm:$0xff] %vm4998, %v4703
        %5029 = vst.msk [vmem:[%s463 + $0xf0] sm:$0xff] %vm4998, %v4706
        %5030 = vst.msk [vmem:[%s463 + $0xf8] sm:$0xff] %vm4998, %v4709
        %5031 = vst.msk [vmem:[%s463 + $0x100] sm:$0xff] %vm4998, %v4712
        %5032 = vst.msk [vmem:[%s463 + $0x108] sm:$0xff] %vm4998, %v4715
        %5033 = vst.msk [vmem:[%s463 + $0x110] sm:$0xff] %vm4998, %v4718
        %5034 = vst.msk [vmem:[%s463 + $0x118] sm:$0xff] %vm4998, %v4721
        %5035 = vst.msk [vmem:[%s463 + $0x120] sm:$0xff] %vm4998, %v4724
        %5036 = vst.msk [vmem:[%s463 + $0x128] sm:$0xff] %vm4998, %v4727
        %5037 = vst.msk [vmem:[%s463 + $0x130] sm:$0xff] %vm4998, %v4730
        %5038 = vst.msk [vmem:[%s463 + $0x138] sm:$0xff] %vm4998, %v4733
        %5039 = vst.msk [vmem:[%s463 + $0x140] sm:$0xff] %vm4998, %v4736
        %5040 = vst.msk [vmem:[%s463 + $0x148] sm:$0xff] %vm4998, %v4739
        %5041 = vst.msk [vmem:[%s463 + $0x150] sm:$0xff] %vm4998, %v4742
        %5042 = vst.msk [vmem:[%s463 + $0x158] sm:$0xff] %vm4998, %v4745
        %5043 = vst.msk [vmem:[%s463 + $0x160] sm:$0xff] %vm4998, %v4748
        %5044 = vst.msk [vmem:[%s463 + $0x168] sm:$0xff] %vm4998, %v4751
        %5045 = vst.msk [vmem:[%s463 + $0x170] sm:$0xff] %vm4998, %v4754
        %5046 = vst.msk [vmem:[%s463 + $0x178] sm:$0xff] %vm4998, %v4757
        %5047 = vst.msk [vmem:[%s463 + $0x180] sm:$0xff] %vm4998, %v4760
        %5048 = vst.msk [vmem:[%s463 + $0x188] sm:$0xff] %vm4998, %v4763
        %5049 = vst.msk [vmem:[%s463 + $0x190] sm:$0xff] %vm4998, %v4766
        %5050 = vst.msk [vmem:[%s463 + $0x198] sm:$0xff] %vm4998, %v4769
        %5051 = vst.msk [vmem:[%s463 + $0x1a0] sm:$0xff] %vm4998, %v4772
        %5052 = vst.msk [vmem:[%s463 + $0x1a8] sm:$0xff] %vm4998, %v4775
        %5053 = vst.msk [vmem:[%s463 + $0x1b0] sm:$0xff] %vm4998, %v4778
        %5054 = vst.msk [vmem:[%s463 + $0x1b8] sm:$0xff] %vm4998, %v4781
        %5055 = vst.msk [vmem:[%s463 + $0x1c0] sm:$0xff] %vm4998, %v4784
        %5056 = vst.msk [vmem:[%s463 + $0x1c8] sm:$0xff] %vm4998, %v4787
        %5057 = vst.msk [vmem:[%s463 + $0x1d0] sm:$0xff] %vm4998, %v4790
        %5058 = vst.msk [vmem:[%s463 + $0x1d8] sm:$0xff] %vm4998, %v4793
        %5059 = vst.msk [vmem:[%s463 + $0x1e0] sm:$0xff] %vm4998, %v4796
        %5060 = vst.msk [vmem:[%s463 + $0x1e8] sm:$0xff] %vm4998, %v4799
        %5061 = vst.msk [vmem:[%s463 + $0x1f0] sm:$0xff] %vm4998, %v4802
        %5062 = vst.msk [vmem:[%s463 + $0x1f8] sm:$0xff] %vm4998, %v4805
        %5063 = vst.msk [vmem:[%s463 + $0x200] sm:$0xff] %vm4998, %v4808
        %5064 = vst.msk [vmem:[%s463 + $0x208] sm:$0xff] %vm4998, %v4811
        %5065 = vst.msk [vmem:[%s463 + $0x210] sm:$0xff] %vm4998, %v4814
        %5066 = vst.msk [vmem:[%s463 + $0x218] sm:$0xff] %vm4998, %v4817
        %5067 = vst.msk [vmem:[%s463 + $0x220] sm:$0xff] %vm4998, %v4820
        %5068 = vst.msk [vmem:[%s463 + $0x228] sm:$0xff] %vm4998, %v4823
        %5069 = vst.msk [vmem:[%s463 + $0x230] sm:$0xff] %vm4998, %v4826
        %5070 = vst.msk [vmem:[%s463 + $0x238] sm:$0xff] %vm4998, %v4829
        %5071 = vst.msk [vmem:[%s463 + $0x240] sm:$0xff] %vm4998, %v4832
        %5072 = vst.msk [vmem:[%s463 + $0x248] sm:$0xff] %vm4998, %v4835
        %5073 = vst.msk [vmem:[%s463 + $0x250] sm:$0xff] %vm4998, %v4838
        %5074 = vst.msk [vmem:[%s463 + $0x258] sm:$0xff] %vm4998, %v4841
        %5075 = vst.msk [vmem:[%s463 + $0x260] sm:$0xff] %vm4998, %v4844
        %5076 = vst.msk [vmem:[%s463 + $0x268] sm:$0xff] %vm4998, %v4847
        %5077 = vst.msk [vmem:[%s463 + $0x270] sm:$0xff] %vm4998, %v4850
        %5078 = vst.msk [vmem:[%s463 + $0x278] sm:$0xff] %vm4998, %v4853
        %5079 = vst.msk [vmem:[%s463 + $0x280] sm:$0xff] %vm4998, %v4856
        %5080 = vst.msk [vmem:[%s463 + $0x288] sm:$0xff] %vm4998, %v4859
        %5081 = vst.msk [vmem:[%s463 + $0x290] sm:$0xff] %vm4998, %v4862
        %5082 = vst.msk [vmem:[%s463 + $0x298] sm:$0xff] %vm4998, %v4865
        %5083 = vst.msk [vmem:[%s463 + $0x2a0] sm:$0xff] %vm4998, %v4868
        %5084 = vst.msk [vmem:[%s463 + $0x2a8] sm:$0xff] %vm4998, %v4871
        %5085 = vst.msk [vmem:[%s463 + $0x2b0] sm:$0xff] %vm4998, %v4874
        %5086 = vst.msk [vmem:[%s463 + $0x2b8] sm:$0xff] %vm4998, %v4877
        %5087 = vst.msk [vmem:[%s463 + $0x2c0] sm:$0xff] %vm4998, %v4880
        %5088 = vst.msk [vmem:[%s463 + $0x2c8] sm:$0xff] %vm4998, %v4883
        %5089 = vst.msk [vmem:[%s463 + $0x2d0] sm:$0xff] %vm4998, %v4886
        %5090 = vst.msk [vmem:[%s463 + $0x2d8] sm:$0xff] %vm4998, %v4889
        %5091 = vst.msk [vmem:[%s463 + $0x2e0] sm:$0xff] %vm4998, %v4892
        %5092 = vst.msk [vmem:[%s463 + $0x2e8] sm:$0xff] %vm4998, %v4895
        %5093 = vst.msk [vmem:[%s463 + $0x2f0] sm:$0xff] %vm4998, %v4898
        %5094 = vst.msk [vmem:[%s463 + $0x2f8] sm:$0xff] %vm4998, %v4901
        %5095 = vst.msk [vmem:[%s463 + $0x300] sm:$0xff] %vm4998, %v4904
        %5096 = vst.msk [vmem:[%s463 + $0x308] sm:$0xff] %vm4998, %v4907
        %5097 = vst.msk [vmem:[%s463 + $0x310] sm:$0xff] %vm4998, %v4910
        %5098 = vst.msk [vmem:[%s463 + $0x318] sm:$0xff] %vm4998, %v4913
        %5099 = vst.msk [vmem:[%s463 + $0x320] sm:$0xff] %vm4998, %v4916
        %5100 = vst.msk [vmem:[%s463 + $0x328] sm:$0xff] %vm4998, %v4919
        %5101 = vst.msk [vmem:[%s463 + $0x330] sm:$0xff] %vm4998, %v4922
        %5102 = vst.msk [vmem:[%s463 + $0x338] sm:$0xff] %vm4998, %v4925
        %5103 = vst.msk [vmem:[%s463 + $0x340] sm:$0xff] %vm4998, %v4928
        %5104 = vst.msk [vmem:[%s463 + $0x348] sm:$0xff] %vm4998, %v4931
        %5105 = vst.msk [vmem:[%s463 + $0x350] sm:$0xff] %vm4998, %v4934
        %5106 = vst.msk [vmem:[%s463 + $0x358] sm:$0xff] %vm4998, %v4937
        %5107 = vst.msk [vmem:[%s463 + $0x360] sm:$0xff] %vm4998, %v4940
        %5108 = vst.msk [vmem:[%s463 + $0x368] sm:$0xff] %vm4998, %v4943
        %5109 = vst.msk [vmem:[%s463 + $0x370] sm:$0xff] %vm4998, %v4946
        %5110 = vst.msk [vmem:[%s463 + $0x378] sm:$0xff] %vm4998, %v4949
        %5111 = vst.msk [vmem:[%s463 + $0x380] sm:$0xff] %vm4998, %v4952
        %5112 = vst.msk [vmem:[%s463 + $0x388] sm:$0xff] %vm4998, %v4955
        %5113 = vst.msk [vmem:[%s463 + $0x390] sm:$0xff] %vm4998, %v4958
        %5114 = vst.msk [vmem:[%s463 + $0x398] sm:$0xff] %vm4998, %v4961
        %5115 = vst.msk [vmem:[%s463 + $0x3a0] sm:$0xff] %vm4998, %v4964
        %5116 = vst.msk [vmem:[%s463 + $0x3a8] sm:$0xff] %vm4998, %v4967
        %5117 = vst.msk [vmem:[%s463 + $0x3b0] sm:$0xff] %vm4998, %v4970
        %5118 = vst.msk [vmem:[%s463 + $0x3b8] sm:$0xff] %vm4998, %v4973
        %5119 = vst.msk [vmem:[%s463 + $0x3c0] sm:$0xff] %vm4998, %v4976
        %5120 = vst.msk [vmem:[%s463 + $0x3c8] sm:$0xff] %vm4998, %v4979
        %5121 = vst.msk [vmem:[%s463 + $0x3d0] sm:$0xff] %vm4998, %v4982
        %5122 = vst.msk [vmem:[%s463 + $0x3d8] sm:$0xff] %vm4998, %v4985
        %5123 = vst.msk [vmem:[%s463 + $0x3e0] sm:$0xff] %vm4998, %v4988
        %5124 = vst.msk [vmem:[%s463 + $0x3e8] sm:$0xff] %vm4998, %v4991
        %5125 = vst.msk [vmem:[%s463 + $0x3f0] sm:$0xff] %vm4998, %v4994
        %5126 = vst.msk [vmem:[%s463 + $0x3f8] sm:$0xff] %vm4998, %v4997
        %s5127 = sand.u32 %s287, 1
        %s5128 = scalar_lea.sflag [#allocation3], %s5127
        %s5129 = sand.u32 %s287, 1
        %s5130 = smul.addr %s5129, 1024
        %s5131 = scalar_lea.vmem [#allocation2], %s5130
        %p5132 = scmp.lt.s32.totalorder %s31, 1
        %s5133 = scalar_select %p5132, %s31, 1
        %p5134 = scmp.lt.s32.totalorder %s32, 0
        %s5135 = scalar_select %p5134, %s32, 0
        %s5136 = smul.addr %s5133, 128
        %s5137 = sadd.s32 %s5135, %s5136
        %s5138 = smul.addr %s5137, 8
        %s5139 = scalar_lea.vmem %s12, %s5138
        // Predicated region
        $region65: #{tpu_custom_call.1} parent=63 // pred_check
          %p5140 = pneg %p297
        $region66: #{tpu_custom_call.1} parent=63 // pred_check_branch
          %5142 = sbr.rel (%p5140) target = $region68
        $region67: #{tpu_custom_call.1} parent=63 // pred_region
          %s5143 = smul.u32 2, %s32
          %s5145 = ssub.s32 16384, 16384
          %5146 = vsyncadd %s5128, %s5145
          %s5147 = smul.addr %s31, 256
          %s5148 = sadd.s32 %s5143, %s5147
          %s5149 = smul.addr %s5148, 64
          %s5150 = scalar_lea.hbm %s11, %s5149
          %s5151 = sshll.u32 %s5131, 4
          %s5152 = int_to_ptr.vmem [resolvable:$true] %s5151
          %5157 = dma.vmem_to_hbm [thread:$0]  %s5152, 16384, %s5150, %s5128, 128, 128, 8
        $region68: #{tpu_custom_call.1} parent=63 // pred_fallthru
          _
        // Predicated region
        $region69: #{tpu_custom_call.1} parent=63 // pred_check
          %p5158 = pneg %p325
        $region70: #{tpu_custom_call.1} parent=63 // pred_check_branch
          %5160 = sbr.rel (%p5158) target = $region72
        $region71: #{tpu_custom_call.1} parent=63 // pred_region
          _
        $region72: #{tpu_custom_call.1} parent=63 // pred_fallthru
          _
      $region64: #{tpu_custom_call.1} parent=5 // pred_fallthru
        _
      %p5161 = scmp.le.s32.totalorder 2, %s22
      // Predicated region
      $region73: #{tpu_custom_call.1} parent=5 // pred_check
        %p5162 = pneg %p5161
      $region74: #{tpu_custom_call.1} parent=5 // pred_check_branch
        %5164 = sbr.rel (%p5162) target = $region76
      $region75: #{tpu_custom_call.1} parent=5 // pred_region
        %s5165 = ssub.s32 %s22, 2
        // Predicated region
        $region77: #{tpu_custom_call.1} parent=75 // pred_check
          %p5166 = pneg %p303
        $region78: #{tpu_custom_call.1} parent=75 // pred_check_branch
          %5168 = sbr.rel (%p5166) target = $region80
        $region79: #{tpu_custom_call.1} parent=75 // pred_region
          %s5169 = sand.u32 %s288, 1
          %s5170 = scalar_lea.sflag [#allocation3], %s5169
          %s5171 = sand.u32 %s288, 1
          %s5172 = smul.addr %s5171, 1024
          %s5173 = scalar_lea.vmem [#allocation2], %s5172
          %5174 = dma.done %s5170, 16384
        $region80: #{tpu_custom_call.1} parent=75 // pred_fallthru
          _
        // Predicated region
        $region81: #{tpu_custom_call.1} parent=75 // pred_check
          %p5175 = pneg %p331
        $region82: #{tpu_custom_call.1} parent=75 // pred_check_branch
          %5177 = sbr.rel (%p5175) target = $region84
        $region83: #{tpu_custom_call.1} parent=75 // pred_region
          %p5178 = scmp.lt.s32.totalorder %s33, 1
          %s5179 = scalar_select %p5178, %s33, 1
          %p5180 = scmp.lt.s32.totalorder %s34, 0
          %s5181 = scalar_select %p5180, %s34, 0
          %s5182 = smul.addr %s5179, 128
          %s5183 = sadd.s32 %s5181, %s5182
          %s5184 = smul.addr %s5183, 8
          %s5185 = scalar_lea.vmem %s12, %s5184
        $region84: #{tpu_custom_call.1} parent=75 // pred_fallthru
          _
      $region76: #{tpu_custom_call.1} parent=5 // pred_fallthru
        _
    $region6: #{tpu_custom_call.1} parent=1 // loop_footer
      %s26 = sadd.s32 1, %s22
    $region7: #{tpu_custom_call.1} parent=1 // loop_footer_branch
      %21 = sbr.rel target = $region3
    $region8: #{tpu_custom_call.1} parent=1 // loop_exit
      _
    %5186 = vsyncpa [#allocation3], 1
    %s5187 = scalar_lea.sflag [#allocation3], 1
    %5188 = vsyncpa %s5187, 1

</llo_original>
